<compile_context>
chip_gen: v7x
topology: tpu7x:2x2x1
jax: 0.10.0
libtpu: 0.0.40
codegen_flags: <defaults>
</compile_context>

<pallas_src>
import jax
import jax.numpy as jnp
from jax.experimental import pallas as pl
from jax.experimental.pallas import tpu as pltpu

EPS = 1e-8
N_LAYERS = 3
VMEM_LIMIT = 64 * 1024 * 1024


# ------------------------------------------------------------------ helpers --
def _choose_tile(n, target, mult):
    """Largest tile <= target that divides n and is a multiple of `mult` (else n)."""
    t = min(target, n)
    t -= t % mult
    while t >= mult:
        if n % t == 0:
            return t
        t -= mult
    return n


# ------------------------------------------------------------------ kernels --
def _l2_normalize_kernel(feat_ref, fn_ref):
    f = feat_ref[0]                                            # [TM, D] f32
    ss = jnp.sum(f * f, axis=-1, keepdims=True)                # [TM, 1]
    # max(||f||, eps) == sqrt(max(||f||^2, eps^2)); rsqrt runs on the EUP.
    fn_ref[0] = f * jax.lax.rsqrt(jnp.maximum(ss, EPS * EPS))


def _sim_kernel(fn_row_ref, fn_col_ref, sim_ref):
    # f32 cosine-similarity tile via an NT dot_general (no explicit transpose).
    sim_ref[0] = jax.lax.dot_general(
        fn_row_ref[0], fn_col_ref[0], (((1,), (1,)), ((), ())),
        preferred_element_type=jnp.float32)                    # [TM, TN]


def _adj_build_kernel(sim_ref, th_ref, adj_ref):
    # Edge selection in f32 (exact vs. the sim used for top_k), weights cast bf16.
    s = sim_ref[0]                                             # [TM, TN] f32
    adj_ref[0] = jnp.where(s >= th_ref[0], s, 0.0).astype(jnp.bfloat16)


def _support_kernel(h_ref, w_ref, support_ref):
    # support = h @ W : bf16 MXU operands, f32 accumulation, bf16 result.
    support_ref[0] = jnp.dot(
        h_ref[0].astype(jnp.bfloat16), w_ref[...],
        preferred_element_type=jnp.float32).astype(jnp.bfloat16)


def _aggregate_kernel(adj_ref, support_ref, b_ref, out_ref, acc_ref):
    # out = relu(adj @ support + b), contraction chunked over the N (k) grid axis.
    @pl.when(pl.program_id(2) == 0)
    def _():
        acc_ref[...] = jnp.zeros_like(acc_ref)

    acc_ref[...] += jnp.dot(adj_ref[0], support_ref[0],
                            preferred_element_type=jnp.float32)

    @pl.when(pl.program_id(2) == pl.num_programs(2) - 1)
    def _():
        out_ref[0] = jnp.maximum(acc_ref[...] + b_ref[...], 0.0).astype(out_ref.dtype)
    # F.dropout(p=0.5) is identity at inference; skip_connection=False.


# ----------------------------------------------------------------- wrappers --
def l2_normalize(feat, *, tm=256):
    B, N, D = feat.shape
    tm = _choose_tile(N, tm, 8)
    return pl.pallas_call(
        _l2_normalize_kernel,
        out_shape=jax.ShapeDtypeStruct((B, N, D), jnp.float32),
        grid=(B, N // tm),
        in_specs=[pl.BlockSpec((1, tm, D), lambda b, i: (b, i, 0))],
        out_specs=pl.BlockSpec((1, tm, D), lambda b, i: (b, i, 0)),
        compiler_params=pltpu.CompilerParams(
            dimension_semantics=("parallel", "parallel")),
    )(feat.astype(jnp.float32))


def cosine_sim(fn, *, tm=256, tn=512):
    B, N, D = fn.shape
    tm = _choose_tile(N, tm, 8)
    tn = _choose_tile(N, tn, 128)
    return pl.pallas_call(
        _sim_kernel,
        out_shape=jax.ShapeDtypeStruct((B, N, N), jnp.float32),
        grid=(B, N // tm, N // tn),
        in_specs=[
            pl.BlockSpec((1, tm, D), lambda b, i, j: (b, i, 0)),   # fn row tile
            pl.BlockSpec((1, tn, D), lambda b, i, j: (b, j, 0)),   # fn col tile
        ],
        out_specs=pl.BlockSpec((1, tm, tn), lambda b, i, j: (b, i, j)),
        compiler_params=pltpu.CompilerParams(
            dimension_semantics=("parallel", "parallel", "parallel"),
            vmem_limit_bytes=VMEM_LIMIT),
    )(fn, fn)


def build_adj(sim, th, *, tm=256, tn=512):
    B, N, _ = sim.shape
    tm = _choose_tile(N, tm, 8)
    tn = _choose_tile(N, tn, 128)
    return pl.pallas_call(
        _adj_build_kernel,
        out_shape=jax.ShapeDtypeStruct((B, N, N), jnp.bfloat16),
        grid=(B, N // tm, N // tn),
        in_specs=[
            pl.BlockSpec((1, tm, tn), lambda b, i, j: (b, i, j)),  # sim tile (f32)
            pl.BlockSpec((1, tm, 1), lambda b, i, j: (b, i, 0)),   # per-row threshold
        ],
        out_specs=pl.BlockSpec((1, tm, tn), lambda b, i, j: (b, i, j)),
        compiler_params=pltpu.CompilerParams(
            dimension_semantics=("parallel", "parallel", "parallel"),
            vmem_limit_bytes=VMEM_LIMIT),
    )(sim, th)


def gcn_support(h, w_bf16, *, tm=256):
    B, N, D = h.shape
    tm = _choose_tile(N, tm, 8)
    return pl.pallas_call(
        _support_kernel,
        out_shape=jax.ShapeDtypeStruct((B, N, D), jnp.bfloat16),
        grid=(B, N // tm),
        in_specs=[
            pl.BlockSpec((1, tm, D), lambda b, i: (b, i, 0)),      # h row tile
            pl.BlockSpec((D, D), lambda b, i: (0, 0)),             # W_l (bf16)
        ],
        out_specs=pl.BlockSpec((1, tm, D), lambda b, i: (b, i, 0)),
        compiler_params=pltpu.CompilerParams(
            dimension_semantics=("parallel", "parallel")),
    )(h, w_bf16)


def gcn_aggregate(adj, support, b_l, out_dtype, *, tm=256, tk=512):
    B, N, _ = adj.shape
    D = support.shape[-1]
    tm = _choose_tile(N, tm, 8)
    tk = _choose_tile(N, tk, 128)
    return pl.pallas_call(
        _aggregate_kernel,
        out_shape=jax.ShapeDtypeStruct((B, N, D), out_dtype),
        grid=(B, N // tm, N // tk),
        in_specs=[
            pl.BlockSpec((1, tm, tk), lambda b, i, k: (b, i, k)),  # adj tile (bf16)
            pl.BlockSpec((1, tk, D), lambda b, i, k: (b, k, 0)),   # support chunk (bf16)
            pl.BlockSpec((1, D), lambda b, i, k: (0, 0)),          # bias (f32)
        ],
        out_specs=pl.BlockSpec((1, tm, D), lambda b, i, k: (b, i, 0)),
        scratch_shapes=[pltpu.VMEM((tm, D), jnp.float32)],
        compiler_params=pltpu.CompilerParams(
            # b and row-tile axes parallel (v7x megacore), contraction axis arbitrary.
            dimension_semantics=("parallel", "parallel", "arbitrary"),
            vmem_limit_bytes=VMEM_LIMIT),
    )(adj, support, b_l)


def pgcn_forward(x, weights, biases, *, tm=256, tn=512, tk=512):
    B, S, D = x.shape
    N = S - 1
    cls_token = x[:, :1].astype(jnp.float32)                   # [B, 1, D]
    feat = x[:, 1:].astype(jnp.float32)                        # [B, N, D]

    fn = l2_normalize(feat, tm=tm)                             # [B, N, D] f32
    sim = cosine_sim(fn, tm=tm, tn=tn)                         # [B, N, N] f32

    # torch.topk(adj, k, largest=False, sorted=True)[..., -1:] == k-th SMALLEST per row.
    topk = max(int(N * 0.01), 100)
    assert N >= topk, f"PGCN needs at least {topk} feature tokens, got N={N}"
    # TODO(synk): replace the XLA top_k over the dense [B,N,N] f32 sim with an
    # in-kernel per-row k-th-smallest selection (radix/bisection) to cut the
    # O(N^2) HBM round trip; kept in XLA here for exact torch.topk semantics.
    th = -jax.lax.top_k(-sim, topk)[0][..., -1:]               # [B, N, 1]

    # Materialize the thresholded adjacency ONCE (bf16); reused by all 3 layers.
    adj = build_adj(sim, th, tm=tm, tn=tn)                     # [B, N, N] bf16

    w_bf16 = weights.astype(jnp.bfloat16)                      # bf16 MXU operands
    b_f32 = biases.astype(jnp.float32)
    h = feat
    for l in range(N_LAYERS):
        support = gcn_support(h, w_bf16[l], tm=tm)             # [B, N, D] bf16
        out_dtype = jnp.float32 if l == N_LAYERS - 1 else jnp.bfloat16
        h = gcn_aggregate(adj, support, b_f32[l], out_dtype, tm=tm, tk=tk)

    # TODO(synk): final cls||tokens concat stays in XLA; writing GCN rows at a +1
    # token offset would need an Element-offset out_spec (unaligned sublane store).
    return jnp.concatenate([cls_token, h.astype(jnp.float32)], axis=1)   # [B, N+1, D]


# --------------------------------------------------------------------- refs --
def _sim_ref(feat):
    n = jnp.linalg.norm(feat, axis=-1, keepdims=True)
    fn = feat / jnp.maximum(n, EPS)
    return jnp.einsum("bnd,bmd->bnm", fn, fn, precision=jax.lax.Precision.HIGHEST)


def _gcn_ref(adj_bf16, feat, W, b):
    # Mirrors kernel numerics: bf16 adj/support/intermediate h, f32 accumulation.
    h = feat
    for l in range(N_LAYERS):
        support = jnp.einsum(
            "bnd,de->bne", h.astype(jnp.bfloat16), W[l].astype(jnp.bfloat16),
            preferred_element_type=jnp.float32).astype(jnp.bfloat16)
        h = jnp.maximum(
            jnp.einsum("bij,bjd->bid", adj_bf16, support,
                       preferred_element_type=jnp.float32) + b[l], 0.0)
        if l < N_LAYERS - 1:
            h = h.astype(jnp.bfloat16)
    return h.astype(jnp.float32)


# --------------------------------------------------------------------- main --
if __name__ == "__main__":
    key = jax.random.PRNGKey(0)
    B, N, D = 2, 256, 128          # N >= 100 so topk = max(int(N*0.01), 100) is valid
    TM, TN, TK = 128, 128, 128     # 2 row tiles, 2 col tiles, 2 k-chunks -> exercises all paths
    kx, kw, kb = jax.random.split(key, 3)

    x = jax.random.normal(kx, (B, N + 1, D), dtype=jnp.float32)

    # Kipf GraphConvolution init: uniform(-1/sqrt(dim), 1/sqrt(dim)), deterministic here.
    stdv = 1.0 / (D ** 0.5)
    W = jax.random.uniform(kw, (N_LAYERS, D, D), minval=-stdv, maxval=stdv, dtype=jnp.float32)
    b = jax.random.uniform(kb, (N_LAYERS, 1, D), minval=-stdv, maxval=stdv, dtype=jnp.float32)

    fwd = jax.jit(pgcn_forward, static_argnames=("tm", "tn", "tk"))
    out = jax.block_until_ready(fwd(x, W, b, tm=TM, tn=TN, tk=TK))
    assert out.shape == (B, N + 1, D)

    # --- correctness checks -------------------------------------------------
    feat = x[:, 1:]

    # kernel 1+2 (normalize + Gram tiles) vs f32 JAX reference
    fn_k = l2_normalize(feat, tm=TM)
    sim_k = cosine_sim(fn_k, tm=TM, tn=TN)
    assert jnp.allclose(sim_k, _sim_ref(feat), atol=1e-4, rtol=1e-4)

    # adj-build kernel vs XLA where/cast on the exact same sim/th
    topk = max(int(N * 0.01), 100)
    th = -jax.lax.top_k(-sim_k, topk)[0][..., -1:]
    adj_ref = jnp.where(sim_k >= th, sim_k, 0.0).astype(jnp.bfloat16)
    adj_k = build_adj(sim_k, th, tm=TM, tn=TN)
    assert jnp.allclose(adj_k.astype(jnp.float32), adj_ref.astype(jnp.float32),
                        atol=1e-3, rtol=1e-2)

    # full pipeline vs reference built on the same sim/th (identical edge selection)
    ref_out = jnp.concatenate([x[:, :1], _gcn_ref(adj_ref, feat, W, b)], axis=1)
    assert jnp.allclose(out, ref_out, atol=1e-2, rtol=1e-2)

    print("KERNEL_OK")
</pallas_src>

<mosaic_0001>
module attributes {stable_mosaic.version = 11 : i64} {
  func.func @_sim_kernel(%arg0: i32, %arg1: i32, %arg2: i32, %arg3: memref<1x128x128xf32, #tpu.memory_space<vmem>>, %arg4: memref<1x128x128xf32, #tpu.memory_space<vmem>>, %arg5: memref<1x128x128xf32, #tpu.memory_space<vmem>>) attributes {dimension_semantics = [#tpu.dimension_semantics<parallel>, #tpu.dimension_semantics<parallel>, #tpu.dimension_semantics<parallel>], iteration_bounds = array<i64: 2, 2, 2>, scalar_prefetch = 0 : i64, scratch_operands = 0 : i64, tpu.core_type = #tpu.core_type<tc>, window_params = [{transform_indices = @transform_0, window_bounds = array<i64: 1, 128, 128>}, {transform_indices = @transform_1, window_bounds = array<i64: 1, 128, 128>}, {transform_indices = @transform_2, window_bounds = array<i64: 1, 128, 128>}]} {
    %c0 = arith.constant 0 : index
    %c0_0 = arith.constant 0 : index
    %c0_1 = arith.constant 0 : index
    %0 = vector.load %arg3[%c0, %c0_0, %c0_1] : memref<1x128x128xf32, #tpu.memory_space<vmem>>, vector<1x128x128xf32>
    %1 = vector.shape_cast %0 : vector<1x128x128xf32> to vector<128x128xf32>
    %c0_2 = arith.constant 0 : index
    %c0_3 = arith.constant 0 : index
    %c0_4 = arith.constant 0 : index
    %2 = vector.load %arg4[%c0_2, %c0_3, %c0_4] : memref<1x128x128xf32, #tpu.memory_space<vmem>>, vector<1x128x128xf32>
    %3 = vector.shape_cast %2 : vector<1x128x128xf32> to vector<128x128xf32>
    %cst = arith.constant dense<0.000000e+00> : vector<128x128xf32>
    %4 = tpu.matmul %1, %3, %cst {dimension_numbers = #tpu.dot_dimension_numbers<[1], [1], [0], [0], [0, 0, 1, 0], [], []>} : vector<128x128xf32>, vector<128x128xf32>, vector<128x128xf32> -> vector<128x128xf32>
    %c0_5 = arith.constant 0 : index
    %c0_6 = arith.constant 0 : index
    %c0_7 = arith.constant 0 : index
    %5 = vector.load %arg5[%c0_5, %c0_6, %c0_7] : memref<1x128x128xf32, #tpu.memory_space<vmem>>, vector<1x128x128xf32>
    %6 = vector.shape_cast %5 : vector<1x128x128xf32> to vector<128x128xf32>
    %7 = vector.shape_cast %4 : vector<128x128xf32> to vector<1x128x128xf32>
    tpu.vector_store %arg5[%c0_5, %c0_6, %c0_7], %7 {strides = array<i32>} : memref<1x128x128xf32, #tpu.memory_space<vmem>>, vector<1x128x128xf32>,
    return
  }
  func.func @transform_0(%arg0: i32, %arg1: i32, %arg2: i32) -> (i32, i32, i32) {
    %c0_i32 = arith.constant 0 : i32
    %c0_i32_0 = arith.constant 0 : i32
    return %arg0, %arg1, %c0_i32 : i32, i32, i32
  }
  func.func @transform_1(%arg0: i32, %arg1: i32, %arg2: i32) -> (i32, i32, i32) {
    %c0_i32 = arith.constant 0 : i32
    %c0_i32_0 = arith.constant 0 : i32
    return %arg0, %arg2, %c0_i32 : i32, i32, i32
  }
  func.func @transform_2(%arg0: i32, %arg1: i32, %arg2: i32) -> (i32, i32, i32) {
    %c0_i32 = arith.constant 0 : i32
    return %arg0, %arg1, %arg2 : i32, i32, i32
  }
}

module attributes {stable_mosaic.version = 11 : i64} {
  func.func @_l2_normalize_kernel(%arg0: i32, %arg1: i32, %arg2: memref<1x128x128xf32, #tpu.memory_space<vmem>>, %arg3: memref<1x128x128xf32, #tpu.memory_space<vmem>>) attributes {dimension_semantics = [#tpu.dimension_semantics<parallel>, #tpu.dimension_semantics<parallel>], iteration_bounds = array<i64: 2, 2>, scalar_prefetch = 0 : i64, scratch_operands = 0 : i64, tpu.core_type = #tpu.core_type<tc>, window_params = [{transform_indices = @transform_0, window_bounds = array<i64: 1, 128, 128>}, {transform_indices = @transform_1, window_bounds = array<i64: 1, 128, 128>}]} {
    %c0 = arith.constant 0 : index
    %c0_0 = arith.constant 0 : index
    %c0_1 = arith.constant 0 : index
    %0 = vector.load %arg2[%c0, %c0_0, %c0_1] : memref<1x128x128xf32, #tpu.memory_space<vmem>>, vector<1x128x128xf32>
    %1 = vector.shape_cast %0 : vector<1x128x128xf32> to vector<128x128xf32>
    %2 = arith.mulf %1, %1 : vector<128x128xf32>
    %cst = arith.constant dense<0.000000e+00> : vector<128xf32>
    %3 = vector.multi_reduction <add>, %2, %cst [1] : vector<128x128xf32> to vector<128xf32>
    %4 = vector.shape_cast %3 : vector<128xf32> to vector<128x1xf32>
    %cst_2 = arith.constant 1.000000e-16 : f32
    %5 = vector.broadcast %cst_2 : f32 to vector<128x1xf32>
    %6 = arith.maximumf %4, %5 : vector<128x1xf32>
    %7 = math.rsqrt %6 : vector<128x1xf32>
    %8 = vector.broadcast %7 : vector<128x1xf32> to vector<128x128xf32>
    %9 = arith.mulf %1, %8 : vector<128x128xf32>
    %c0_3 = arith.constant 0 : index
    %c0_4 = arith.constant 0 : index
    %c0_5 = arith.constant 0 : index
    %10 = vector.load %arg3[%c0_3, %c0_4, %c0_5] : memref<1x128x128xf32, #tpu.memory_space<vmem>>, vector<1x128x128xf32>
    %11 = vector.shape_cast %10 : vector<1x128x128xf32> to vector<128x128xf32>
    %12 = vector.shape_cast %9 : vector<128x128xf32> to vector<1x128x128xf32>
    tpu.vector_store %arg3[%c0_3, %c0_4, %c0_5], %12 {strides = array<i32>} : memref<1x128x128xf32, #tpu.memory_space<vmem>>, vector<1x128x128xf32>,
    return
  }
  func.func @transform_0(%arg0: i32, %arg1: i32) -> (i32, i32, i32) {
    %c0_i32 = arith.constant 0 : i32
    %c0_i32_0 = arith.constant 0 : i32
    return %arg0, %arg1, %c0_i32 : i32, i32, i32
  }
  func.func @transform_1(%arg0: i32, %arg1: i32) -> (i32, i32, i32) {
    %c0_i32 = arith.constant 0 : i32
    %c0_i32_0 = arith.constant 0 : i32
    return %arg0, %arg1, %c0_i32 : i32, i32, i32
  }
}

module attributes {stable_mosaic.version = 11 : i64} {
  func.func @_support_kernel(%arg0: i32, %arg1: i32, %arg2: memref<1x128x128xf32, #tpu.memory_space<vmem>>, %arg3: memref<128x128xbf16, #tpu.memory_space<vmem>>, %arg4: memref<1x128x128xbf16, #tpu.memory_space<vmem>>) attributes {dimension_semantics = [#tpu.dimension_semantics<parallel>, #tpu.dimension_semantics<parallel>], iteration_bounds = array<i64: 2, 2>, scalar_prefetch = 0 : i64, scratch_operands = 0 : i64, tpu.core_type = #tpu.core_type<tc>, window_params = [{transform_indices = @transform_0, window_bounds = array<i64: 1, 128, 128>}, {pipeline_mode = #tpu.pipeline_mode<synchronous>, transform_indices = @transform_1, window_bounds = array<i64: 128, 128>}, {transform_indices = @transform_2, window_bounds = array<i64: 1, 128, 128>}]} {
    %c0 = arith.constant 0 : index
    %c0_0 = arith.constant 0 : index
    %c0_1 = arith.constant 0 : index
    %0 = vector.load %arg2[%c0, %c0_0, %c0_1] : memref<1x128x128xf32, #tpu.memory_space<vmem>>, vector<1x128x128xf32>
    %1 = vector.shape_cast %0 : vector<1x128x128xf32> to vector<128x128xf32>
    %2 = arith.truncf %1 : vector<128x128xf32> to vector<128x128xbf16>
    %c0_2 = arith.constant 0 : index
    %c0_3 = arith.constant 0 : index
    %3 = vector.load %arg3[%c0_2, %c0_3] : memref<128x128xbf16, #tpu.memory_space<vmem>>, vector<128x128xbf16>
    %cst = arith.constant dense<0.000000e+00> : vector<128x128xf32>
    %4 = tpu.matmul %2, %3, %cst {dimension_numbers = #tpu.dot_dimension_numbers<[1], [0], [0], [1], [0, 0, 1, 1], [], []>} : vector<128x128xbf16>, vector<128x128xbf16>, vector<128x128xf32> -> vector<128x128xf32>
    %5 = arith.truncf %4 : vector<128x128xf32> to vector<128x128xbf16>
    %c0_4 = arith.constant 0 : index
    %c0_5 = arith.constant 0 : index
    %c0_6 = arith.constant 0 : index
    %6 = vector.load %arg4[%c0_4, %c0_5, %c0_6] : memref<1x128x128xbf16, #tpu.memory_space<vmem>>, vector<1x128x128xbf16>
    %7 = vector.shape_cast %6 : vector<1x128x128xbf16> to vector<128x128xbf16>
    %8 = vector.shape_cast %5 : vector<128x128xbf16> to vector<1x128x128xbf16>
    tpu.vector_store %arg4[%c0_4, %c0_5, %c0_6], %8 {strides = array<i32>} : memref<1x128x128xbf16, #tpu.memory_space<vmem>>, vector<1x128x128xbf16>,
    return
  }
  func.func @transform_0(%arg0: i32, %arg1: i32) -> (i32, i32, i32) {
    %c0_i32 = arith.constant 0 : i32
    %c0_i32_0 = arith.constant 0 : i32
    return %arg0, %arg1, %c0_i32 : i32, i32, i32
  }
  func.func @transform_1(%arg0: i32, %arg1: i32) -> (i32, i32) {
    %c0_i32 = arith.constant 0 : i32
    %c0_i32_0 = arith.constant 0 : i32
    %c0_i32_1 = arith.constant 0 : i32
    return %c0_i32, %c0_i32_0 : i32, i32
  }
  func.func @transform_2(%arg0: i32, %arg1: i32) -> (i32, i32, i32) {
    %c0_i32 = arith.constant 0 : i32
    %c0_i32_0 = arith.constant 0 : i32
    return %arg0, %arg1, %c0_i32 : i32, i32, i32
  }
}

module attributes {stable_mosaic.version = 11 : i64} {
  func.func @_adj_build_kernel(%arg0: i32, %arg1: i32, %arg2: i32, %arg3: memref<1x128x128xf32, #tpu.memory_space<vmem>>, %arg4: memref<1x128x1xf32, #tpu.memory_space<vmem>>, %arg5: memref<1x128x128xbf16, #tpu.memory_space<vmem>>) attributes {dimension_semantics = [#tpu.dimension_semantics<parallel>, #tpu.dimension_semantics<parallel>, #tpu.dimension_semantics<parallel>], iteration_bounds = array<i64: 2, 2, 2>, scalar_prefetch = 0 : i64, scratch_operands = 0 : i64, tpu.core_type = #tpu.core_type<tc>, window_params = [{transform_indices = @transform_0, window_bounds = array<i64: 1, 128, 128>}, {transform_indices = @transform_1, window_bounds = array<i64: 1, 128, 1>}, {transform_indices = @transform_2, window_bounds = array<i64: 1, 128, 128>}]} {
    %c0 = arith.constant 0 : index
    %c0_0 = arith.constant 0 : index
    %c0_1 = arith.constant 0 : index
    %0 = vector.load %arg3[%c0, %c0_0, %c0_1] : memref<1x128x128xf32, #tpu.memory_space<vmem>>, vector<1x128x128xf32>
    %1 = vector.shape_cast %0 : vector<1x128x128xf32> to vector<128x128xf32>
    %c0_2 = arith.constant 0 : index
    %c0_3 = arith.constant 0 : index
    %c0_4 = arith.constant 0 : index
    %2 = vector.load %arg4[%c0_2, %c0_3, %c0_4] : memref<1x128x1xf32, #tpu.memory_space<vmem>>, vector<1x128x1xf32>
    %3 = vector.shape_cast %2 : vector<1x128x1xf32> to vector<128x1xf32>
    %4 = vector.broadcast %3 : vector<128x1xf32> to vector<128x128xf32>
    %5 = arith.cmpf oge, %1, %4 : vector<128x128xf32>
    %cst = arith.constant 0.000000e+00 : f32
    %6 = vector.broadcast %cst : f32 to vector<128x128xf32>
    %7 = arith.select %5, %1, %6 : vector<128x128xi1>, vector<128x128xf32>
    %8 = arith.truncf %7 : vector<128x128xf32> to vector<128x128xbf16>
    %c0_5 = arith.constant 0 : index
    %c0_6 = arith.constant 0 : index
    %c0_7 = arith.constant 0 : index
    %9 = vector.load %arg5[%c0_5, %c0_6, %c0_7] : memref<1x128x128xbf16, #tpu.memory_space<vmem>>, vector<1x128x128xbf16>
    %10 = vector.shape_cast %9 : vector<1x128x128xbf16> to vector<128x128xbf16>
    %11 = vector.shape_cast %8 : vector<128x128xbf16> to vector<1x128x128xbf16>
    tpu.vector_store %arg5[%c0_5, %c0_6, %c0_7], %11 {strides = array<i32>} : memref<1x128x128xbf16, #tpu.memory_space<vmem>>, vector<1x128x128xbf16>,
    return
  }
  func.func @transform_0(%arg0: i32, %arg1: i32, %arg2: i32) -> (i32, i32, i32) {
    %c0_i32 = arith.constant 0 : i32
    return %arg0, %arg1, %arg2 : i32, i32, i32
  }
  func.func @transform_1(%arg0: i32, %arg1: i32, %arg2: i32) -> (i32, i32, i32) {
    %c0_i32 = arith.constant 0 : i32
    %c0_i32_0 = arith.constant 0 : i32
    return %arg0, %arg1, %c0_i32 : i32, i32, i32
  }
  func.func @transform_2(%arg0: i32, %arg1: i32, %arg2: i32) -> (i32, i32, i32) {
    %c0_i32 = arith.constant 0 : i32
    return %arg0, %arg1, %arg2 : i32, i32, i32
  }
}

module attributes {stable_mosaic.version = 11 : i64} {
  func.func @_aggregate_kernel(%arg0: i32, %arg1: i32, %arg2: i32, %arg3: memref<1x128x128xbf16, #tpu.memory_space<vmem>>, %arg4: memref<1x128x128xbf16, #tpu.memory_space<vmem>>, %arg5: memref<1x128xf32, #tpu.memory_space<vmem>>, %arg6: memref<1x128x128xbf16, #tpu.memory_space<vmem>>, %arg7: memref<128x128xf32, #tpu.memory_space<vmem>>) attributes {dimension_semantics = [#tpu.dimension_semantics<parallel>, #tpu.dimension_semantics<parallel>, #tpu.dimension_semantics<arbitrary>], iteration_bounds = array<i64: 2, 2, 2>, scalar_prefetch = 0 : i64, scratch_operands = 1 : i64, tpu.core_type = #tpu.core_type<tc>, window_params = [{transform_indices = @transform_0, window_bounds = array<i64: 1, 128, 128>}, {transform_indices = @transform_1, window_bounds = array<i64: 1, 128, 128>}, {pipeline_mode = #tpu.pipeline_mode<synchronous>, transform_indices = @transform_2, window_bounds = array<i64: 1, 128>}, {transform_indices = @transform_3, window_bounds = array<i64: 1, 128, 128>}]} {
    %c0_i32 = arith.constant 0 : i32
    %0 = arith.cmpi eq, %arg2, %c0_i32 : i32
    %1 = arith.extui %0 : i1 to i32
    %c0_i32_0 = arith.constant 0 : i32
    %2 = arith.cmpi ne, %1, %c0_i32_0 : i32
    scf.if %2 {
      %cst_11 = arith.constant 0.000000e+00 : f32
      %14 = vector.broadcast %cst_11 : f32 to vector<128x128xf32>
      %c0_12 = arith.constant 0 : index
      %c0_13 = arith.constant 0 : index
      %15 = vector.load %arg7[%c0_12, %c0_13] : memref<128x128xf32, #tpu.memory_space<vmem>>, vector<128x128xf32>
      tpu.vector_store %arg7[%c0_12, %c0_13], %14 {strides = array<i32>} : memref<128x128xf32, #tpu.memory_space<vmem>>, vector<128x128xf32>,
    } else {
    }
    %c0 = arith.constant 0 : index
    %c0_1 = arith.constant 0 : index
    %3 = vector.load %arg7[%c0, %c0_1] : memref<128x128xf32, #tpu.memory_space<vmem>>, vector<128x128xf32>
    %c0_2 = arith.constant 0 : index
    %c0_3 = arith.constant 0 : index
    %c0_4 = arith.constant 0 : index
    %4 = vector.load %arg3[%c0_2, %c0_3, %c0_4] : memref<1x128x128xbf16, #tpu.memory_space<vmem>>, vector<1x128x128xbf16>
    %5 = vector.shape_cast %4 : vector<1x128x128xbf16> to vector<128x128xbf16>
    %c0_5 = arith.constant 0 : index
    %c0_6 = arith.constant 0 : index
    %c0_7 = arith.constant 0 : index
    %6 = vector.load %arg4[%c0_5, %c0_6, %c0_7] : memref<1x128x128xbf16, #tpu.memory_space<vmem>>, vector<1x128x128xbf16>
    %7 = vector.shape_cast %6 : vector<1x128x128xbf16> to vector<128x128xbf16>
    %cst = arith.constant dense<0.000000e+00> : vector<128x128xf32>
    %8 = tpu.matmul %5, %7, %cst {dimension_numbers = #tpu.dot_dimension_numbers<[1], [0], [0], [1], [0, 0, 1, 1], [], []>} : vector<128x128xbf16>, vector<128x128xbf16>, vector<128x128xf32> -> vector<128x128xf32>
    %9 = arith.addf %3, %8 : vector<128x128xf32>
    %c0_8 = arith.constant 0 : index
    %c0_9 = arith.constant 0 : index
    %10 = vector.load %arg7[%c0_8, %c0_9] : memref<128x128xf32, #tpu.memory_space<vmem>>, vector<128x128xf32>
    tpu.vector_store %arg7[%c0_8, %c0_9], %9 {strides = array<i32>} : memref<128x128xf32, #tpu.memory_space<vmem>>, vector<128x128xf32>,
    %c1_i32 = arith.constant 1 : i32
    %11 = arith.cmpi eq, %arg2, %c1_i32 : i32
    %12 = arith.extui %11 : i1 to i32
    %c0_i32_10 = arith.constant 0 : i32
    %13 = arith.cmpi ne, %12, %c0_i32_10 : i32
    scf.if %13 {
      %c0_11 = arith.constant 0 : index
      %c0_12 = arith.constant 0 : index
      %14 = vector.load %arg7[%c0_11, %c0_12] : memref<128x128xf32, #tpu.memory_space<vmem>>, vector<128x128xf32>
      %c0_13 = arith.constant 0 : index
      %c0_14 = arith.constant 0 : index
      %15 = vector.load %arg5[%c0_13, %c0_14] : memref<1x128xf32, #tpu.memory_space<vmem>>, vector<1x128xf32>
      %16 = vector.broadcast %15 : vector<1x128xf32> to vector<128x128xf32>
      %17 = arith.addf %14, %16 : vector<128x128xf32>
      %cst_15 = arith.constant 0.000000e+00 : f32
      %18 = vector.broadcast %cst_15 : f32 to vector<128x128xf32>
      %19 = arith.maximumf %17, %18 : vector<128x128xf32>
      %20 = arith.truncf %19 : vector<128x128xf32> to vector<128x128xbf16>
      %c0_16 = arith.constant 0 : index
      %c0_17 = arith.constant 0 : index
      %c0_18 = arith.constant 0 : index
      %21 = vector.load %arg6[%c0_16, %c0_17, %c0_18] : memref<1x128x128xbf16, #tpu.memory_space<vmem>>, vector<1x128x128xbf16>
      %22 = vector.shape_cast %21 : vector<1x128x128xbf16> to vector<128x128xbf16>
      %23 = vector.shape_cast %20 : vector<128x128xbf16> to vector<1x128x128xbf16>
      tpu.vector_store %arg6[%c0_16, %c0_17, %c0_18], %23 {strides = array<i32>} : memref<1x128x128xbf16, #tpu.memory_space<vmem>>, vector<1x128x128xbf16>,
    } else {
    }
    return
  }
  func.func @transform_0(%arg0: i32, %arg1: i32, %arg2: i32) -> (i32, i32, i32) {
    %c0_i32 = arith.constant 0 : i32
    return %arg0, %arg1, %arg2 : i32, i32, i32
  }
  func.func @transform_1(%arg0: i32, %arg1: i32, %arg2: i32) -> (i32, i32, i32) {
    %c0_i32 = arith.constant 0 : i32
    %c0_i32_0 = arith.constant 0 : i32
    return %arg0, %arg2, %c0_i32 : i32, i32, i32
  }
  func.func @transform_2(%arg0: i32, %arg1: i32, %arg2: i32) -> (i32, i32) {
    %c0_i32 = arith.constant 0 : i32
    %c0_i32_0 = arith.constant 0 : i32
    %c0_i32_1 = arith.constant 0 : i32
    return %c0_i32, %c0_i32_0 : i32, i32
  }
  func.func @transform_3(%arg0: i32, %arg1: i32, %arg2: i32) -> (i32, i32, i32) {
    %c0_i32 = arith.constant 0 : i32
    %c0_i32_0 = arith.constant 0 : i32
    return %arg0, %arg1, %c0_i32 : i32, i32, i32
  }
}

module attributes {stable_mosaic.version = 11 : i64} {
  func.func @_support_kernel(%arg0: i32, %arg1: i32, %arg2: memref<1x128x128xbf16, #tpu.memory_space<vmem>>, %arg3: memref<128x128xbf16, #tpu.memory_space<vmem>>, %arg4: memref<1x128x128xbf16, #tpu.memory_space<vmem>>) attributes {dimension_semantics = [#tpu.dimension_semantics<parallel>, #tpu.dimension_semantics<parallel>], iteration_bounds = array<i64: 2, 2>, scalar_prefetch = 0 : i64, scratch_operands = 0 : i64, tpu.core_type = #tpu.core_type<tc>, window_params = [{transform_indices = @transform_0, window_bounds = array<i64: 1, 128, 128>}, {pipeline_mode = #tpu.pipeline_mode<synchronous>, transform_indices = @transform_1, window_bounds = array<i64: 128, 128>}, {transform_indices = @transform_2, window_bounds = array<i64: 1, 128, 128>}]} {
    %c0 = arith.constant 0 : index
    %c0_0 = arith.constant 0 : index
    %c0_1 = arith.constant 0 : index
    %0 = vector.load %arg2[%c0, %c0_0, %c0_1] : memref<1x128x128xbf16, #tpu.memory_space<vmem>>, vector<1x128x128xbf16>
    %1 = vector.shape_cast %0 : vector<1x128x128xbf16> to vector<128x128xbf16>
    %c0_2 = arith.constant 0 : index
    %c0_3 = arith.constant 0 : index
    %2 = vector.load %arg3[%c0_2, %c0_3] : memref<128x128xbf16, #tpu.memory_space<vmem>>, vector<128x128xbf16>
    %cst = arith.constant dense<0.000000e+00> : vector<128x128xf32>
    %3 = tpu.matmul %1, %2, %cst {dimension_numbers = #tpu.dot_dimension_numbers<[1], [0], [0], [1], [0, 0, 1, 1], [], []>} : vector<128x128xbf16>, vector<128x128xbf16>, vector<128x128xf32> -> vector<128x128xf32>
    %4 = arith.truncf %3 : vector<128x128xf32> to vector<128x128xbf16>
    %c0_4 = arith.constant 0 : index
    %c0_5 = arith.constant 0 : index
    %c0_6 = arith.constant 0 : index
    %5 = vector.load %arg4[%c0_4, %c0_5, %c0_6] : memref<1x128x128xbf16, #tpu.memory_space<vmem>>, vector<1x128x128xbf16>
    %6 = vector.shape_cast %5 : vector<1x128x128xbf16> to vector<128x128xbf16>
    %7 = vector.shape_cast %4 : vector<128x128xbf16> to vector<1x128x128xbf16>
    tpu.vector_store %arg4[%c0_4, %c0_5, %c0_6], %7 {strides = array<i32>} : memref<1x128x128xbf16, #tpu.memory_space<vmem>>, vector<1x128x128xbf16>,
    return
  }
  func.func @transform_0(%arg0: i32, %arg1: i32) -> (i32, i32, i32) {
    %c0_i32 = arith.constant 0 : i32
    %c0_i32_0 = arith.constant 0 : i32
    return %arg0, %arg1, %c0_i32 : i32, i32, i32
  }
  func.func @transform_1(%arg0: i32, %arg1: i32) -> (i32, i32) {
    %c0_i32 = arith.constant 0 : i32
    %c0_i32_0 = arith.constant 0 : i32
    %c0_i32_1 = arith.constant 0 : i32
    return %c0_i32, %c0_i32_0 : i32, i32
  }
  func.func @transform_2(%arg0: i32, %arg1: i32) -> (i32, i32, i32) {
    %c0_i32 = arith.constant 0 : i32
    %c0_i32_0 = arith.constant 0 : i32
    return %arg0, %arg1, %c0_i32 : i32, i32, i32
  }
}

module attributes {stable_mosaic.version = 11 : i64} {
  func.func @_aggregate_kernel(%arg0: i32, %arg1: i32, %arg2: i32, %arg3: memref<1x128x128xbf16, #tpu.memory_space<vmem>>, %arg4: memref<1x128x128xbf16, #tpu.memory_space<vmem>>, %arg5: memref<1x128xf32, #tpu.memory_space<vmem>>, %arg6: memref<1x128x128xf32, #tpu.memory_space<vmem>>, %arg7: memref<128x128xf32, #tpu.memory_space<vmem>>) attributes {dimension_semantics = [#tpu.dimension_semantics<parallel>, #tpu.dimension_semantics<parallel>, #tpu.dimension_semantics<arbitrary>], iteration_bounds = array<i64: 2, 2, 2>, scalar_prefetch = 0 : i64, scratch_operands = 1 : i64, tpu.core_type = #tpu.core_type<tc>, window_params = [{transform_indices = @transform_0, window_bounds = array<i64: 1, 128, 128>}, {transform_indices = @transform_1, window_bounds = array<i64: 1, 128, 128>}, {pipeline_mode = #tpu.pipeline_mode<synchronous>, transform_indices = @transform_2, window_bounds = array<i64: 1, 128>}, {transform_indices = @transform_3, window_bounds = array<i64: 1, 128, 128>}]} {
    %c0_i32 = arith.constant 0 : i32
    %0 = arith.cmpi eq, %arg2, %c0_i32 : i32
    %1 = arith.extui %0 : i1 to i32
    %c0_i32_0 = arith.constant 0 : i32
    %2 = arith.cmpi ne, %1, %c0_i32_0 : i32
    scf.if %2 {
      %cst_11 = arith.constant 0.000000e+00 : f32
      %14 = vector.broadcast %cst_11 : f32 to vector<128x128xf32>
      %c0_12 = arith.constant 0 : index
      %c0_13 = arith.constant 0 : index
      %15 = vector.load %arg7[%c0_12, %c0_13] : memref<128x128xf32, #tpu.memory_space<vmem>>, vector<128x128xf32>
      tpu.vector_store %arg7[%c0_12, %c0_13], %14 {strides = array<i32>} : memref<128x128xf32, #tpu.memory_space<vmem>>, vector<128x128xf32>,
    } else {
    }
    %c0 = arith.constant 0 : index
    %c0_1 = arith.constant 0 : index
    %3 = vector.load %arg7[%c0, %c0_1] : memref<128x128xf32, #tpu.memory_space<vmem>>, vector<128x128xf32>
    %c0_2 = arith.constant 0 : index
    %c0_3 = arith.constant 0 : index
    %c0_4 = arith.constant 0 : index
    %4 = vector.load %arg3[%c0_2, %c0_3, %c0_4] : memref<1x128x128xbf16, #tpu.memory_space<vmem>>, vector<1x128x128xbf16>
    %5 = vector.shape_cast %4 : vector<1x128x128xbf16> to vector<128x128xbf16>
    %c0_5 = arith.constant 0 : index
    %c0_6 = arith.constant 0 : index
    %c0_7 = arith.constant 0 : index
    %6 = vector.load %arg4[%c0_5, %c0_6, %c0_7] : memref<1x128x128xbf16, #tpu.memory_space<vmem>>, vector<1x128x128xbf16>
    %7 = vector.shape_cast %6 : vector<1x128x128xbf16> to vector<128x128xbf16>
    %cst = arith.constant dense<0.000000e+00> : vector<128x128xf32>
    %8 = tpu.matmul %5, %7, %cst {dimension_numbers = #tpu.dot_dimension_numbers<[1], [0], [0], [1], [0, 0, 1, 1], [], []>} : vector<128x128xbf16>, vector<128x128xbf16>, vector<128x128xf32> -> vector<128x128xf32>
    %9 = arith.addf %3, %8 : vector<128x128xf32>
    %c0_8 = arith.constant 0 : index
    %c0_9 = arith.constant 0 : index
    %10 = vector.load %arg7[%c0_8, %c0_9] : memref<128x128xf32, #tpu.memory_space<vmem>>, vector<128x128xf32>
    tpu.vector_store %arg7[%c0_8, %c0_9], %9 {strides = array<i32>} : memref<128x128xf32, #tpu.memory_space<vmem>>, vector<128x128xf32>,
    %c1_i32 = arith.constant 1 : i32
    %11 = arith.cmpi eq, %arg2, %c1_i32 : i32
    %12 = arith.extui %11 : i1 to i32
    %c0_i32_10 = arith.constant 0 : i32
    %13 = arith.cmpi ne, %12, %c0_i32_10 : i32
    scf.if %13 {
      %c0_11 = arith.constant 0 : index
      %c0_12 = arith.constant 0 : index
      %14 = vector.load %arg7[%c0_11, %c0_12] : memref<128x128xf32, #tpu.memory_space<vmem>>, vector<128x128xf32>
      %c0_13 = arith.constant 0 : index
      %c0_14 = arith.constant 0 : index
      %15 = vector.load %arg5[%c0_13, %c0_14] : memref<1x128xf32, #tpu.memory_space<vmem>>, vector<1x128xf32>
      %16 = vector.broadcast %15 : vector<1x128xf32> to vector<128x128xf32>
      %17 = arith.addf %14, %16 : vector<128x128xf32>
      %cst_15 = arith.constant 0.000000e+00 : f32
      %18 = vector.broadcast %cst_15 : f32 to vector<128x128xf32>
      %19 = arith.maximumf %17, %18 : vector<128x128xf32>
      %c0_16 = arith.constant 0 : index
      %c0_17 = arith.constant 0 : index
      %c0_18 = arith.constant 0 : index
      %20 = vector.load %arg6[%c0_16, %c0_17, %c0_18] : memref<1x128x128xf32, #tpu.memory_space<vmem>>, vector<1x128x128xf32>
      %21 = vector.shape_cast %20 : vector<1x128x128xf32> to vector<128x128xf32>
      %22 = vector.shape_cast %19 : vector<128x128xf32> to vector<1x128x128xf32>
      tpu.vector_store %arg6[%c0_16, %c0_17, %c0_18], %22 {strides = array<i32>} : memref<1x128x128xf32, #tpu.memory_space<vmem>>, vector<1x128x128xf32>,
    } else {
    }
    return
  }
  func.func @transform_0(%arg0: i32, %arg1: i32, %arg2: i32) -> (i32, i32, i32) {
    %c0_i32 = arith.constant 0 : i32
    return %arg0, %arg1, %arg2 : i32, i32, i32
  }
  func.func @transform_1(%arg0: i32, %arg1: i32, %arg2: i32) -> (i32, i32, i32) {
    %c0_i32 = arith.constant 0 : i32
    %c0_i32_0 = arith.constant 0 : i32
    return %arg0, %arg2, %c0_i32 : i32, i32, i32
  }
  func.func @transform_2(%arg0: i32, %arg1: i32, %arg2: i32) -> (i32, i32) {
    %c0_i32 = arith.constant 0 : i32
    %c0_i32_0 = arith.constant 0 : i32
    %c0_i32_1 = arith.constant 0 : i32
    return %c0_i32, %c0_i32_0 : i32, i32
  }
  func.func @transform_3(%arg0: i32, %arg1: i32, %arg2: i32) -> (i32, i32, i32) {
    %c0_i32 = arith.constant 0 : i32
    %c0_i32_0 = arith.constant 0 : i32
    return %arg0, %arg1, %c0_i32 : i32, i32, i32
  }
}

</mosaic_0001>

<llo_original>
// kernel: neg.2
$region0: #{neg.2}
  #allocation2 [shape = 's32[1]{0}', space=sflag, size = 0x4, scoped, tag = 'scoped memory for neg.2']
  %s0 = inlined_call_operand.hbm [shape: f32[2,256,256], index: 0, kind: input, shape index: {}]
  %s1 = inlined_call_operand.vmem [shape: f32[2,256,256], index: 1, kind: output, shape index: {}]
  $region1: #{neg.2} parent=0
    #allocation0 [shape = 'u8[524288]{0}', space=vmem, size = 0x80000, scoped, tag = 'operand span for operand 0']
    #allocation1 [shape = 's32[1]{0}', space=sflag, size = 0x4, scoped, tag = 'scoped memory for neg.2']
    %2 = vsyncpa [#allocation1], 0
    %s4 = ssub.s32 16384, 16384
    %5 = vsyncadd [#allocation1], %s4
    %s6 = sshll.u32 [#allocation0], 4
    %s7 = int_to_ptr.vmem [resolvable:$true] %s6
    %12 = dma.hbm_to_vmem [thread:$0]  %s0, 16384, %s7, [#allocation1], 256, 256, 16
    %13 = dma.done [#allocation1], 16384
    %v14 = vld [vmem:[#allocation0] sm:$0xff]
    %15 = xla_tuple %v14
    %16 = xla_tuple %15
    %v17 = vxor.u32 %v14, 2147483648
    %18 = xla_tuple %v17
    %19 = vst [vmem:[%s1] sm:$0xff] %v17
    %s20 = scalar_lea.vmem [#allocation0], 512
    %v21 = vld [vmem:[%s20] sm:$0xff]
    %22 = xla_tuple %v21
    %23 = xla_tuple %22
    %v24 = vxor.u32 %v21, 2147483648
    %25 = xla_tuple %v24
    %s26 = scalar_lea.vmem %s1, 512
    %27 = vst [vmem:[%s26] sm:$0xff] %v24
    %s28 = scalar_lea.vmem [#allocation0], 16
    %v29 = vld [vmem:[%s28] sm:$0xff]
    %30 = xla_tuple %v29
    %31 = xla_tuple %30
    %v32 = vxor.u32 %v29, 2147483648
    %33 = xla_tuple %v32
    %s34 = scalar_lea.vmem %s1, 16
    %35 = vst [vmem:[%s34] sm:$0xff] %v32
    %s36 = scalar_lea.vmem [#allocation0], 528
    %v37 = vld [vmem:[%s36] sm:$0xff]
    %38 = xla_tuple %v37
    %39 = xla_tuple %38
    %v40 = vxor.u32 %v37, 2147483648
    %41 = xla_tuple %v40
    %s42 = scalar_lea.vmem %s1, 528
    %43 = vst [vmem:[%s42] sm:$0xff] %v40
    %s44 = scalar_lea.vmem [#allocation0], 32
    %v45 = vld [vmem:[%s44] sm:$0xff]
    %46 = xla_tuple %v45
    %47 = xla_tuple %46
    %v48 = vxor.u32 %v45, 2147483648
    %49 = xla_tuple %v48
    %s50 = scalar_lea.vmem %s1, 32
    %51 = vst [vmem:[%s50] sm:$0xff] %v48
    %s52 = scalar_lea.vmem [#allocation0], 544
    %v53 = vld [vmem:[%s52] sm:$0xff]
    %54 = xla_tuple %v53
    %55 = xla_tuple %54
    %v56 = vxor.u32 %v53, 2147483648
    %57 = xla_tuple %v56
    %s58 = scalar_lea.vmem %s1, 544
    %59 = vst [vmem:[%s58] sm:$0xff] %v56
    %s60 = scalar_lea.vmem [#allocation0], 48
    %v61 = vld [vmem:[%s60] sm:$0xff]
    %62 = xla_tuple %v61
    %63 = xla_tuple %62
    %v64 = vxor.u32 %v61, 2147483648
    %65 = xla_tuple %v64
    %s66 = scalar_lea.vmem %s1, 48
    %67 = vst [vmem:[%s66] sm:$0xff] %v64
    %s68 = scalar_lea.vmem [#allocation0], 560
    %v69 = vld [vmem:[%s68] sm:$0xff]
    %70 = xla_tuple %v69
    %71 = xla_tuple %70
    %v72 = vxor.u32 %v69, 2147483648
    %73 = xla_tuple %v72
    %s74 = scalar_lea.vmem %s1, 560
    %75 = vst [vmem:[%s74] sm:$0xff] %v72
    %s76 = scalar_lea.vmem [#allocation0], 64
    %v77 = vld [vmem:[%s76] sm:$0xff]
    %78 = xla_tuple %v77
    %79 = xla_tuple %78
    %v80 = vxor.u32 %v77, 2147483648
    %81 = xla_tuple %v80
    %s82 = scalar_lea.vmem %s1, 64
    %83 = vst [vmem:[%s82] sm:$0xff] %v80
    %s84 = scalar_lea.vmem [#allocation0], 576
    %v85 = vld [vmem:[%s84] sm:$0xff]
    %86 = xla_tuple %v85
    %87 = xla_tuple %86
    %v88 = vxor.u32 %v85, 2147483648
    %89 = xla_tuple %v88
    %s90 = scalar_lea.vmem %s1, 576
    %91 = vst [vmem:[%s90] sm:$0xff] %v88
    %s92 = scalar_lea.vmem [#allocation0], 80
    %v93 = vld [vmem:[%s92] sm:$0xff]
    %94 = xla_tuple %v93
    %95 = xla_tuple %94
    %v96 = vxor.u32 %v93, 2147483648
    %97 = xla_tuple %v96
    %s98 = scalar_lea.vmem %s1, 80
    %99 = vst [vmem:[%s98] sm:$0xff] %v96
    %s100 = scalar_lea.vmem [#allocation0], 592
    %v101 = vld [vmem:[%s100] sm:$0xff]
    %102 = xla_tuple %v101
    %103 = xla_tuple %102
    %v104 = vxor.u32 %v101, 2147483648
    %105 = xla_tuple %v104
    %s106 = scalar_lea.vmem %s1, 592
    %107 = vst [vmem:[%s106] sm:$0xff] %v104
    %s108 = scalar_lea.vmem [#allocation0], 96
    %v109 = vld [vmem:[%s108] sm:$0xff]
    %110 = xla_tuple %v109
    %111 = xla_tuple %110
    %v112 = vxor.u32 %v109, 2147483648
    %113 = xla_tuple %v112
    %s114 = scalar_lea.vmem %s1, 96
    %115 = vst [vmem:[%s114] sm:$0xff] %v112
    %s116 = scalar_lea.vmem [#allocation0], 608
    %v117 = vld [vmem:[%s116] sm:$0xff]
    %118 = xla_tuple %v117
    %119 = xla_tuple %118
    %v120 = vxor.u32 %v117, 2147483648
    %121 = xla_tuple %v120
    %s122 = scalar_lea.vmem %s1, 608
    %123 = vst [vmem:[%s122] sm:$0xff] %v120
    %s124 = scalar_lea.vmem [#allocation0], 112
    %v125 = vld [vmem:[%s124] sm:$0xff]
    %126 = xla_tuple %v125
    %127 = xla_tuple %126
    %v128 = vxor.u32 %v125, 2147483648
    %129 = xla_tuple %v128
    %s130 = scalar_lea.vmem %s1, 112
    %131 = vst [vmem:[%s130] sm:$0xff] %v128
    %s132 = scalar_lea.vmem [#allocation0], 624
    %v133 = vld [vmem:[%s132] sm:$0xff]
    %134 = xla_tuple %v133
    %135 = xla_tuple %134
    %v136 = vxor.u32 %v133, 2147483648
    %137 = xla_tuple %v136
    %s138 = scalar_lea.vmem %s1, 624
    %139 = vst [vmem:[%s138] sm:$0xff] %v136
    %s140 = scalar_lea.vmem [#allocation0], 128
    %v141 = vld [vmem:[%s140] sm:$0xff]
    %142 = xla_tuple %v141
    %143 = xla_tuple %142
    %v144 = vxor.u32 %v141, 2147483648
    %145 = xla_tuple %v144
    %s146 = scalar_lea.vmem %s1, 128
    %147 = vst [vmem:[%s146] sm:$0xff] %v144
    %s148 = scalar_lea.vmem [#allocation0], 640
    %v149 = vld [vmem:[%s148] sm:$0xff]
    %150 = xla_tuple %v149
    %151 = xla_tuple %150
    %v152 = vxor.u32 %v149, 2147483648
    %153 = xla_tuple %v152
    %s154 = scalar_lea.vmem %s1, 640
    %155 = vst [vmem:[%s154] sm:$0xff] %v152
    %s156 = scalar_lea.vmem [#allocation0], 144
    %v157 = vld [vmem:[%s156] sm:$0xff]
    %158 = xla_tuple %v157
    %159 = xla_tuple %158
    %v160 = vxor.u32 %v157, 2147483648
    %161 = xla_tuple %v160
    %s162 = scalar_lea.vmem %s1, 144
    %163 = vst [vmem:[%s162] sm:$0xff] %v160
    %s164 = scalar_lea.vmem [#allocation0], 656
    %v165 = vld [vmem:[%s164] sm:$0xff]
    %166 = xla_tuple %v165
    %167 = xla_tuple %166
    %v168 = vxor.u32 %v165, 2147483648
    %169 = xla_tuple %v168
    %s170 = scalar_lea.vmem %s1, 656
    %171 = vst [vmem:[%s170] sm:$0xff] %v168
    %s172 = scalar_lea.vmem [#allocation0], 160
    %v173 = vld [vmem:[%s172] sm:$0xff]
    %174 = xla_tuple %v173
    %175 = xla_tuple %174
    %v176 = vxor.u32 %v173, 2147483648
    %177 = xla_tuple %v176
    %s178 = scalar_lea.vmem %s1, 160
    %179 = vst [vmem:[%s178] sm:$0xff] %v176
    %s180 = scalar_lea.vmem [#allocation0], 672
    %v181 = vld [vmem:[%s180] sm:$0xff]
    %182 = xla_tuple %v181
    %183 = xla_tuple %182
    %v184 = vxor.u32 %v181, 2147483648
    %185 = xla_tuple %v184
    %s186 = scalar_lea.vmem %s1, 672
    %187 = vst [vmem:[%s186] sm:$0xff] %v184
    %s188 = scalar_lea.vmem [#allocation0], 176
    %v189 = vld [vmem:[%s188] sm:$0xff]
    %190 = xla_tuple %v189
    %191 = xla_tuple %190
    %v192 = vxor.u32 %v189, 2147483648
    %193 = xla_tuple %v192
    %s194 = scalar_lea.vmem %s1, 176
    %195 = vst [vmem:[%s194] sm:$0xff] %v192
    %s196 = scalar_lea.vmem [#allocation0], 688
    %v197 = vld [vmem:[%s196] sm:$0xff]
    %198 = xla_tuple %v197
    %199 = xla_tuple %198
    %v200 = vxor.u32 %v197, 2147483648
    %201 = xla_tuple %v200
    %s202 = scalar_lea.vmem %s1, 688
    %203 = vst [vmem:[%s202] sm:$0xff] %v200
    %s204 = scalar_lea.vmem [#allocation0], 192
    %v205 = vld [vmem:[%s204] sm:$0xff]
    %206 = xla_tuple %v205
    %207 = xla_tuple %206
    %v208 = vxor.u32 %v205, 2147483648
    %209 = xla_tuple %v208
    %s210 = scalar_lea.vmem %s1, 192
    %211 = vst [vmem:[%s210] sm:$0xff] %v208
    %s212 = scalar_lea.vmem [#allocation0], 704
    %v213 = vld [vmem:[%s212] sm:$0xff]
    %214 = xla_tuple %v213
    %215 = xla_tuple %214
    %v216 = vxor.u32 %v213, 2147483648
    %217 = xla_tuple %v216
    %s218 = scalar_lea.vmem %s1, 704
    %219 = vst [vmem:[%s218] sm:$0xff] %v216
    %s220 = scalar_lea.vmem [#allocation0], 208
    %v221 = vld [vmem:[%s220] sm:$0xff]
    %222 = xla_tuple %v221
    %223 = xla_tuple %222
    %v224 = vxor.u32 %v221, 2147483648
    %225 = xla_tuple %v224
    %s226 = scalar_lea.vmem %s1, 208
    %227 = vst [vmem:[%s226] sm:$0xff] %v224
    %s228 = scalar_lea.vmem [#allocation0], 720
    %v229 = vld [vmem:[%s228] sm:$0xff]
    %230 = xla_tuple %v229
    %231 = xla_tuple %230
    %v232 = vxor.u32 %v229, 2147483648
    %233 = xla_tuple %v232
    %s234 = scalar_lea.vmem %s1, 720
    %235 = vst [vmem:[%s234] sm:$0xff] %v232
    %s236 = scalar_lea.vmem [#allocation0], 224
    %v237 = vld [vmem:[%s236] sm:$0xff]
    %238 = xla_tuple %v237
    %239 = xla_tuple %238
    %v240 = vxor.u32 %v237, 2147483648
    %241 = xla_tuple %v240
    %s242 = scalar_lea.vmem %s1, 224
    %243 = vst [vmem:[%s242] sm:$0xff] %v240
    %s244 = scalar_lea.vmem [#allocation0], 736
    %v245 = vld [vmem:[%s244] sm:$0xff]
    %246 = xla_tuple %v245
    %247 = xla_tuple %246
    %v248 = vxor.u32 %v245, 2147483648
    %249 = xla_tuple %v248
    %s250 = scalar_lea.vmem %s1, 736
    %251 = vst [vmem:[%s250] sm:$0xff] %v248
    %s252 = scalar_lea.vmem [#allocation0], 240
    %v253 = vld [vmem:[%s252] sm:$0xff]
    %254 = xla_tuple %v253
    %255 = xla_tuple %254
    %v256 = vxor.u32 %v253, 2147483648
    %257 = xla_tuple %v256
    %s258 = scalar_lea.vmem %s1, 240
    %259 = vst [vmem:[%s258] sm:$0xff] %v256
    %s260 = scalar_lea.vmem [#allocation0], 752
    %v261 = vld [vmem:[%s260] sm:$0xff]
    %262 = xla_tuple %v261
    %263 = xla_tuple %262
    %v264 = vxor.u32 %v261, 2147483648
    %265 = xla_tuple %v264
    %s266 = scalar_lea.vmem %s1, 752
    %267 = vst [vmem:[%s266] sm:$0xff] %v264
    %s268 = scalar_lea.vmem [#allocation0], 256
    %v269 = vld [vmem:[%s268] sm:$0xff]
    %270 = xla_tuple %v269
    %271 = xla_tuple %270
    %v272 = vxor.u32 %v269, 2147483648
    %273 = xla_tuple %v272
    %s274 = scalar_lea.vmem %s1, 256
    %275 = vst [vmem:[%s274] sm:$0xff] %v272
    %s276 = scalar_lea.vmem [#allocation0], 768
    %v277 = vld [vmem:[%s276] sm:$0xff]
    %278 = xla_tuple %v277
    %279 = xla_tuple %278
    %v280 = vxor.u32 %v277, 2147483648
    %281 = xla_tuple %v280
    %s282 = scalar_lea.vmem %s1, 768
    %283 = vst [vmem:[%s282] sm:$0xff] %v280
    %s284 = scalar_lea.vmem [#allocation0], 272
    %v285 = vld [vmem:[%s284] sm:$0xff]
    %286 = xla_tuple %v285
    %287 = xla_tuple %286
    %v288 = vxor.u32 %v285, 2147483648
    %289 = xla_tuple %v288
    %s290 = scalar_lea.vmem %s1, 272
    %291 = vst [vmem:[%s290] sm:$0xff] %v288
    %s292 = scalar_lea.vmem [#allocation0], 784
    %v293 = vld [vmem:[%s292] sm:$0xff]
    %294 = xla_tuple %v293
    %295 = xla_tuple %294
    %v296 = vxor.u32 %v293, 2147483648
    %297 = xla_tuple %v296
    %s298 = scalar_lea.vmem %s1, 784
    %299 = vst [vmem:[%s298] sm:$0xff] %v296
    %s300 = scalar_lea.vmem [#allocation0], 288
    %v301 = vld [vmem:[%s300] sm:$0xff]
    %302 = xla_tuple %v301
    %303 = xla_tuple %302
    %v304 = vxor.u32 %v301, 2147483648
    %305 = xla_tuple %v304
    %s306 = scalar_lea.vmem %s1, 288
    %307 = vst [vmem:[%s306] sm:$0xff] %v304
    %s308 = scalar_lea.vmem [#allocation0], 800
    %v309 = vld [vmem:[%s308] sm:$0xff]
    %310 = xla_tuple %v309
    %311 = xla_tuple %310
    %v312 = vxor.u32 %v309, 2147483648
    %313 = xla_tuple %v312
    %s314 = scalar_lea.vmem %s1, 800
    %315 = vst [vmem:[%s314] sm:$0xff] %v312
    %s316 = scalar_lea.vmem [#allocation0], 304
    %v317 = vld [vmem:[%s316] sm:$0xff]
    %318 = xla_tuple %v317
    %319 = xla_tuple %318
    %v320 = vxor.u32 %v317, 2147483648
    %321 = xla_tuple %v320
    %s322 = scalar_lea.vmem %s1, 304
    %323 = vst [vmem:[%s322] sm:$0xff] %v320
    %s324 = scalar_lea.vmem [#allocation0], 816
    %v325 = vld [vmem:[%s324] sm:$0xff]
    %326 = xla_tuple %v325
    %327 = xla_tuple %326
    %v328 = vxor.u32 %v325, 2147483648
    %329 = xla_tuple %v328
    %s330 = scalar_lea.vmem %s1, 816
    %331 = vst [vmem:[%s330] sm:$0xff] %v328
    %s332 = scalar_lea.vmem [#allocation0], 320
    %v333 = vld [vmem:[%s332] sm:$0xff]
    %334 = xla_tuple %v333
    %335 = xla_tuple %334
    %v336 = vxor.u32 %v333, 2147483648
    %337 = xla_tuple %v336
    %s338 = scalar_lea.vmem %s1, 320
    %339 = vst [vmem:[%s338] sm:$0xff] %v336
    %s340 = scalar_lea.vmem [#allocation0], 832
    %v341 = vld [vmem:[%s340] sm:$0xff]
    %342 = xla_tuple %v341
    %343 = xla_tuple %342
    %v344 = vxor.u32 %v341, 2147483648
    %345 = xla_tuple %v344
    %s346 = scalar_lea.vmem %s1, 832
    %347 = vst [vmem:[%s346] sm:$0xff] %v344
    %s348 = scalar_lea.vmem [#allocation0], 336
    %v349 = vld [vmem:[%s348] sm:$0xff]
    %350 = xla_tuple %v349
    %351 = xla_tuple %350
    %v352 = vxor.u32 %v349, 2147483648
    %353 = xla_tuple %v352
    %s354 = scalar_lea.vmem %s1, 336
    %355 = vst [vmem:[%s354] sm:$0xff] %v352
    %s356 = scalar_lea.vmem [#allocation0], 848
    %v357 = vld [vmem:[%s356] sm:$0xff]
    %358 = xla_tuple %v357
    %359 = xla_tuple %358
    %v360 = vxor.u32 %v357, 2147483648
    %361 = xla_tuple %v360
    %s362 = scalar_lea.vmem %s1, 848
    %363 = vst [vmem:[%s362] sm:$0xff] %v360
    %s364 = scalar_lea.vmem [#allocation0], 352
    %v365 = vld [vmem:[%s364] sm:$0xff]
    %366 = xla_tuple %v365
    %367 = xla_tuple %366
    %v368 = vxor.u32 %v365, 2147483648
    %369 = xla_tuple %v368
    %s370 = scalar_lea.vmem %s1, 352
    %371 = vst [vmem:[%s370] sm:$0xff] %v368
    %s372 = scalar_lea.vmem [#allocation0], 864
    %v373 = vld [vmem:[%s372] sm:$0xff]
    %374 = xla_tuple %v373
    %375 = xla_tuple %374
    %v376 = vxor.u32 %v373, 2147483648
    %377 = xla_tuple %v376
    %s378 = scalar_lea.vmem %s1, 864
    %379 = vst [vmem:[%s378] sm:$0xff] %v376
    %s380 = scalar_lea.vmem [#allocation0], 368
    %v381 = vld [vmem:[%s380] sm:$0xff]
    %382 = xla_tuple %v381
    %383 = xla_tuple %382
    %v384 = vxor.u32 %v381, 2147483648
    %385 = xla_tuple %v384
    %s386 = scalar_lea.vmem %s1, 368
    %387 = vst [vmem:[%s386] sm:$0xff] %v384
    %s388 = scalar_lea.vmem [#allocation0], 880
    %v389 = vld [vmem:[%s388] sm:$0xff]
    %390 = xla_tuple %v389
    %391 = xla_tuple %390
    %v392 = vxor.u32 %v389, 2147483648
    %393 = xla_tuple %v392
    %s394 = scalar_lea.vmem %s1, 880
    %395 = vst [vmem:[%s394] sm:$0xff] %v392
    %s396 = scalar_lea.vmem [#allocation0], 384
    %v397 = vld [vmem:[%s396] sm:$0xff]
    %398 = xla_tuple %v397
    %399 = xla_tuple %398
    %v400 = vxor.u32 %v397, 2147483648
    %401 = xla_tuple %v400
    %s402 = scalar_lea.vmem %s1, 384
    %403 = vst [vmem:[%s402] sm:$0xff] %v400
    %s404 = scalar_lea.vmem [#allocation0], 896
    %v405 = vld [vmem:[%s404] sm:$0xff]
    %406 = xla_tuple %v405
    %407 = xla_tuple %406
    %v408 = vxor.u32 %v405, 2147483648
    %409 = xla_tuple %v408
    %s410 = scalar_lea.vmem %s1, 896
    %411 = vst [vmem:[%s410] sm:$0xff] %v408
    %s412 = scalar_lea.vmem [#allocation0], 400
    %v413 = vld [vmem:[%s412] sm:$0xff]
    %414 = xla_tuple %v413
    %415 = xla_tuple %414
    %v416 = vxor.u32 %v413, 2147483648
    %417 = xla_tuple %v416
    %s418 = scalar_lea.vmem %s1, 400
    %419 = vst [vmem:[%s418] sm:$0xff] %v416
    %s420 = scalar_lea.vmem [#allocation0], 912
    %v421 = vld [vmem:[%s420] sm:$0xff]
    %422 = xla_tuple %v421
    %423 = xla_tuple %422
    %v424 = vxor.u32 %v421, 2147483648
    %425 = xla_tuple %v424
    %s426 = scalar_lea.vmem %s1, 912
    %427 = vst [vmem:[%s426] sm:$0xff] %v424
    %s428 = scalar_lea.vmem [#allocation0], 416
    %v429 = vld [vmem:[%s428] sm:$0xff]
    %430 = xla_tuple %v429
    %431 = xla_tuple %430
    %v432 = vxor.u32 %v429, 2147483648
    %433 = xla_tuple %v432
    %s434 = scalar_lea.vmem %s1, 416
    %435 = vst [vmem:[%s434] sm:$0xff] %v432
    %s436 = scalar_lea.vmem [#allocation0], 928
    %v437 = vld [vmem:[%s436] sm:$0xff]
    %438 = xla_tuple %v437
    %439 = xla_tuple %438
    %v440 = vxor.u32 %v437, 2147483648
    %441 = xla_tuple %v440
    %s442 = scalar_lea.vmem %s1, 928
    %443 = vst [vmem:[%s442] sm:$0xff] %v440
    %s444 = scalar_lea.vmem [#allocation0], 432
    %v445 = vld [vmem:[%s444] sm:$0xff]
    %446 = xla_tuple %v445
    %447 = xla_tuple %446
    %v448 = vxor.u32 %v445, 2147483648
    %449 = xla_tuple %v448
    %s450 = scalar_lea.vmem %s1, 432
    %451 = vst [vmem:[%s450] sm:$0xff] %v448
    %s452 = scalar_lea.vmem [#allocation0], 944
    %v453 = vld [vmem:[%s452] sm:$0xff]
    %454 = xla_tuple %v453
    %455 = xla_tuple %454
    %v456 = vxor.u32 %v453, 2147483648
    %457 = xla_tuple %v456
    %s458 = scalar_lea.vmem %s1, 944
    %459 = vst [vmem:[%s458] sm:$0xff] %v456
    %s460 = scalar_lea.vmem [#allocation0], 448
    %v461 = vld [vmem:[%s460] sm:$0xff]
    %462 = xla_tuple %v461
    %463 = xla_tuple %462
    %v464 = vxor.u32 %v461, 2147483648
    %465 = xla_tuple %v464
    %s466 = scalar_lea.vmem %s1, 448
    %467 = vst [vmem:[%s466] sm:$0xff] %v464
    %s468 = scalar_lea.vmem [#allocation0], 960
    %v469 = vld [vmem:[%s468] sm:$0xff]
    %470 = xla_tuple %v469
    %471 = xla_tuple %470
    %v472 = vxor.u32 %v469, 2147483648
    %473 = xla_tuple %v472
    %s474 = scalar_lea.vmem %s1, 960
    %475 = vst [vmem:[%s474] sm:$0xff] %v472
    %s476 = scalar_lea.vmem [#allocation0], 464
    %v477 = vld [vmem:[%s476] sm:$0xff]
    %478 = xla_tuple %v477
    %479 = xla_tuple %478
    %v480 = vxor.u32 %v477, 2147483648
    %481 = xla_tuple %v480
    %s482 = scalar_lea.vmem %s1, 464
    %483 = vst [vmem:[%s482] sm:$0xff] %v480
    %s484 = scalar_lea.vmem [#allocation0], 976
    %v485 = vld [vmem:[%s484] sm:$0xff]
    %486 = xla_tuple %v485
    %487 = xla_tuple %486
    %v488 = vxor.u32 %v485, 2147483648
    %489 = xla_tuple %v488
    %s490 = scalar_lea.vmem %s1, 976
    %491 = vst [vmem:[%s490] sm:$0xff] %v488
    %s492 = scalar_lea.vmem [#allocation0], 480
    %v493 = vld [vmem:[%s492] sm:$0xff]
    %494 = xla_tuple %v493
    %495 = xla_tuple %494
    %v496 = vxor.u32 %v493, 2147483648
    %497 = xla_tuple %v496
    %s498 = scalar_lea.vmem %s1, 480
    %499 = vst [vmem:[%s498] sm:$0xff] %v496
    %s500 = scalar_lea.vmem [#allocation0], 992
    %v501 = vld [vmem:[%s500] sm:$0xff]
    %502 = xla_tuple %v501
    %503 = xla_tuple %502
    %v504 = vxor.u32 %v501, 2147483648
    %505 = xla_tuple %v504
    %s506 = scalar_lea.vmem %s1, 992
    %507 = vst [vmem:[%s506] sm:$0xff] %v504
    %s508 = scalar_lea.vmem [#allocation0], 496
    %v509 = vld [vmem:[%s508] sm:$0xff]
    %510 = xla_tuple %v509
    %511 = xla_tuple %510
    %v512 = vxor.u32 %v509, 2147483648
    %513 = xla_tuple %v512
    %s514 = scalar_lea.vmem %s1, 496
    %515 = vst [vmem:[%s514] sm:$0xff] %v512
    %s516 = scalar_lea.vmem [#allocation0], 1008
    %v517 = vld [vmem:[%s516] sm:$0xff]
    %518 = xla_tuple %v517
    %519 = xla_tuple %518
    %v520 = vxor.u32 %v517, 2147483648
    %521 = xla_tuple %v520
    %s522 = scalar_lea.vmem %s1, 1008
    %523 = vst [vmem:[%s522] sm:$0xff] %v520
    %s524 = scalar_lea.vmem [#allocation0], 8
    %v525 = vld [vmem:[%s524] sm:$0xff]
    %526 = xla_tuple %v525
    %527 = xla_tuple %526
    %v528 = vxor.u32 %v525, 2147483648
    %529 = xla_tuple %v528
    %s530 = scalar_lea.vmem %s1, 8
    %531 = vst [vmem:[%s530] sm:$0xff] %v528
    %s532 = scalar_lea.vmem [#allocation0], 520
    %v533 = vld [vmem:[%s532] sm:$0xff]
    %534 = xla_tuple %v533
    %535 = xla_tuple %534
    %v536 = vxor.u32 %v533, 2147483648
    %537 = xla_tuple %v536
    %s538 = scalar_lea.vmem %s1, 520
    %539 = vst [vmem:[%s538] sm:$0xff] %v536
    %s540 = scalar_lea.vmem [#allocation0], 24
    %v541 = vld [vmem:[%s540] sm:$0xff]
    %542 = xla_tuple %v541
    %543 = xla_tuple %542
    %v544 = vxor.u32 %v541, 2147483648
    %545 = xla_tuple %v544
    %s546 = scalar_lea.vmem %s1, 24
    %547 = vst [vmem:[%s546] sm:$0xff] %v544
    %s548 = scalar_lea.vmem [#allocation0], 536
    %v549 = vld [vmem:[%s548] sm:$0xff]
    %550 = xla_tuple %v549
    %551 = xla_tuple %550
    %v552 = vxor.u32 %v549, 2147483648
    %553 = xla_tuple %v552
    %s554 = scalar_lea.vmem %s1, 536
    %555 = vst [vmem:[%s554] sm:$0xff] %v552
    %s556 = scalar_lea.vmem [#allocation0], 40
    %v557 = vld [vmem:[%s556] sm:$0xff]
    %558 = xla_tuple %v557
    %559 = xla_tuple %558
    %v560 = vxor.u32 %v557, 2147483648
    %561 = xla_tuple %v560
    %s562 = scalar_lea.vmem %s1, 40
    %563 = vst [vmem:[%s562] sm:$0xff] %v560
    %s564 = scalar_lea.vmem [#allocation0], 552
    %v565 = vld [vmem:[%s564] sm:$0xff]
    %566 = xla_tuple %v565
    %567 = xla_tuple %566
    %v568 = vxor.u32 %v565, 2147483648
    %569 = xla_tuple %v568
    %s570 = scalar_lea.vmem %s1, 552
    %571 = vst [vmem:[%s570] sm:$0xff] %v568
    %s572 = scalar_lea.vmem [#allocation0], 56
    %v573 = vld [vmem:[%s572] sm:$0xff]
    %574 = xla_tuple %v573
    %575 = xla_tuple %574
    %v576 = vxor.u32 %v573, 2147483648
    %577 = xla_tuple %v576
    %s578 = scalar_lea.vmem %s1, 56
    %579 = vst [vmem:[%s578] sm:$0xff] %v576
    %s580 = scalar_lea.vmem [#allocation0], 568
    %v581 = vld [vmem:[%s580] sm:$0xff]
    %582 = xla_tuple %v581
    %583 = xla_tuple %582
    %v584 = vxor.u32 %v581, 2147483648
    %585 = xla_tuple %v584
    %s586 = scalar_lea.vmem %s1, 568
    %587 = vst [vmem:[%s586] sm:$0xff] %v584
    %s588 = scalar_lea.vmem [#allocation0], 72
    %v589 = vld [vmem:[%s588] sm:$0xff]
    %590 = xla_tuple %v589
    %591 = xla_tuple %590
    %v592 = vxor.u32 %v589, 2147483648
    %593 = xla_tuple %v592
    %s594 = scalar_lea.vmem %s1, 72
    %595 = vst [vmem:[%s594] sm:$0xff] %v592
    %s596 = scalar_lea.vmem [#allocation0], 584
    %v597 = vld [vmem:[%s596] sm:$0xff]
    %598 = xla_tuple %v597
    %599 = xla_tuple %598
    %v600 = vxor.u32 %v597, 2147483648
    %601 = xla_tuple %v600
    %s602 = scalar_lea.vmem %s1, 584
    %603 = vst [vmem:[%s602] sm:$0xff] %v600
    %s604 = scalar_lea.vmem [#allocation0], 88
    %v605 = vld [vmem:[%s604] sm:$0xff]
    %606 = xla_tuple %v605
    %607 = xla_tuple %606
    %v608 = vxor.u32 %v605, 2147483648
    %609 = xla_tuple %v608
    %s610 = scalar_lea.vmem %s1, 88
    %611 = vst [vmem:[%s610] sm:$0xff] %v608
    %s612 = scalar_lea.vmem [#allocation0], 600
    %v613 = vld [vmem:[%s612] sm:$0xff]
    %614 = xla_tuple %v613
    %615 = xla_tuple %614
    %v616 = vxor.u32 %v613, 2147483648
    %617 = xla_tuple %v616
    %s618 = scalar_lea.vmem %s1, 600
    %619 = vst [vmem:[%s618] sm:$0xff] %v616
    %s620 = scalar_lea.vmem [#allocation0], 104
    %v621 = vld [vmem:[%s620] sm:$0xff]
    %622 = xla_tuple %v621
    %623 = xla_tuple %622
    %v624 = vxor.u32 %v621, 2147483648
    %625 = xla_tuple %v624
    %s626 = scalar_lea.vmem %s1, 104
    %627 = vst [vmem:[%s626] sm:$0xff] %v624
    %s628 = scalar_lea.vmem [#allocation0], 616
    %v629 = vld [vmem:[%s628] sm:$0xff]
    %630 = xla_tuple %v629
    %631 = xla_tuple %630
    %v632 = vxor.u32 %v629, 2147483648
    %633 = xla_tuple %v632
    %s634 = scalar_lea.vmem %s1, 616
    %635 = vst [vmem:[%s634] sm:$0xff] %v632
    %s636 = scalar_lea.vmem [#allocation0], 120
    %v637 = vld [vmem:[%s636] sm:$0xff]
    %638 = xla_tuple %v637
    %639 = xla_tuple %638
    %v640 = vxor.u32 %v637, 2147483648
    %641 = xla_tuple %v640
    %s642 = scalar_lea.vmem %s1, 120
    %643 = vst [vmem:[%s642] sm:$0xff] %v640
    %s644 = scalar_lea.vmem [#allocation0], 632
    %v645 = vld [vmem:[%s644] sm:$0xff]
    %646 = xla_tuple %v645
    %647 = xla_tuple %646
    %v648 = vxor.u32 %v645, 2147483648
    %649 = xla_tuple %v648
    %s650 = scalar_lea.vmem %s1, 632
    %651 = vst [vmem:[%s650] sm:$0xff] %v648
    %s652 = scalar_lea.vmem [#allocation0], 136
    %v653 = vld [vmem:[%s652] sm:$0xff]
    %654 = xla_tuple %v653
    %655 = xla_tuple %654
    %v656 = vxor.u32 %v653, 2147483648
    %657 = xla_tuple %v656
    %s658 = scalar_lea.vmem %s1, 136
    %659 = vst [vmem:[%s658] sm:$0xff] %v656
    %s660 = scalar_lea.vmem [#allocation0], 648
    %v661 = vld [vmem:[%s660] sm:$0xff]
    %662 = xla_tuple %v661
    %663 = xla_tuple %662
    %v664 = vxor.u32 %v661, 2147483648
    %665 = xla_tuple %v664
    %s666 = scalar_lea.vmem %s1, 648
    %667 = vst [vmem:[%s666] sm:$0xff] %v664
    %s668 = scalar_lea.vmem [#allocation0], 152
    %v669 = vld [vmem:[%s668] sm:$0xff]
    %670 = xla_tuple %v669
    %671 = xla_tuple %670
    %v672 = vxor.u32 %v669, 2147483648
    %673 = xla_tuple %v672
    %s674 = scalar_lea.vmem %s1, 152
    %675 = vst [vmem:[%s674] sm:$0xff] %v672
    %s676 = scalar_lea.vmem [#allocation0], 664
    %v677 = vld [vmem:[%s676] sm:$0xff]
    %678 = xla_tuple %v677
    %679 = xla_tuple %678
    %v680 = vxor.u32 %v677, 2147483648
    %681 = xla_tuple %v680
    %s682 = scalar_lea.vmem %s1, 664
    %683 = vst [vmem:[%s682] sm:$0xff] %v680
    %s684 = scalar_lea.vmem [#allocation0], 168
    %v685 = vld [vmem:[%s684] sm:$0xff]
    %686 = xla_tuple %v685
    %687 = xla_tuple %686
    %v688 = vxor.u32 %v685, 2147483648
    %689 = xla_tuple %v688
    %s690 = scalar_lea.vmem %s1, 168
    %691 = vst [vmem:[%s690] sm:$0xff] %v688
    %s692 = scalar_lea.vmem [#allocation0], 680
    %v693 = vld [vmem:[%s692] sm:$0xff]
    %694 = xla_tuple %v693
    %695 = xla_tuple %694
    %v696 = vxor.u32 %v693, 2147483648
    %697 = xla_tuple %v696
    %s698 = scalar_lea.vmem %s1, 680
    %699 = vst [vmem:[%s698] sm:$0xff] %v696
    %s700 = scalar_lea.vmem [#allocation0], 184
    %v701 = vld [vmem:[%s700] sm:$0xff]
    %702 = xla_tuple %v701
    %703 = xla_tuple %702
    %v704 = vxor.u32 %v701, 2147483648
    %705 = xla_tuple %v704
    %s706 = scalar_lea.vmem %s1, 184
    %707 = vst [vmem:[%s706] sm:$0xff] %v704
    %s708 = scalar_lea.vmem [#allocation0], 696
    %v709 = vld [vmem:[%s708] sm:$0xff]
    %710 = xla_tuple %v709
    %711 = xla_tuple %710
    %v712 = vxor.u32 %v709, 2147483648
    %713 = xla_tuple %v712
    %s714 = scalar_lea.vmem %s1, 696
    %715 = vst [vmem:[%s714] sm:$0xff] %v712
    %s716 = scalar_lea.vmem [#allocation0], 200
    %v717 = vld [vmem:[%s716] sm:$0xff]
    %718 = xla_tuple %v717
    %719 = xla_tuple %718
    %v720 = vxor.u32 %v717, 2147483648
    %721 = xla_tuple %v720
    %s722 = scalar_lea.vmem %s1, 200
    %723 = vst [vmem:[%s722] sm:$0xff] %v720
    %s724 = scalar_lea.vmem [#allocation0], 712
    %v725 = vld [vmem:[%s724] sm:$0xff]
    %726 = xla_tuple %v725
    %727 = xla_tuple %726
    %v728 = vxor.u32 %v725, 2147483648
    %729 = xla_tuple %v728
    %s730 = scalar_lea.vmem %s1, 712
    %731 = vst [vmem:[%s730] sm:$0xff] %v728
    %s732 = scalar_lea.vmem [#allocation0], 216
    %v733 = vld [vmem:[%s732] sm:$0xff]
    %734 = xla_tuple %v733
    %735 = xla_tuple %734
    %v736 = vxor.u32 %v733, 2147483648
    %737 = xla_tuple %v736
    %s738 = scalar_lea.vmem %s1, 216
    %739 = vst [vmem:[%s738] sm:$0xff] %v736
    %s740 = scalar_lea.vmem [#allocation0], 728
    %v741 = vld [vmem:[%s740] sm:$0xff]
    %742 = xla_tuple %v741
    %743 = xla_tuple %742
    %v744 = vxor.u32 %v741, 2147483648
    %745 = xla_tuple %v744
    %s746 = scalar_lea.vmem %s1, 728
    %747 = vst [vmem:[%s746] sm:$0xff] %v744
    %s748 = scalar_lea.vmem [#allocation0], 232
    %v749 = vld [vmem:[%s748] sm:$0xff]
    %750 = xla_tuple %v749
    %751 = xla_tuple %750
    %v752 = vxor.u32 %v749, 2147483648
    %753 = xla_tuple %v752
    %s754 = scalar_lea.vmem %s1, 232
    %755 = vst [vmem:[%s754] sm:$0xff] %v752
    %s756 = scalar_lea.vmem [#allocation0], 744
    %v757 = vld [vmem:[%s756] sm:$0xff]
    %758 = xla_tuple %v757
    %759 = xla_tuple %758
    %v760 = vxor.u32 %v757, 2147483648
    %761 = xla_tuple %v760
    %s762 = scalar_lea.vmem %s1, 744
    %763 = vst [vmem:[%s762] sm:$0xff] %v760
    %s764 = scalar_lea.vmem [#allocation0], 248
    %v765 = vld [vmem:[%s764] sm:$0xff]
    %766 = xla_tuple %v765
    %767 = xla_tuple %766
    %v768 = vxor.u32 %v765, 2147483648
    %769 = xla_tuple %v768
    %s770 = scalar_lea.vmem %s1, 248
    %771 = vst [vmem:[%s770] sm:$0xff] %v768
    %s772 = scalar_lea.vmem [#allocation0], 760
    %v773 = vld [vmem:[%s772] sm:$0xff]
    %774 = xla_tuple %v773
    %775 = xla_tuple %774
    %v776 = vxor.u32 %v773, 2147483648
    %777 = xla_tuple %v776
    %s778 = scalar_lea.vmem %s1, 760
    %779 = vst [vmem:[%s778] sm:$0xff] %v776
    %s780 = scalar_lea.vmem [#allocation0], 264
    %v781 = vld [vmem:[%s780] sm:$0xff]
    %782 = xla_tuple %v781
    %783 = xla_tuple %782
    %v784 = vxor.u32 %v781, 2147483648
    %785 = xla_tuple %v784
    %s786 = scalar_lea.vmem %s1, 264
    %787 = vst [vmem:[%s786] sm:$0xff] %v784
    %s788 = scalar_lea.vmem [#allocation0], 776
    %v789 = vld [vmem:[%s788] sm:$0xff]
    %790 = xla_tuple %v789
    %791 = xla_tuple %790
    %v792 = vxor.u32 %v789, 2147483648
    %793 = xla_tuple %v792
    %s794 = scalar_lea.vmem %s1, 776
    %795 = vst [vmem:[%s794] sm:$0xff] %v792
    %s796 = scalar_lea.vmem [#allocation0], 280
    %v797 = vld [vmem:[%s796] sm:$0xff]
    %798 = xla_tuple %v797
    %799 = xla_tuple %798
    %v800 = vxor.u32 %v797, 2147483648
    %801 = xla_tuple %v800
    %s802 = scalar_lea.vmem %s1, 280
    %803 = vst [vmem:[%s802] sm:$0xff] %v800
    %s804 = scalar_lea.vmem [#allocation0], 792
    %v805 = vld [vmem:[%s804] sm:$0xff]
    %806 = xla_tuple %v805
    %807 = xla_tuple %806
    %v808 = vxor.u32 %v805, 2147483648
    %809 = xla_tuple %v808
    %s810 = scalar_lea.vmem %s1, 792
    %811 = vst [vmem:[%s810] sm:$0xff] %v808
    %s812 = scalar_lea.vmem [#allocation0], 296
    %v813 = vld [vmem:[%s812] sm:$0xff]
    %814 = xla_tuple %v813
    %815 = xla_tuple %814
    %v816 = vxor.u32 %v813, 2147483648
    %817 = xla_tuple %v816
    %s818 = scalar_lea.vmem %s1, 296
    %819 = vst [vmem:[%s818] sm:$0xff] %v816
    %s820 = scalar_lea.vmem [#allocation0], 808
    %v821 = vld [vmem:[%s820] sm:$0xff]
    %822 = xla_tuple %v821
    %823 = xla_tuple %822
    %v824 = vxor.u32 %v821, 2147483648
    %825 = xla_tuple %v824
    %s826 = scalar_lea.vmem %s1, 808
    %827 = vst [vmem:[%s826] sm:$0xff] %v824
    %s828 = scalar_lea.vmem [#allocation0], 312
    %v829 = vld [vmem:[%s828] sm:$0xff]
    %830 = xla_tuple %v829
    %831 = xla_tuple %830
    %v832 = vxor.u32 %v829, 2147483648
    %833 = xla_tuple %v832
    %s834 = scalar_lea.vmem %s1, 312
    %835 = vst [vmem:[%s834] sm:$0xff] %v832
    %s836 = scalar_lea.vmem [#allocation0], 824
    %v837 = vld [vmem:[%s836] sm:$0xff]
    %838 = xla_tuple %v837
    %839 = xla_tuple %838
    %v840 = vxor.u32 %v837, 2147483648
    %841 = xla_tuple %v840
    %s842 = scalar_lea.vmem %s1, 824
    %843 = vst [vmem:[%s842] sm:$0xff] %v840
    %s844 = scalar_lea.vmem [#allocation0], 328
    %v845 = vld [vmem:[%s844] sm:$0xff]
    %846 = xla_tuple %v845
    %847 = xla_tuple %846
    %v848 = vxor.u32 %v845, 2147483648
    %849 = xla_tuple %v848
    %s850 = scalar_lea.vmem %s1, 328
    %851 = vst [vmem:[%s850] sm:$0xff] %v848
    %s852 = scalar_lea.vmem [#allocation0], 840
    %v853 = vld [vmem:[%s852] sm:$0xff]
    %854 = xla_tuple %v853
    %855 = xla_tuple %854
    %v856 = vxor.u32 %v853, 2147483648
    %857 = xla_tuple %v856
    %s858 = scalar_lea.vmem %s1, 840
    %859 = vst [vmem:[%s858] sm:$0xff] %v856
    %s860 = scalar_lea.vmem [#allocation0], 344
    %v861 = vld [vmem:[%s860] sm:$0xff]
    %862 = xla_tuple %v861
    %863 = xla_tuple %862
    %v864 = vxor.u32 %v861, 2147483648
    %865 = xla_tuple %v864
    %s866 = scalar_lea.vmem %s1, 344
    %867 = vst [vmem:[%s866] sm:$0xff] %v864
    %s868 = scalar_lea.vmem [#allocation0], 856
    %v869 = vld [vmem:[%s868] sm:$0xff]
    %870 = xla_tuple %v869
    %871 = xla_tuple %870
    %v872 = vxor.u32 %v869, 2147483648
    %873 = xla_tuple %v872
    %s874 = scalar_lea.vmem %s1, 856
    %875 = vst [vmem:[%s874] sm:$0xff] %v872
    %s876 = scalar_lea.vmem [#allocation0], 360
    %v877 = vld [vmem:[%s876] sm:$0xff]
    %878 = xla_tuple %v877
    %879 = xla_tuple %878
    %v880 = vxor.u32 %v877, 2147483648
    %881 = xla_tuple %v880
    %s882 = scalar_lea.vmem %s1, 360
    %883 = vst [vmem:[%s882] sm:$0xff] %v880
    %s884 = scalar_lea.vmem [#allocation0], 872
    %v885 = vld [vmem:[%s884] sm:$0xff]
    %886 = xla_tuple %v885
    %887 = xla_tuple %886
    %v888 = vxor.u32 %v885, 2147483648
    %889 = xla_tuple %v888
    %s890 = scalar_lea.vmem %s1, 872
    %891 = vst [vmem:[%s890] sm:$0xff] %v888
    %s892 = scalar_lea.vmem [#allocation0], 376
    %v893 = vld [vmem:[%s892] sm:$0xff]
    %894 = xla_tuple %v893
    %895 = xla_tuple %894
    %v896 = vxor.u32 %v893, 2147483648
    %897 = xla_tuple %v896
    %s898 = scalar_lea.vmem %s1, 376
    %899 = vst [vmem:[%s898] sm:$0xff] %v896
    %s900 = scalar_lea.vmem [#allocation0], 888
    %v901 = vld [vmem:[%s900] sm:$0xff]
    %902 = xla_tuple %v901
    %903 = xla_tuple %902
    %v904 = vxor.u32 %v901, 2147483648
    %905 = xla_tuple %v904
    %s906 = scalar_lea.vmem %s1, 888
    %907 = vst [vmem:[%s906] sm:$0xff] %v904
    %s908 = scalar_lea.vmem [#allocation0], 392
    %v909 = vld [vmem:[%s908] sm:$0xff]
    %910 = xla_tuple %v909
    %911 = xla_tuple %910
    %v912 = vxor.u32 %v909, 2147483648
    %913 = xla_tuple %v912
    %s914 = scalar_lea.vmem %s1, 392
    %915 = vst [vmem:[%s914] sm:$0xff] %v912
    %s916 = scalar_lea.vmem [#allocation0], 904
    %v917 = vld [vmem:[%s916] sm:$0xff]
    %918 = xla_tuple %v917
    %919 = xla_tuple %918
    %v920 = vxor.u32 %v917, 2147483648
    %921 = xla_tuple %v920
    %s922 = scalar_lea.vmem %s1, 904
    %923 = vst [vmem:[%s922] sm:$0xff] %v920
    %s924 = scalar_lea.vmem [#allocation0], 408
    %v925 = vld [vmem:[%s924] sm:$0xff]
    %926 = xla_tuple %v925
    %927 = xla_tuple %926
    %v928 = vxor.u32 %v925, 2147483648
    %929 = xla_tuple %v928
    %s930 = scalar_lea.vmem %s1, 408
    %931 = vst [vmem:[%s930] sm:$0xff] %v928
    %s932 = scalar_lea.vmem [#allocation0], 920
    %v933 = vld [vmem:[%s932] sm:$0xff]
    %934 = xla_tuple %v933
    %935 = xla_tuple %934
    %v936 = vxor.u32 %v933, 2147483648
    %937 = xla_tuple %v936
    %s938 = scalar_lea.vmem %s1, 920
    %939 = vst [vmem:[%s938] sm:$0xff] %v936
    %s940 = scalar_lea.vmem [#allocation0], 424
    %v941 = vld [vmem:[%s940] sm:$0xff]
    %942 = xla_tuple %v941
    %943 = xla_tuple %942
    %v944 = vxor.u32 %v941, 2147483648
    %945 = xla_tuple %v944
    %s946 = scalar_lea.vmem %s1, 424
    %947 = vst [vmem:[%s946] sm:$0xff] %v944
    %s948 = scalar_lea.vmem [#allocation0], 936
    %v949 = vld [vmem:[%s948] sm:$0xff]
    %950 = xla_tuple %v949
    %951 = xla_tuple %950
    %v952 = vxor.u32 %v949, 2147483648
    %953 = xla_tuple %v952
    %s954 = scalar_lea.vmem %s1, 936
    %955 = vst [vmem:[%s954] sm:$0xff] %v952
    %s956 = scalar_lea.vmem [#allocation0], 440
    %v957 = vld [vmem:[%s956] sm:$0xff]
    %958 = xla_tuple %v957
    %959 = xla_tuple %958
    %v960 = vxor.u32 %v957, 2147483648
    %961 = xla_tuple %v960
    %s962 = scalar_lea.vmem %s1, 440
    %963 = vst [vmem:[%s962] sm:$0xff] %v960
    %s964 = scalar_lea.vmem [#allocation0], 952
    %v965 = vld [vmem:[%s964] sm:$0xff]
    %966 = xla_tuple %v965
    %967 = xla_tuple %966
    %v968 = vxor.u32 %v965, 2147483648
    %969 = xla_tuple %v968
    %s970 = scalar_lea.vmem %s1, 952
    %971 = vst [vmem:[%s970] sm:$0xff] %v968
    %s972 = scalar_lea.vmem [#allocation0], 456
    %v973 = vld [vmem:[%s972] sm:$0xff]
    %974 = xla_tuple %v973
    %975 = xla_tuple %974
    %v976 = vxor.u32 %v973, 2147483648
    %977 = xla_tuple %v976
    %s978 = scalar_lea.vmem %s1, 456
    %979 = vst [vmem:[%s978] sm:$0xff] %v976
    %s980 = scalar_lea.vmem [#allocation0], 968
    %v981 = vld [vmem:[%s980] sm:$0xff]
    %982 = xla_tuple %v981
    %983 = xla_tuple %982
    %v984 = vxor.u32 %v981, 2147483648
    %985 = xla_tuple %v984
    %s986 = scalar_lea.vmem %s1, 968
    %987 = vst [vmem:[%s986] sm:$0xff] %v984
    %s988 = scalar_lea.vmem [#allocation0], 472
    %v989 = vld [vmem:[%s988] sm:$0xff]
    %990 = xla_tuple %v989
    %991 = xla_tuple %990
    %v992 = vxor.u32 %v989, 2147483648
    %993 = xla_tuple %v992
    %s994 = scalar_lea.vmem %s1, 472
    %995 = vst [vmem:[%s994] sm:$0xff] %v992
    %s996 = scalar_lea.vmem [#allocation0], 984
    %v997 = vld [vmem:[%s996] sm:$0xff]
    %998 = xla_tuple %v997
    %999 = xla_tuple %998
    %v1000 = vxor.u32 %v997, 2147483648
    %1001 = xla_tuple %v1000
    %s1002 = scalar_lea.vmem %s1, 984
    %1003 = vst [vmem:[%s1002] sm:$0xff] %v1000
    %s1004 = scalar_lea.vmem [#allocation0], 488
    %v1005 = vld [vmem:[%s1004] sm:$0xff]
    %1006 = xla_tuple %v1005
    %1007 = xla_tuple %1006
    %v1008 = vxor.u32 %v1005, 2147483648
    %1009 = xla_tuple %v1008
    %s1010 = scalar_lea.vmem %s1, 488
    %1011 = vst [vmem:[%s1010] sm:$0xff] %v1008
    %s1012 = scalar_lea.vmem [#allocation0], 1000
    %v1013 = vld [vmem:[%s1012] sm:$0xff]
    %1014 = xla_tuple %v1013
    %1015 = xla_tuple %1014
    %v1016 = vxor.u32 %v1013, 2147483648
    %1017 = xla_tuple %v1016
    %s1018 = scalar_lea.vmem %s1, 1000
    %1019 = vst [vmem:[%s1018] sm:$0xff] %v1016
    %s1020 = scalar_lea.vmem [#allocation0], 504
    %v1021 = vld [vmem:[%s1020] sm:$0xff]
    %1022 = xla_tuple %v1021
    %1023 = xla_tuple %1022
    %v1024 = vxor.u32 %v1021, 2147483648
    %1025 = xla_tuple %v1024
    %s1026 = scalar_lea.vmem %s1, 504
    %1027 = vst [vmem:[%s1026] sm:$0xff] %v1024
    %s1028 = scalar_lea.vmem [#allocation0], 1016
    %v1029 = vld [vmem:[%s1028] sm:$0xff]
    %1030 = xla_tuple %v1029
    %1031 = xla_tuple %1030
    %v1032 = vxor.u32 %v1029, 2147483648
    %1033 = xla_tuple %v1032
    %s1034 = scalar_lea.vmem %s1, 1016
    %1035 = vst [vmem:[%s1034] sm:$0xff] %v1032
    %1036 = vsyncpa [#allocation1], 1

// kernel: pgcn_forward.10
$region0: #{pgcn_forward.10}
  #allocation0 [shape = 'u32[]', space=smem, size = 0x4, offset = 0x4, fixed_abs, tag = 'smem constant byte address 0x4 - core index']
  #allocation1 [shape = 'u32[144,128]{1,0:T(1,128)}', space=vmem, size = 0x12000, scoped, tag = 'internal scratch']
  %s0 = inlined_call_operand.hbm [shape: f32[2,256,128], index: 0, kind: input, shape index: {}, may-alias: {0,1}]
  %s1 = inlined_call_operand.hbm [shape: f32[2,256,128], index: 1, kind: input, shape index: {}, may-alias: {0,1}]
  %s2 = inlined_call_operand.hbm [shape: f32[2,256,256], index: 2, kind: output, shape index: {}]
  %s3 = sld [smem:[#allocation0]]
  $region49: #{pgcn_forward.10} parent=0
    _
  %s5 = ssub.s32 1, %s3
  %s6 = scalar_select 0, %s5, %s3
  $region1: #{pgcn_forward.10} parent=0
    #allocation2 [shape = 'u8[131072]{0}', space=vmem, size = 0x20000, scoped, tag = 'input window, operand 0']
    #allocation3 [shape = 's32[2]{0}', space=sflag, size = 0x8, scoped, tag = 'scoped memory for pgcn_forward.10']
    #allocation4 [shape = 's32[2]{0}', space=sflag, size = 0x8, scoped, tag = 'scoped memory for pgcn_forward.10']
    #allocation5 [shape = 'u8[131072]{0}', space=vmem, size = 0x20000, scoped, tag = 'input window, operand 1']
    #allocation6 [shape = 's32[2]{0}', space=sflag, size = 0x8, scoped, tag = 'scoped memory for pgcn_forward.10']
    #allocation7 [shape = 'u8[131072]{0}', space=vmem, size = 0x20000, scoped, tag = 'output window, operand 0']
    %7 = vsyncpa [#allocation3], 0
    %s8 = scalar_lea.sflag [#allocation3], 1
    %9 = vsyncpa %s8, 0
    %10 = vsyncpa [#allocation6], 0
    %s11 = scalar_lea.sflag [#allocation6], 1
    %12 = vsyncpa %s11, 0
    %13 = vsyncpa [#allocation4], 0
    %s14 = scalar_lea.sflag [#allocation4], 1
    %15 = vsyncpa %s14, 0
    loop: start=0, step=1, limit=10
    $region2: #{pgcn_forward.10} parent=1 // loop_pre_header
      _
    $region3: #{pgcn_forward.10} parent=1 // loop_header
      %s17 = sphi 0, %s21
      %p18 = scmp.ge.s32.totalorder %s17, 10
      %s24 = sphi 0, %s43
      %s25 = sphi 0, %s39
      %s26 = sphi 0, %s35
      %s27 = sphi 0, %s24
      %s28 = sphi 0, %s25
      %s29 = sphi 0, %s26
      %s30 = sphi 0, %s27
      %s31 = sphi 0, %s28
      %s32 = sphi 0, %s29
      %s48 = sphi 0, %s50
      %s51 = sphi 0, %s48
      %s52 = sphi 0, %s51
      %s68 = sphi 0, %s52
      %s76 = sphi 0, %s78
      %s79 = sphi 0, %s76
      %s80 = sphi 0, %s79
      %s96 = sphi 0, %s80
      %s106 = sphi 0, %s108
      %s109 = sphi 0, %s106
      %s110 = sphi 0, %s109
      %s126 = sphi 0, %s110
    $region4: #{pgcn_forward.10} parent=1 // loop_header_branch
      %20 = sbr.rel (%p18) target = $region8
    $region5: #{pgcn_forward.10} parent=1 // loop_body
      %s22 = ssub.s32 %s17, 1
      %s23 = ssub.s32 %s17, 2
      %s33 = sadd.s32 1, %s26
      %p34 = scmp.ge.s32.totalorder %s33, 2
      %s35 = scalar_select %p34, 0, %s33
      %s36 = sadd.s32 1, %s25
      %s37 = scalar_select %p34, %s36, %s25
      %p38 = scmp.ge.s32.totalorder %s37, 2
      %s39 = scalar_select %p38, 0, %s37
      %s40 = sadd.s32 1, %s24
      %s41 = scalar_select %p38, %s40, %s24
      %p42 = scmp.ge.s32.totalorder %s41, 2
      %s43 = scalar_select %p42, 0, %s41
      %s44 = ssub.s32 %s24, %s43
      %s45 = ssub.s32 %s25, %s39
      %s46 = sor.u32 %s44, %s45
      %p47 = scmp.eq.s32.totalorder %s46, 0
      %s49 = sadd.s32 %s48, 1
      %s50 = scalar_select %p47, %s48, %s49
      %p53 = pneg %p47
      %p54 = scmp.eq.s32.totalorder %s17, 7
      %p55 = por %p53, %p54
      %p56 = scmp.ne.s32.totalorder %s48, %s51
      %p57 = scmp.eq.s32.totalorder %s17, 0
      %p58 = por %p56, %p57
      %p59 = scmp.ne.s32.totalorder %s48, %s51
      %p60 = scmp.eq.s32.totalorder %s22, 7
      %p61 = por %p59, %p60
      %p62 = scmp.ne.s32.totalorder %s51, %s52
      %p63 = scmp.eq.s32.totalorder %s22, 0
      %p64 = por %p62, %p63
      %p65 = scmp.ne.s32.totalorder %s51, %s52
      %p66 = scmp.eq.s32.totalorder %s23, 7
      %p67 = por %p65, %p66
      %p69 = scmp.ne.s32.totalorder %s52, %s68
      %p70 = scmp.eq.s32.totalorder %s23, 0
      %p71 = por %p69, %p70
      %s72 = ssub.s32 %s24, %s43
      %s73 = ssub.s32 %s26, %s35
      %s74 = sor.u32 %s72, %s73
      %p75 = scmp.eq.s32.totalorder %s74, 0
      %s77 = sadd.s32 %s76, 1
      %s78 = scalar_select %p75, %s76, %s77
      %p81 = pneg %p75
      %p82 = scmp.eq.s32.totalorder %s17, 7
      %p83 = por %p81, %p82
      %p84 = scmp.ne.s32.totalorder %s76, %s79
      %p85 = scmp.eq.s32.totalorder %s17, 0
      %p86 = por %p84, %p85
      %p87 = scmp.ne.s32.totalorder %s76, %s79
      %p88 = scmp.eq.s32.totalorder %s22, 7
      %p89 = por %p87, %p88
      %p90 = scmp.ne.s32.totalorder %s79, %s80
      %p91 = scmp.eq.s32.totalorder %s22, 0
      %p92 = por %p90, %p91
      %p93 = scmp.ne.s32.totalorder %s79, %s80
      %p94 = scmp.eq.s32.totalorder %s23, 7
      %p95 = por %p93, %p94
      %p97 = scmp.ne.s32.totalorder %s80, %s96
      %p98 = scmp.eq.s32.totalorder %s23, 0
      %p99 = por %p97, %p98
      %s100 = ssub.s32 %s24, %s43
      %s101 = ssub.s32 %s25, %s39
      %s102 = sor.u32 %s100, %s101
      %s103 = ssub.s32 %s26, %s35
      %s104 = sor.u32 %s102, %s103
      %p105 = scmp.eq.s32.totalorder %s104, 0
      %s107 = sadd.s32 %s106, 1
      %s108 = scalar_select %p105, %s106, %s107
      %p111 = pneg %p105
      %p112 = scmp.eq.s32.totalorder %s17, 7
      %p113 = por %p111, %p112
      %p114 = scmp.ne.s32.totalorder %s106, %s109
      %p115 = scmp.eq.s32.totalorder %s17, 0
      %p116 = por %p114, %p115
      %p117 = scmp.ne.s32.totalorder %s106, %s109
      %p118 = scmp.eq.s32.totalorder %s22, 7
      %p119 = por %p117, %p118
      %p120 = scmp.ne.s32.totalorder %s109, %s110
      %p121 = scmp.eq.s32.totalorder %s22, 0
      %p122 = por %p120, %p121
      %p123 = scmp.ne.s32.totalorder %s109, %s110
      %p124 = scmp.eq.s32.totalorder %s23, 7
      %p125 = por %p123, %p124
      %p127 = scmp.ne.s32.totalorder %s110, %s126
      %p128 = scmp.eq.s32.totalorder %s23, 0
      %p129 = por %p127, %p128
      %p130 = scmp.le.s32.totalorder 1, %s17
      %p131 = scmp.lt.s32.totalorder %s17, 9
      %p132 = pnand %p130, %p131
      %p133 = pneg %p132
      // Predicated region
      $region9: #{pgcn_forward.10} parent=5 // pred_check
        _
      $region10: #{pgcn_forward.10} parent=5 // pred_check_branch
        %135 = sbr.rel (%p132) target = $region12
      $region11: #{pgcn_forward.10} parent=5 // pred_region
        %s136 = ssub.s32 %s17, 1
      $region12: #{pgcn_forward.10} parent=5 // pred_fallthru
        _
      %p137 = scmp.lt.s32.totalorder %s17, 8
      // Predicated region
      $region13: #{pgcn_forward.10} parent=5 // pred_check
        %p138 = pneg %p137
      $region14: #{pgcn_forward.10} parent=5 // pred_check_branch
        %140 = sbr.rel (%p138) target = $region16
      $region15: #{pgcn_forward.10} parent=5 // pred_region
        // Predicated region
        $region17: #{pgcn_forward.10} parent=15 // pred_check
          %p141 = pneg %p58
        $region18: #{pgcn_forward.10} parent=15 // pred_check_branch
          %143 = sbr.rel (%p141) target = $region20
        $region19: #{pgcn_forward.10} parent=15 // pred_region
          %s144 = sand.u32 %s48, 1
          %s145 = scalar_lea.sflag [#allocation3], %s144
          %s146 = sand.u32 %s48, 1
          %s147 = smul.addr %s146, 128
          %s148 = scalar_lea.vmem [#allocation2], %s147
          %s149 = smul.u32 16, %s25
          %s151 = ssub.s32 2048, 2048
          %152 = vsyncadd %s145, %s151
          %s153 = smul.addr %s24, 32
          %s154 = sadd.s32 %s149, %s153
          %s155 = smul.addr %s154, 128
          %s156 = scalar_lea.hbm %s0, %s155
          %s157 = sshll.u32 %s148, 4
          %s158 = int_to_ptr.vmem [resolvable:$true] %s157
          %163 = dma.hbm_to_vmem [thread:$0]  %s156, 2048, %s158, %s145, 128, 128, 8
        $region20: #{pgcn_forward.10} parent=15 // pred_fallthru
          _
        // Predicated region
        $region21: #{pgcn_forward.10} parent=15 // pred_check
          %p164 = pneg %p86
        $region22: #{pgcn_forward.10} parent=15 // pred_check_branch
          %166 = sbr.rel (%p164) target = $region24
        $region23: #{pgcn_forward.10} parent=15 // pred_region
          %s167 = sand.u32 %s76, 1
          %s168 = scalar_lea.sflag [#allocation6], %s167
          %s169 = sand.u32 %s76, 1
          %s170 = smul.addr %s169, 128
          %s171 = scalar_lea.vmem [#allocation5], %s170
          %s172 = smul.u32 16, %s26
          %s174 = ssub.s32 2048, 2048
          %175 = vsyncadd %s168, %s174
          %s176 = smul.addr %s24, 32
          %s177 = sadd.s32 %s172, %s176
          %s178 = smul.addr %s177, 128
          %s179 = scalar_lea.hbm %s1, %s178
          %s180 = sshll.u32 %s171, 4
          %s181 = int_to_ptr.vmem [resolvable:$true] %s180
          %186 = dma.hbm_to_vmem [thread:$0]  %s179, 2048, %s181, %s168, 128, 128, 8
        $region24: #{pgcn_forward.10} parent=15 // pred_fallthru
          _
      $region16: #{pgcn_forward.10} parent=5 // pred_fallthru
        _
      %p187 = scmp.le.s32.totalorder 1, %s17
      %p188 = scmp.lt.s32.totalorder %s17, 9
      %p189 = pnand %p187, %p188
      %p190 = pneg %p189
      // Predicated region
      $region25: #{pgcn_forward.10} parent=5 // pred_check
        _
      $region26: #{pgcn_forward.10} parent=5 // pred_check_branch
        %192 = sbr.rel (%p189) target = $region28
      $region27: #{pgcn_forward.10} parent=5 // pred_region
        %s193 = ssub.s32 %s17, 1
        %s194 = sand.u32 %s51, 1
        %s195 = scalar_lea.sflag [#allocation3], %s194
        %s196 = sand.u32 %s51, 1
        %s197 = smul.addr %s196, 128
        %s198 = scalar_lea.vmem [#allocation2], %s197
        // Predicated region
        $region29: #{pgcn_forward.10} parent=27 // pred_check
          %p199 = pneg %p64
        $region30: #{pgcn_forward.10} parent=27 // pred_check_branch
          %201 = sbr.rel (%p199) target = $region32
        $region31: #{pgcn_forward.10} parent=27 // pred_region
          %202 = dma.done %s195, 2048
        $region32: #{pgcn_forward.10} parent=27 // pred_fallthru
          _
        %s203 = sand.u32 %s79, 1
        %s204 = scalar_lea.sflag [#allocation6], %s203
        %s205 = sand.u32 %s79, 1
        %s206 = smul.addr %s205, 128
        %s207 = scalar_lea.vmem [#allocation5], %s206
        // Predicated region
        $region33: #{pgcn_forward.10} parent=27 // pred_check
          %p208 = pneg %p92
        $region34: #{pgcn_forward.10} parent=27 // pred_check_branch
          %210 = sbr.rel (%p208) target = $region36
        $region35: #{pgcn_forward.10} parent=27 // pred_region
          %211 = dma.done %s204, 2048
        $region36: #{pgcn_forward.10} parent=27 // pred_fallthru
          _
        %s212 = sand.u32 %s51, 1
        %s213 = scalar_lea.sflag [#allocation3], %s212
        %s214 = sand.u32 %s51, 1
        %s215 = smul.addr %s214, 128
        %s216 = scalar_lea.vmem [#allocation2], %s215
        %p217 = pneg %p64
        %p218 = pneg %p61
        %s219 = sand.u32 %s79, 1
        %s220 = scalar_lea.sflag [#allocation6], %s219
        %s221 = sand.u32 %s79, 1
        %s222 = smul.addr %s221, 128
        %s223 = scalar_lea.vmem [#allocation5], %s222
        %p224 = pneg %p92
        %p225 = pneg %p89
        %p226 = pneg %p122
        %p227 = pneg %p119
        %s228 = sand.u32 %s109, 1
        %s229 = scalar_lea.sflag [#allocation4], %s228
        %s230 = sand.u32 %s109, 1
        %s231 = smul.addr %s230, 128
        %s232 = scalar_lea.vmem [#allocation7], %s231
        %s233 = smul.u32 16, %s28
        %s234 = smul.u32 16, %s29
        %s235 = smul.u32 16, %s28
        %v236 = vld [vmem:[%s198] sm:$0xff]
        %v237 = vld [vmem:[%s198 + $0x8] sm:$0xff]
        %v238 = vld [vmem:[%s198 + $0x10] sm:$0xff]
        %v239 = vld [vmem:[%s198 + $0x18] sm:$0xff]
        %v240 = vld [vmem:[%s198 + $0x20] sm:$0xff]
        %v241 = vld [vmem:[%s198 + $0x28] sm:$0xff]
        %v242 = vld [vmem:[%s198 + $0x30] sm:$0xff]
        %v243 = vld [vmem:[%s198 + $0x38] sm:$0xff]
        %v244 = vld [vmem:[%s198 + $0x40] sm:$0xff]
        %v245 = vld [vmem:[%s198 + $0x48] sm:$0xff]
        %v246 = vld [vmem:[%s198 + $0x50] sm:$0xff]
        %v247 = vld [vmem:[%s198 + $0x58] sm:$0xff]
        %v248 = vld [vmem:[%s198 + $0x60] sm:$0xff]
        %v249 = vld [vmem:[%s198 + $0x68] sm:$0xff]
        %v250 = vld [vmem:[%s198 + $0x70] sm:$0xff]
        %v251 = vld [vmem:[%s198 + $0x78] sm:$0xff]
        %v252 = vld [vmem:[%s207] sm:$0xff]
        %v253 = vld [vmem:[%s207 + $0x8] sm:$0xff]
        %v254 = vld [vmem:[%s207 + $0x10] sm:$0xff]
        %v255 = vld [vmem:[%s207 + $0x18] sm:$0xff]
        %v256 = vld [vmem:[%s207 + $0x20] sm:$0xff]
        %v257 = vld [vmem:[%s207 + $0x28] sm:$0xff]
        %v258 = vld [vmem:[%s207 + $0x30] sm:$0xff]
        %v259 = vld [vmem:[%s207 + $0x38] sm:$0xff]
        %v260 = vld [vmem:[%s207 + $0x40] sm:$0xff]
        %v261 = vld [vmem:[%s207 + $0x48] sm:$0xff]
        %v262 = vld [vmem:[%s207 + $0x50] sm:$0xff]
        %v263 = vld [vmem:[%s207 + $0x58] sm:$0xff]
        %v264 = vld [vmem:[%s207 + $0x60] sm:$0xff]
        %v265 = vld [vmem:[%s207 + $0x68] sm:$0xff]
        %v266 = vld [vmem:[%s207 + $0x70] sm:$0xff]
        %v267 = vld [vmem:[%s207 + $0x78] sm:$0xff]
        %268 = vmatprep.subr.mxu0 0.0
        %269 = vmatpush1.xpose.msra.mxu0 %v252
        %270 = vmatprep.subr.mxu0 0.0
        %271 = vmatpush1.xpose.msra.mxu0 %v253
        %272 = vmatprep.subr.mxu0 0.0
        %273 = vmatpush1.xpose.msra.mxu0 %v254
        %274 = vmatprep.subr.mxu0 0.0
        %275 = vmatpush1.xpose.msra.mxu0 %v255
        %276 = vmatprep.subr.mxu0 0.0
        %277 = vmatpush1.xpose.msra.mxu0 %v256
        %278 = vmatprep.subr.mxu0 0.0
        %279 = vmatpush1.xpose.msra.mxu0 %v257
        %280 = vmatprep.subr.mxu0 0.0
        %281 = vmatpush1.xpose.msra.mxu0 %v258
        %282 = vmatprep.subr.mxu0 0.0
        %283 = vmatpush1.xpose.msra.mxu0 %v259
        %284 = vmatprep.subr.mxu0 0.0
        %285 = vmatpush1.xpose.msra.mxu0 %v260
        %286 = vmatprep.subr.mxu0 0.0
        %287 = vmatpush1.xpose.msra.mxu0 %v261
        %288 = vmatprep.subr.mxu0 0.0
        %289 = vmatpush1.xpose.msra.mxu0 %v262
        %290 = vmatprep.subr.mxu0 0.0
        %291 = vmatpush1.xpose.msra.mxu0 %v263
        %292 = vmatprep.subr.mxu0 0.0
        %293 = vmatpush1.xpose.msra.mxu0 %v264
        %294 = vmatprep.subr.mxu0 0.0
        %295 = vmatpush1.xpose.msra.mxu0 %v265
        %296 = vmatprep.subr.mxu0 0.0
        %297 = vmatpush1.xpose.msra.mxu0 %v266
        %298 = vmatprep.subr.mxu0 0.0
        %299 = vmatpush1.xpose.msra.mxu0 %v267
        %300 = vmatprep.subr.mxu0 0.0
        %301 = vmatpush1.xpose.msra.mxu0 0.0
        %302 = vmatprep.subr.mxu0 0.0
        %303 = vmatpush1.xpose.msra.mxu0 0.0
        %304 = vmatprep.subr.mxu0 0.0
        %305 = vmatpush1.xpose.msra.mxu0 0.0
        %306 = vmatprep.subr.mxu0 0.0
        %307 = vmatpush1.xpose.msra.mxu0 0.0
        %308 = vmatprep.subr.mxu0 0.0
        %309 = vmatpush1.xpose.msra.mxu0 0.0
        %310 = vmatprep.subr.mxu0 0.0
        %311 = vmatpush1.xpose.msra.mxu0 0.0
        %312 = vmatprep.subr.mxu0 0.0
        %313 = vmatpush1.xpose.msra.mxu0 0.0
        %314 = vmatprep.subr.mxu0 0.0
        %315 = vmatpush1.xpose.msra.mxu0 0.0
        %316 = vmatprep.subr.mxu0 0.0
        %317 = vmatpush1.xpose.msra.mxu0 0.0
        %318 = vmatprep.subr.mxu0 0.0
        %319 = vmatpush1.xpose.msra.mxu0 0.0
        %320 = vmatprep.subr.mxu0 0.0
        %321 = vmatpush1.xpose.msra.mxu0 0.0
        %322 = vmatprep.subr.mxu0 0.0
        %323 = vmatpush1.xpose.msra.mxu0 0.0
        %324 = vmatprep.subr.mxu0 0.0
        %325 = vmatpush1.xpose.msra.mxu0 0.0
        %326 = vmatprep.subr.mxu0 0.0
        %327 = vmatpush1.xpose.msra.mxu0 0.0
        %328 = vmatprep.subr.mxu0 0.0
        %329 = vmatpush1.xpose.msra.mxu0 0.0
        %330 = vmatprep.subr.mxu0 0.0
        %331 = vmatpush1.xpose.msra.mxu0 0.0
        %332 = vmatprep.mubr.f32.mxu0 0.0
        %333 = vmatmul.mubr.f32.gmra.mrb[0].mxu0 %v236
        %v334 = vpop.f32.mrb[0].mxu0
        %v335 = vadd.f32 0.0, %v334
        %v336 = vpop.f32.mrb[0].mxu0
        %337 = vmatprep.mubr.f32.mxu0 0.0
        %338 = vmatmul.mubr.f32.gmra.mrb[0].mxu0 %v237
        %v339 = vpop.f32.mrb[0].mxu0
        %v340 = vadd.f32 0.0, %v339
        %v341 = vpop.f32.mrb[0].mxu0
        %342 = vmatprep.mubr.f32.mxu0 0.0
        %343 = vmatmul.mubr.f32.gmra.mrb[0].mxu0 %v238
        %v344 = vpop.f32.mrb[0].mxu0
        %v345 = vadd.f32 0.0, %v344
        %v346 = vpop.f32.mrb[0].mxu0
        %347 = vmatprep.mubr.f32.mxu0 0.0
        %348 = vmatmul.mubr.f32.gmra.mrb[0].mxu0 %v239
        %v349 = vpop.f32.mrb[0].mxu0
        %v350 = vadd.f32 0.0, %v349
        %v351 = vpop.f32.mrb[0].mxu0
        %352 = vmatprep.mubr.f32.mxu0 0.0
        %353 = vmatmul.mubr.f32.gmra.mrb[0].mxu0 %v240
        %v354 = vpop.f32.mrb[0].mxu0
        %v355 = vadd.f32 0.0, %v354
        %v356 = vpop.f32.mrb[0].mxu0
        %357 = vmatprep.mubr.f32.mxu0 0.0
        %358 = vmatmul.mubr.f32.gmra.mrb[0].mxu0 %v241
        %v359 = vpop.f32.mrb[0].mxu0
        %v360 = vadd.f32 0.0, %v359
        %v361 = vpop.f32.mrb[0].mxu0
        %362 = vmatprep.mubr.f32.mxu0 0.0
        %363 = vmatmul.mubr.f32.gmra.mrb[0].mxu0 %v242
        %v364 = vpop.f32.mrb[0].mxu0
        %v365 = vadd.f32 0.0, %v364
        %v366 = vpop.f32.mrb[0].mxu0
        %367 = vmatprep.mubr.f32.mxu0 0.0
        %368 = vmatmul.mubr.f32.gmra.mrb[0].mxu0 %v243
        %v369 = vpop.f32.mrb[0].mxu0
        %v370 = vadd.f32 0.0, %v369
        %v371 = vpop.f32.mrb[0].mxu0
        %372 = vmatprep.mubr.f32.mxu0 0.0
        %373 = vmatmul.mubr.f32.gmra.mrb[0].mxu0 %v244
        %v374 = vpop.f32.mrb[0].mxu0
        %v375 = vadd.f32 0.0, %v374
        %v376 = vpop.f32.mrb[0].mxu0
        %377 = vmatprep.mubr.f32.mxu0 0.0
        %378 = vmatmul.mubr.f32.gmra.mrb[0].mxu0 %v245
        %v379 = vpop.f32.mrb[0].mxu0
        %v380 = vadd.f32 0.0, %v379
        %v381 = vpop.f32.mrb[0].mxu0
        %382 = vmatprep.mubr.f32.mxu0 0.0
        %383 = vmatmul.mubr.f32.gmra.mrb[0].mxu0 %v246
        %v384 = vpop.f32.mrb[0].mxu0
        %v385 = vadd.f32 0.0, %v384
        %v386 = vpop.f32.mrb[0].mxu0
        %387 = vmatprep.mubr.f32.mxu0 0.0
        %388 = vmatmul.mubr.f32.gmra.mrb[0].mxu0 %v247
        %v389 = vpop.f32.mrb[0].mxu0
        %v390 = vadd.f32 0.0, %v389
        %v391 = vpop.f32.mrb[0].mxu0
        %392 = vmatprep.mubr.f32.mxu0 0.0
        %393 = vmatmul.mubr.f32.gmra.mrb[0].mxu0 %v248
        %v394 = vpop.f32.mrb[0].mxu0
        %v395 = vadd.f32 0.0, %v394
        %v396 = vpop.f32.mrb[0].mxu0
        %397 = vmatprep.mubr.f32.mxu0 0.0
        %398 = vmatmul.mubr.f32.gmra.mrb[0].mxu0 %v249
        %v399 = vpop.f32.mrb[0].mxu0
        %v400 = vadd.f32 0.0, %v399
        %v401 = vpop.f32.mrb[0].mxu0
        %402 = vmatprep.mubr.f32.mxu0 0.0
        %403 = vmatmul.mubr.f32.gmra.mrb[0].mxu0 %v250
        %v404 = vpop.f32.mrb[0].mxu0
        %v405 = vadd.f32 0.0, %v404
        %v406 = vpop.f32.mrb[0].mxu0
        %407 = vmatprep.mubr.f32.mxu0 0.0
        %408 = vmatmul.mubr.f32.gmra.mrb[0].mxu0 %v251
        %v409 = vpop.f32.mrb[0].mxu0
        %v410 = vadd.f32 0.0, %v409
        %v411 = vpop.f32.mrb[0].mxu0
        %412 = vdwg.mxu0
        %413 = vst [vmem:[%s232] sm:$0xff] %v335
        %414 = vst [vmem:[%s232 + $0x8] sm:$0xff] %v340
        %415 = vst [vmem:[%s232 + $0x10] sm:$0xff] %v345
        %416 = vst [vmem:[%s232 + $0x18] sm:$0xff] %v350
        %417 = vst [vmem:[%s232 + $0x20] sm:$0xff] %v355
        %418 = vst [vmem:[%s232 + $0x28] sm:$0xff] %v360
        %419 = vst [vmem:[%s232 + $0x30] sm:$0xff] %v365
        %420 = vst [vmem:[%s232 + $0x38] sm:$0xff] %v370
        %421 = vst [vmem:[%s232 + $0x40] sm:$0xff] %v375
        %422 = vst [vmem:[%s232 + $0x48] sm:$0xff] %v380
        %423 = vst [vmem:[%s232 + $0x50] sm:$0xff] %v385
        %424 = vst [vmem:[%s232 + $0x58] sm:$0xff] %v390
        %425 = vst [vmem:[%s232 + $0x60] sm:$0xff] %v395
        %426 = vst [vmem:[%s232 + $0x68] sm:$0xff] %v400
        %427 = vst [vmem:[%s232 + $0x70] sm:$0xff] %v405
        %428 = vst [vmem:[%s232 + $0x78] sm:$0xff] %v410
        %s429 = sand.u32 %s109, 1
        %s430 = scalar_lea.sflag [#allocation4], %s429
        %s431 = sand.u32 %s109, 1
        %s432 = smul.addr %s431, 128
        %s433 = scalar_lea.vmem [#allocation7], %s432
        // Predicated region
        $region37: #{pgcn_forward.10} parent=27 // pred_check
          %p434 = pneg %p119
        $region38: #{pgcn_forward.10} parent=27 // pred_check_branch
          %436 = sbr.rel (%p434) target = $region40
        $region39: #{pgcn_forward.10} parent=27 // pred_region
          %s437 = smul.u32 16, %s28
          %s439 = ssub.s32 2048, 2048
          %440 = vsyncadd %s430, %s439
          %s441 = smul.addr %s437, 2
          %s442 = sadd.s32 %s29, %s441
          %s443 = smul.addr %s27, 64
          %s444 = sadd.s32 %s442, %s443
          %s445 = smul.addr %s444, 128
          %s446 = scalar_lea.hbm %s2, %s445
          %s447 = sshll.u32 %s433, 4
          %s448 = int_to_ptr.vmem [resolvable:$true] %s447
          %453 = dma.vmem_to_hbm [thread:$0]  %s448, 2048, %s446, %s430, 128, 256, 8
        $region40: #{pgcn_forward.10} parent=27 // pred_fallthru
          _
      $region28: #{pgcn_forward.10} parent=5 // pred_fallthru
        _
      %p454 = scmp.le.s32.totalorder 2, %s17
      // Predicated region
      $region41: #{pgcn_forward.10} parent=5 // pred_check
        %p455 = pneg %p454
      $region42: #{pgcn_forward.10} parent=5 // pred_check_branch
        %457 = sbr.rel (%p455) target = $region44
      $region43: #{pgcn_forward.10} parent=5 // pred_region
        %s458 = ssub.s32 %s17, 2
        // Predicated region
        $region45: #{pgcn_forward.10} parent=43 // pred_check
          %p459 = pneg %p125
        $region46: #{pgcn_forward.10} parent=43 // pred_check_branch
          %461 = sbr.rel (%p459) target = $region48
        $region47: #{pgcn_forward.10} parent=43 // pred_region
          %s462 = sand.u32 %s110, 1
          %s463 = scalar_lea.sflag [#allocation4], %s462
          %s464 = sand.u32 %s110, 1
          %s465 = smul.addr %s464, 128
          %s466 = scalar_lea.vmem [#allocation7], %s465
          %467 = dma.done %s463, 2048
        $region48: #{pgcn_forward.10} parent=43 // pred_fallthru
          _
      $region44: #{pgcn_forward.10} parent=5 // pred_fallthru
        _
    $region6: #{pgcn_forward.10} parent=1 // loop_footer
      %s21 = sadd.s32 1, %s17
    $region7: #{pgcn_forward.10} parent=1 // loop_footer_branch
      %16 = sbr.rel target = $region3
    $region8: #{pgcn_forward.10} parent=1 // loop_exit
      _
    %468 = vsyncpa [#allocation3], 1
    %s469 = scalar_lea.sflag [#allocation3], 1
    %470 = vsyncpa %s469, 1
    %471 = vsyncpa [#allocation6], 1
    %s472 = scalar_lea.sflag [#allocation6], 1
    %473 = vsyncpa %s472, 1
    %474 = vsyncpa [#allocation4], 1
    %s475 = scalar_lea.sflag [#allocation4], 1
    %476 = vsyncpa %s475, 1

// kernel: pgcn_forward.9
$region0: #{pgcn_forward.9}
  #allocation0 [shape = 'u32[]', space=smem, size = 0x4, offset = 0x4, fixed_abs, tag = 'smem constant byte address 0x4 - core index']
  #allocation1 [shape = 'u32[144,128]{1,0:T(1,128)}', space=vmem, size = 0x12000, scoped, tag = 'internal scratch']
  %s0 = inlined_call_operand.vmem [shape: f32[2,256,128], index: 0, kind: input, shape index: {}]
  %s1 = inlined_call_operand.hbm [shape: f32[2,256,128], index: 1, kind: output, shape index: {}]
  %s2 = sld [smem:[#allocation0]]
  $region37: #{pgcn_forward.9} parent=0
    _
  %s4 = ssub.s32 1, %s2
  %s5 = scalar_select 0, %s4, %s2
  $region1: #{pgcn_forward.9} parent=0
    #allocation2 [shape = 'u8[131072]{0}', space=vmem, size = 0x20000, scoped, tag = 'output window, operand 0']
    #allocation3 [shape = 's32[2]{0}', space=sflag, size = 0x8, scoped, tag = 'scoped memory for pgcn_forward.9']
    %6 = vsyncpa [#allocation3], 0
    %s7 = scalar_lea.sflag [#allocation3], 1
    %8 = vsyncpa %s7, 0
    loop: start=0, step=1, limit=6
    $region2: #{pgcn_forward.9} parent=1 // loop_pre_header
      _
    $region3: #{pgcn_forward.9} parent=1 // loop_header
      %s10 = sphi 0, %s14
      %p11 = scmp.ge.s32.totalorder %s10, 6
      %s17 = sphi 0, %s29
      %s18 = sphi 0, %s25
      %s19 = sphi 0, %s17
      %s20 = sphi 0, %s18
      %s21 = sphi 0, %s19
      %s22 = sphi 0, %s20
      %s34 = sphi 0, %s36
      %s37 = sphi 0, %s34
      %s38 = sphi 0, %s37
      %s54 = sphi 0, %s38
      %s62 = sphi 0, %s64
      %s65 = sphi 0, %s62
      %s66 = sphi 0, %s65
      %s82 = sphi 0, %s66
    $region4: #{pgcn_forward.9} parent=1 // loop_header_branch
      %13 = sbr.rel (%p11) target = $region8
    $region5: #{pgcn_forward.9} parent=1 // loop_body
      %s15 = ssub.s32 %s10, 1
      %s16 = ssub.s32 %s10, 2
      %s23 = sadd.s32 1, %s18
      %p24 = scmp.ge.s32.totalorder %s23, 2
      %s25 = scalar_select %p24, 0, %s23
      %s26 = sadd.s32 1, %s17
      %s27 = scalar_select %p24, %s26, %s17
      %p28 = scmp.ge.s32.totalorder %s27, 2
      %s29 = scalar_select %p28, 0, %s27
      %s30 = ssub.s32 %s17, %s29
      %s31 = ssub.s32 %s18, %s25
      %s32 = sor.u32 %s30, %s31
      %p33 = scmp.eq.s32.totalorder %s32, 0
      %s35 = sadd.s32 %s34, 1
      %s36 = scalar_select %p33, %s34, %s35
      %p39 = pneg %p33
      %p40 = scmp.eq.s32.totalorder %s10, 3
      %p41 = por %p39, %p40
      %p42 = scmp.ne.s32.totalorder %s34, %s37
      %p43 = scmp.eq.s32.totalorder %s10, 0
      %p44 = por %p42, %p43
      %p45 = scmp.ne.s32.totalorder %s34, %s37
      %p46 = scmp.eq.s32.totalorder %s15, 3
      %p47 = por %p45, %p46
      %p48 = scmp.ne.s32.totalorder %s37, %s38
      %p49 = scmp.eq.s32.totalorder %s15, 0
      %p50 = por %p48, %p49
      %p51 = scmp.ne.s32.totalorder %s37, %s38
      %p52 = scmp.eq.s32.totalorder %s16, 3
      %p53 = por %p51, %p52
      %p55 = scmp.ne.s32.totalorder %s38, %s54
      %p56 = scmp.eq.s32.totalorder %s16, 0
      %p57 = por %p55, %p56
      %s58 = ssub.s32 %s17, %s29
      %s59 = ssub.s32 %s18, %s25
      %s60 = sor.u32 %s58, %s59
      %p61 = scmp.eq.s32.totalorder %s60, 0
      %s63 = sadd.s32 %s62, 1
      %s64 = scalar_select %p61, %s62, %s63
      %p67 = pneg %p61
      %p68 = scmp.eq.s32.totalorder %s10, 3
      %p69 = por %p67, %p68
      %p70 = scmp.ne.s32.totalorder %s62, %s65
      %p71 = scmp.eq.s32.totalorder %s10, 0
      %p72 = por %p70, %p71
      %p73 = scmp.ne.s32.totalorder %s62, %s65
      %p74 = scmp.eq.s32.totalorder %s15, 3
      %p75 = por %p73, %p74
      %p76 = scmp.ne.s32.totalorder %s65, %s66
      %p77 = scmp.eq.s32.totalorder %s15, 0
      %p78 = por %p76, %p77
      %p79 = scmp.ne.s32.totalorder %s65, %s66
      %p80 = scmp.eq.s32.totalorder %s16, 3
      %p81 = por %p79, %p80
      %p83 = scmp.ne.s32.totalorder %s66, %s82
      %p84 = scmp.eq.s32.totalorder %s16, 0
      %p85 = por %p83, %p84
      %p86 = scmp.le.s32.totalorder 1, %s10
      %p87 = scmp.lt.s32.totalorder %s10, 5
      %p88 = pnand %p86, %p87
      %p89 = pneg %p88
      // Predicated region
      $region9: #{pgcn_forward.9} parent=5 // pred_check
        _
      $region10: #{pgcn_forward.9} parent=5 // pred_check_branch
        %91 = sbr.rel (%p88) target = $region12
      $region11: #{pgcn_forward.9} parent=5 // pred_region
        %s92 = ssub.s32 %s10, 1
      $region12: #{pgcn_forward.9} parent=5 // pred_fallthru
        _
      %p93 = scmp.lt.s32.totalorder %s10, 4
      // Predicated region
      $region13: #{pgcn_forward.9} parent=5 // pred_check
        %p94 = pneg %p93
      $region14: #{pgcn_forward.9} parent=5 // pred_check_branch
        %96 = sbr.rel (%p94) target = $region16
      $region15: #{pgcn_forward.9} parent=5 // pred_region
        // Predicated region
        $region17: #{pgcn_forward.9} parent=15 // pred_check
          %p97 = pneg %p44
        $region18: #{pgcn_forward.9} parent=15 // pred_check_branch
          %99 = sbr.rel (%p97) target = $region20
        $region19: #{pgcn_forward.9} parent=15 // pred_region
          %s100 = smul.u32 16, %s18
          %p101 = scmp.lt.s32.totalorder %s17, 1
          %s102 = scalar_select %p101, %s17, 1
          %p103 = scmp.lt.s32.totalorder %s100, 31
          %s104 = scalar_select %p103, %s100, 31
          %s105 = smul.addr %s102, 32
          %s106 = sadd.s32 %s104, %s105
          %s107 = smul.addr %s106, 8
          %s108 = scalar_lea.vmem %s0, %s107
          %s109 = smul.u32 16, %s18
        $region20: #{pgcn_forward.9} parent=15 // pred_fallthru
          _
      $region16: #{pgcn_forward.9} parent=5 // pred_fallthru
        _
      %p110 = scmp.le.s32.totalorder 1, %s10
      %p111 = scmp.lt.s32.totalorder %s10, 5
      %p112 = pnand %p110, %p111
      %p113 = pneg %p112
      // Predicated region
      $region21: #{pgcn_forward.9} parent=5 // pred_check
        _
      $region22: #{pgcn_forward.9} parent=5 // pred_check_branch
        %115 = sbr.rel (%p112) target = $region24
      $region23: #{pgcn_forward.9} parent=5 // pred_region
        %s116 = ssub.s32 %s10, 1
        %s117 = smul.u32 16, %s20
        %p118 = scmp.lt.s32.totalorder %s19, 1
        %s119 = scalar_select %p118, %s19, 1
        %p120 = scmp.lt.s32.totalorder %s117, 31
        %s121 = scalar_select %p120, %s117, 31
        %s122 = smul.addr %s119, 32
        %s123 = sadd.s32 %s121, %s122
        %s124 = smul.addr %s123, 8
        %s125 = scalar_lea.vmem %s0, %s124
        %p126 = pneg %p50
        %p127 = pneg %p47
        %p128 = pneg %p78
        %p129 = pneg %p75
        %s130 = sand.u32 %s65, 1
        %s131 = scalar_lea.sflag [#allocation3], %s130
        %s132 = sand.u32 %s65, 1
        %s133 = smul.addr %s132, 128
        %s134 = scalar_lea.vmem [#allocation2], %s133
        %s135 = smul.u32 16, %s20
        %p136 = scmp.lt.s32.totalorder %s19, 1
        %s137 = scalar_select %p136, %s19, 1
        %p138 = scmp.lt.s32.totalorder %s135, 31
        %s139 = scalar_select %p138, %s135, 31
        %s140 = smul.addr %s137, 32
        %s141 = sadd.s32 %s139, %s140
        %s142 = smul.addr %s141, 8
        %s143 = scalar_lea.vmem %s0, %s142
        %s144 = smul.u32 16, %s20
        %s145 = smul.u32 16, %s20
        %v146 = vld [vmem:[%s143] sm:$0xff]
        %v147 = vld [vmem:[%s143 + $0x8] sm:$0xff]
        %v148 = vld [vmem:[%s143 + $0x10] sm:$0xff]
        %v149 = vld [vmem:[%s143 + $0x18] sm:$0xff]
        %v150 = vld [vmem:[%s143 + $0x20] sm:$0xff]
        %v151 = vld [vmem:[%s143 + $0x28] sm:$0xff]
        %v152 = vld [vmem:[%s143 + $0x30] sm:$0xff]
        %v153 = vld [vmem:[%s143 + $0x38] sm:$0xff]
        %v154 = vld [vmem:[%s143 + $0x40] sm:$0xff]
        %v155 = vld [vmem:[%s143 + $0x48] sm:$0xff]
        %v156 = vld [vmem:[%s143 + $0x50] sm:$0xff]
        %v157 = vld [vmem:[%s143 + $0x58] sm:$0xff]
        %v158 = vld [vmem:[%s143 + $0x60] sm:$0xff]
        %v159 = vld [vmem:[%s143 + $0x68] sm:$0xff]
        %v160 = vld [vmem:[%s143 + $0x70] sm:$0xff]
        %v161 = vld [vmem:[%s143 + $0x78] sm:$0xff]
        %v162 = vmul.f32 %v146, %v146
        %v163 = vmul.f32 %v147, %v147
        %v164 = vmul.f32 %v148, %v148
        %v165 = vmul.f32 %v149, %v149
        %v166 = vmul.f32 %v150, %v150
        %v167 = vmul.f32 %v151, %v151
        %v168 = vmul.f32 %v152, %v152
        %v169 = vmul.f32 %v153, %v153
        %v170 = vmul.f32 %v154, %v154
        %v171 = vmul.f32 %v155, %v155
        %v172 = vmul.f32 %v156, %v156
        %v173 = vmul.f32 %v157, %v157
        %v174 = vmul.f32 %v158, %v158
        %v175 = vmul.f32 %v159, %v159
        %v176 = vmul.f32 %v160, %v160
        %v177 = vmul.f32 %v161, %v161
        %178 = vadd.xlane.f32.xlu0 %v162
        %v179 = vpop.xlane.xlu0 %178
        %180 = vadd.xlane.f32.xlu0 %v163
        %v181 = vpop.xlane.xlu0 %180
        %182 = vadd.xlane.f32.xlu0 %v164
        %v183 = vpop.xlane.xlu0 %182
        %184 = vadd.xlane.f32.xlu0 %v165
        %v185 = vpop.xlane.xlu0 %184
        %186 = vadd.xlane.f32.xlu0 %v166
        %v187 = vpop.xlane.xlu0 %186
        %188 = vadd.xlane.f32.xlu0 %v167
        %v189 = vpop.xlane.xlu0 %188
        %190 = vadd.xlane.f32.xlu0 %v168
        %v191 = vpop.xlane.xlu0 %190
        %192 = vadd.xlane.f32.xlu0 %v169
        %v193 = vpop.xlane.xlu0 %192
        %194 = vadd.xlane.f32.xlu0 %v170
        %v195 = vpop.xlane.xlu0 %194
        %196 = vadd.xlane.f32.xlu0 %v171
        %v197 = vpop.xlane.xlu0 %196
        %198 = vadd.xlane.f32.xlu0 %v172
        %v199 = vpop.xlane.xlu0 %198
        %200 = vadd.xlane.f32.xlu0 %v173
        %v201 = vpop.xlane.xlu0 %200
        %202 = vadd.xlane.f32.xlu0 %v174
        %v203 = vpop.xlane.xlu0 %202
        %204 = vadd.xlane.f32.xlu0 %v175
        %v205 = vpop.xlane.xlu0 %204
        %206 = vadd.xlane.f32.xlu0 %v176
        %v207 = vpop.xlane.xlu0 %206
        %208 = vadd.xlane.f32.xlu0 %v177
        %v209 = vpop.xlane.xlu0 %208
        %v210 = vmax.f32 %v179, 1e-16
        %v211 = vmax.f32 %v181, 1e-16
        %v212 = vmax.f32 %v183, 1e-16
        %v213 = vmax.f32 %v185, 1e-16
        %v214 = vmax.f32 %v187, 1e-16
        %v215 = vmax.f32 %v189, 1e-16
        %v216 = vmax.f32 %v191, 1e-16
        %v217 = vmax.f32 %v193, 1e-16
        %v218 = vmax.f32 %v195, 1e-16
        %v219 = vmax.f32 %v197, 1e-16
        %v220 = vmax.f32 %v199, 1e-16
        %v221 = vmax.f32 %v201, 1e-16
        %v222 = vmax.f32 %v203, 1e-16
        %v223 = vmax.f32 %v205, 1e-16
        %v224 = vmax.f32 %v207, 1e-16
        %v225 = vmax.f32 %v209, 1e-16
        %v226 = vrsqrt.pop %v210
        %v227 = vrsqrt.pop %v211
        %v228 = vrsqrt.pop %v212
        %v229 = vrsqrt.pop %v213
        %v230 = vrsqrt.pop %v214
        %v231 = vrsqrt.pop %v215
        %v232 = vrsqrt.pop %v216
        %v233 = vrsqrt.pop %v217
        %v234 = vrsqrt.pop %v218
        %v235 = vrsqrt.pop %v219
        %v236 = vrsqrt.pop %v220
        %v237 = vrsqrt.pop %v221
        %v238 = vrsqrt.pop %v222
        %v239 = vrsqrt.pop %v223
        %v240 = vrsqrt.pop %v224
        %v241 = vrsqrt.pop %v225
        %v242 = vmul.f32 %v146, %v226
        %v243 = vmul.f32 %v147, %v227
        %v244 = vmul.f32 %v148, %v228
        %v245 = vmul.f32 %v149, %v229
        %v246 = vmul.f32 %v150, %v230
        %v247 = vmul.f32 %v151, %v231
        %v248 = vmul.f32 %v152, %v232
        %v249 = vmul.f32 %v153, %v233
        %v250 = vmul.f32 %v154, %v234
        %v251 = vmul.f32 %v155, %v235
        %v252 = vmul.f32 %v156, %v236
        %v253 = vmul.f32 %v157, %v237
        %v254 = vmul.f32 %v158, %v238
        %v255 = vmul.f32 %v159, %v239
        %v256 = vmul.f32 %v160, %v240
        %v257 = vmul.f32 %v161, %v241
        %258 = vst [vmem:[%s134] sm:$0xff] %v242
        %259 = vst [vmem:[%s134 + $0x8] sm:$0xff] %v243
        %260 = vst [vmem:[%s134 + $0x10] sm:$0xff] %v244
        %261 = vst [vmem:[%s134 + $0x18] sm:$0xff] %v245
        %262 = vst [vmem:[%s134 + $0x20] sm:$0xff] %v246
        %263 = vst [vmem:[%s134 + $0x28] sm:$0xff] %v247
        %264 = vst [vmem:[%s134 + $0x30] sm:$0xff] %v248
        %265 = vst [vmem:[%s134 + $0x38] sm:$0xff] %v249
        %266 = vst [vmem:[%s134 + $0x40] sm:$0xff] %v250
        %267 = vst [vmem:[%s134 + $0x48] sm:$0xff] %v251
        %268 = vst [vmem:[%s134 + $0x50] sm:$0xff] %v252
        %269 = vst [vmem:[%s134 + $0x58] sm:$0xff] %v253
        %270 = vst [vmem:[%s134 + $0x60] sm:$0xff] %v254
        %271 = vst [vmem:[%s134 + $0x68] sm:$0xff] %v255
        %272 = vst [vmem:[%s134 + $0x70] sm:$0xff] %v256
        %273 = vst [vmem:[%s134 + $0x78] sm:$0xff] %v257
        %s274 = sand.u32 %s65, 1
        %s275 = scalar_lea.sflag [#allocation3], %s274
        %s276 = sand.u32 %s65, 1
        %s277 = smul.addr %s276, 128
        %s278 = scalar_lea.vmem [#allocation2], %s277
        // Predicated region
        $region25: #{pgcn_forward.9} parent=23 // pred_check
          %p279 = pneg %p75
        $region26: #{pgcn_forward.9} parent=23 // pred_check_branch
          %281 = sbr.rel (%p279) target = $region28
        $region27: #{pgcn_forward.9} parent=23 // pred_region
          %s282 = smul.u32 16, %s20
          %s284 = ssub.s32 2048, 2048
          %285 = vsyncadd %s275, %s284
          %s286 = smul.addr %s19, 32
          %s287 = sadd.s32 %s282, %s286
          %s288 = smul.addr %s287, 128
          %s289 = scalar_lea.hbm %s1, %s288
          %s290 = sshll.u32 %s278, 4
          %s291 = int_to_ptr.vmem [resolvable:$true] %s290
          %296 = dma.vmem_to_hbm [thread:$0]  %s291, 2048, %s289, %s275, 128, 128, 8
        $region28: #{pgcn_forward.9} parent=23 // pred_fallthru
          _
      $region24: #{pgcn_forward.9} parent=5 // pred_fallthru
        _
      %p297 = scmp.le.s32.totalorder 2, %s10
      // Predicated region
      $region29: #{pgcn_forward.9} parent=5 // pred_check
        %p298 = pneg %p297
      $region30: #{pgcn_forward.9} parent=5 // pred_check_branch
        %300 = sbr.rel (%p298) target = $region32
      $region31: #{pgcn_forward.9} parent=5 // pred_region
        %s301 = ssub.s32 %s10, 2
        // Predicated region
        $region33: #{pgcn_forward.9} parent=31 // pred_check
          %p302 = pneg %p81
        $region34: #{pgcn_forward.9} parent=31 // pred_check_branch
          %304 = sbr.rel (%p302) target = $region36
        $region35: #{pgcn_forward.9} parent=31 // pred_region
          %s305 = sand.u32 %s66, 1
          %s306 = scalar_lea.sflag [#allocation3], %s305
          %s307 = sand.u32 %s66, 1
          %s308 = smul.addr %s307, 128
          %s309 = scalar_lea.vmem [#allocation2], %s308
          %310 = dma.done %s306, 2048
        $region36: #{pgcn_forward.9} parent=31 // pred_fallthru
          _
      $region32: #{pgcn_forward.9} parent=5 // pred_fallthru
        _
    $region6: #{pgcn_forward.9} parent=1 // loop_footer
      %s14 = sadd.s32 1, %s10
    $region7: #{pgcn_forward.9} parent=1 // loop_footer_branch
      %9 = sbr.rel target = $region3
    $region8: #{pgcn_forward.9} parent=1 // loop_exit
      _
    %311 = vsyncpa [#allocation3], 1
    %s312 = scalar_lea.sflag [#allocation3], 1
    %313 = vsyncpa %s312, 1

// kernel: pgcn_forward.12
$region0: #{pgcn_forward.12}
  #allocation0 [shape = 'u32[]', space=smem, size = 0x4, offset = 0x4, fixed_abs, tag = 'smem constant byte address 0x4 - core index']
  #allocation1 [shape = 'u32[144,128]{1,0:T(1,128)}', space=vmem, size = 0x12000, scoped, tag = 'internal scratch']
  %s0 = inlined_call_operand.vmem [shape: f32[2,256,128], index: 0, kind: input, shape index: {}]
  %s1 = inlined_call_operand.vmem [shape: bf16[128,128], index: 1, kind: input, shape index: {}]
  %s2 = inlined_call_operand.hbm [shape: bf16[2,256,128], index: 2, kind: output, shape index: {}]
  %s3 = sld [smem:[#allocation0]]
  $region41: #{pgcn_forward.12} parent=0
    _
  %s5 = ssub.s32 1, %s3
  %s6 = scalar_select 0, %s5, %s3
  $region1: #{pgcn_forward.12} parent=0
    #allocation2 [shape = 'u8[65536]{0}', space=vmem, size = 0x10000, scoped, tag = 'output window, operand 0']
    #allocation3 [shape = 's32[2]{0}', space=sflag, size = 0x8, scoped, tag = 'scoped memory for pgcn_forward.12']
    %7 = vsyncpa [#allocation3], 0
    %s8 = scalar_lea.sflag [#allocation3], 1
    %9 = vsyncpa %s8, 0
    loop: start=0, step=1, limit=6
    $region2: #{pgcn_forward.12} parent=1 // loop_pre_header
      _
    $region3: #{pgcn_forward.12} parent=1 // loop_header
      %s11 = sphi 0, %s15
      %p12 = scmp.ge.s32.totalorder %s11, 6
      %s18 = sphi 0, %s30
      %s19 = sphi 0, %s26
      %s20 = sphi 0, %s18
      %s21 = sphi 0, %s19
      %s22 = sphi 0, %s20
      %s23 = sphi 0, %s21
      %s35 = sphi 0, %s37
      %s38 = sphi 0, %s35
      %s39 = sphi 0, %s38
      %s55 = sphi 0, %s39
      %s59 = sphi 0, %s59
      %s61 = sphi 0, %s59
      %s62 = sphi 0, %s61
      %s76 = sphi 0, %s62
      %s84 = sphi 0, %s86
      %s87 = sphi 0, %s84
      %s88 = sphi 0, %s87
      %s104 = sphi 0, %s88
    $region4: #{pgcn_forward.12} parent=1 // loop_header_branch
      %14 = sbr.rel (%p12) target = $region8
    $region5: #{pgcn_forward.12} parent=1 // loop_body
      %s16 = ssub.s32 %s11, 1
      %s17 = ssub.s32 %s11, 2
      %s24 = sadd.s32 1, %s19
      %p25 = scmp.ge.s32.totalorder %s24, 2
      %s26 = scalar_select %p25, 0, %s24
      %s27 = sadd.s32 1, %s18
      %s28 = scalar_select %p25, %s27, %s18
      %p29 = scmp.ge.s32.totalorder %s28, 2
      %s30 = scalar_select %p29, 0, %s28
      %s31 = ssub.s32 %s18, %s30
      %s32 = ssub.s32 %s19, %s26
      %s33 = sor.u32 %s31, %s32
      %p34 = scmp.eq.s32.totalorder %s33, 0
      %s36 = sadd.s32 %s35, 1
      %s37 = scalar_select %p34, %s35, %s36
      %p40 = pneg %p34
      %p41 = scmp.eq.s32.totalorder %s11, 3
      %p42 = por %p40, %p41
      %p43 = scmp.ne.s32.totalorder %s35, %s38
      %p44 = scmp.eq.s32.totalorder %s11, 0
      %p45 = por %p43, %p44
      %p46 = scmp.ne.s32.totalorder %s35, %s38
      %p47 = scmp.eq.s32.totalorder %s16, 3
      %p48 = por %p46, %p47
      %p49 = scmp.ne.s32.totalorder %s38, %s39
      %p50 = scmp.eq.s32.totalorder %s16, 0
      %p51 = por %p49, %p50
      %p52 = scmp.ne.s32.totalorder %s38, %s39
      %p53 = scmp.eq.s32.totalorder %s17, 3
      %p54 = por %p52, %p53
      %p56 = scmp.ne.s32.totalorder %s39, %s55
      %p57 = scmp.eq.s32.totalorder %s17, 0
      %p58 = por %p56, %p57
      %s60 = sadd.s32 %s59, 1
      %p63 = scmp.eq.s32.totalorder %s11, 3
      %p64 = scmp.ne.s32.totalorder %s59, %s61
      %p65 = scmp.eq.s32.totalorder %s11, 0
      %p66 = por %p64, %p65
      %p67 = scmp.ne.s32.totalorder %s59, %s61
      %p68 = scmp.eq.s32.totalorder %s16, 3
      %p69 = por %p67, %p68
      %p70 = scmp.ne.s32.totalorder %s61, %s62
      %p71 = scmp.eq.s32.totalorder %s16, 0
      %p72 = por %p70, %p71
      %p73 = scmp.ne.s32.totalorder %s61, %s62
      %p74 = scmp.eq.s32.totalorder %s17, 3
      %p75 = por %p73, %p74
      %p77 = scmp.ne.s32.totalorder %s62, %s76
      %p78 = scmp.eq.s32.totalorder %s17, 0
      %p79 = por %p77, %p78
      %s80 = ssub.s32 %s18, %s30
      %s81 = ssub.s32 %s19, %s26
      %s82 = sor.u32 %s80, %s81
      %p83 = scmp.eq.s32.totalorder %s82, 0
      %s85 = sadd.s32 %s84, 1
      %s86 = scalar_select %p83, %s84, %s85
      %p89 = pneg %p83
      %p90 = scmp.eq.s32.totalorder %s11, 3
      %p91 = por %p89, %p90
      %p92 = scmp.ne.s32.totalorder %s84, %s87
      %p93 = scmp.eq.s32.totalorder %s11, 0
      %p94 = por %p92, %p93
      %p95 = scmp.ne.s32.totalorder %s84, %s87
      %p96 = scmp.eq.s32.totalorder %s16, 3
      %p97 = por %p95, %p96
      %p98 = scmp.ne.s32.totalorder %s87, %s88
      %p99 = scmp.eq.s32.totalorder %s16, 0
      %p100 = por %p98, %p99
      %p101 = scmp.ne.s32.totalorder %s87, %s88
      %p102 = scmp.eq.s32.totalorder %s17, 3
      %p103 = por %p101, %p102
      %p105 = scmp.ne.s32.totalorder %s88, %s104
      %p106 = scmp.eq.s32.totalorder %s17, 0
      %p107 = por %p105, %p106
      %p108 = scmp.le.s32.totalorder 1, %s11
      %p109 = scmp.lt.s32.totalorder %s11, 5
      %p110 = pnand %p108, %p109
      %p111 = pneg %p110
      // Predicated region
      $region9: #{pgcn_forward.12} parent=5 // pred_check
        _
      $region10: #{pgcn_forward.12} parent=5 // pred_check_branch
        %113 = sbr.rel (%p110) target = $region12
      $region11: #{pgcn_forward.12} parent=5 // pred_region
        %s114 = ssub.s32 %s11, 1
        // Predicated region
        $region13: #{pgcn_forward.12} parent=11 // pred_check
          %p115 = pneg %p72
        $region14: #{pgcn_forward.12} parent=11 // pred_check_branch
          %117 = sbr.rel (%p115) target = $region16
        $region15: #{pgcn_forward.12} parent=11 // pred_region
          _
        $region16: #{pgcn_forward.12} parent=11 // pred_fallthru
          _
      $region12: #{pgcn_forward.12} parent=5 // pred_fallthru
        _
      %p118 = scmp.lt.s32.totalorder %s11, 4
      // Predicated region
      $region17: #{pgcn_forward.12} parent=5 // pred_check
        %p119 = pneg %p118
      $region18: #{pgcn_forward.12} parent=5 // pred_check_branch
        %121 = sbr.rel (%p119) target = $region20
      $region19: #{pgcn_forward.12} parent=5 // pred_region
        // Predicated region
        $region21: #{pgcn_forward.12} parent=19 // pred_check
          %p122 = pneg %p45
        $region22: #{pgcn_forward.12} parent=19 // pred_check_branch
          %124 = sbr.rel (%p122) target = $region24
        $region23: #{pgcn_forward.12} parent=19 // pred_region
          %s125 = smul.u32 16, %s19
          %p126 = scmp.lt.s32.totalorder %s18, 1
          %s127 = scalar_select %p126, %s18, 1
          %p128 = scmp.lt.s32.totalorder %s125, 31
          %s129 = scalar_select %p128, %s125, 31
          %s130 = smul.addr %s127, 32
          %s131 = sadd.s32 %s129, %s130
          %s132 = smul.addr %s131, 8
          %s133 = scalar_lea.vmem %s0, %s132
          %s134 = smul.u32 16, %s19
        $region24: #{pgcn_forward.12} parent=19 // pred_fallthru
          _
      $region20: #{pgcn_forward.12} parent=5 // pred_fallthru
        _
      %p135 = scmp.le.s32.totalorder 1, %s11
      %p136 = scmp.lt.s32.totalorder %s11, 5
      %p137 = pnand %p135, %p136
      %p138 = pneg %p137
      // Predicated region
      $region25: #{pgcn_forward.12} parent=5 // pred_check
        _
      $region26: #{pgcn_forward.12} parent=5 // pred_check_branch
        %140 = sbr.rel (%p137) target = $region28
      $region27: #{pgcn_forward.12} parent=5 // pred_region
        %s141 = ssub.s32 %s11, 1
        %s142 = smul.u32 16, %s21
        %p143 = scmp.lt.s32.totalorder %s20, 1
        %s144 = scalar_select %p143, %s20, 1
        %p145 = scmp.lt.s32.totalorder %s142, 31
        %s146 = scalar_select %p145, %s142, 31
        %s147 = smul.addr %s144, 32
        %s148 = sadd.s32 %s146, %s147
        %s149 = smul.addr %s148, 8
        %s150 = scalar_lea.vmem %s0, %s149
        %p151 = pneg %p51
        %p152 = pneg %p48
        %p153 = pneg %p72
        %p154 = pneg %p69
        %p155 = pneg %p100
        %p156 = pneg %p97
        %s157 = sand.u32 %s87, 1
        %s158 = scalar_lea.sflag [#allocation3], %s157
        %s159 = sand.u32 %s87, 1
        %s160 = smul.addr %s159, 64
        %s161 = scalar_lea.vmem [#allocation2], %s160
        %s162 = smul.u32 16, %s21
        %p163 = scmp.lt.s32.totalorder %s20, 1
        %s164 = scalar_select %p163, %s20, 1
        %p165 = scmp.lt.s32.totalorder %s162, 31
        %s166 = scalar_select %p165, %s162, 31
        %s167 = smul.addr %s164, 32
        %s168 = sadd.s32 %s166, %s167
        %s169 = smul.addr %s168, 8
        %s170 = scalar_lea.vmem %s0, %s169
        %s171 = smul.u32 16, %s21
        %s172 = smul.u32 16, %s21
        %v174 = vld [vmem:[%s170] sm:$0xff]
        %v175 = vld [vmem:[%s170 + $0x8] sm:$0xff]
        %v176 = vld [vmem:[%s170 + $0x10] sm:$0xff]
        %v177 = vld [vmem:[%s170 + $0x18] sm:$0xff]
        %v178 = vld [vmem:[%s170 + $0x20] sm:$0xff]
        %v179 = vld [vmem:[%s170 + $0x28] sm:$0xff]
        %v180 = vld [vmem:[%s170 + $0x30] sm:$0xff]
        %v181 = vld [vmem:[%s170 + $0x38] sm:$0xff]
        %v182 = vld [vmem:[%s170 + $0x40] sm:$0xff]
        %v183 = vld [vmem:[%s170 + $0x48] sm:$0xff]
        %v184 = vld [vmem:[%s170 + $0x50] sm:$0xff]
        %v185 = vld [vmem:[%s170 + $0x58] sm:$0xff]
        %v186 = vld [vmem:[%s170 + $0x60] sm:$0xff]
        %v187 = vld [vmem:[%s170 + $0x68] sm:$0xff]
        %v188 = vld [vmem:[%s170 + $0x70] sm:$0xff]
        %v189 = vld [vmem:[%s170 + $0x78] sm:$0xff]
        %v190 = vpack.c.bf16 %v175, %v174
        %v191 = vpack.c.bf16 %v177, %v176
        %v192 = vpack.c.bf16 %v179, %v178
        %v193 = vpack.c.bf16 %v181, %v180
        %v194 = vpack.c.bf16 %v183, %v182
        %v195 = vpack.c.bf16 %v185, %v184
        %v196 = vpack.c.bf16 %v187, %v186
        %v197 = vpack.c.bf16 %v189, %v188
        %v198 = vld [vmem:[%s1] sm:$0xf]
        %v199 = vld [vmem:[%s1 + $0x4] sm:$0xf]
        %v200 = vld [vmem:[%s1 + $0x8] sm:$0xf]
        %v201 = vld [vmem:[%s1 + $0xc] sm:$0xf]
        %v202 = vld [vmem:[%s1 + $0x10] sm:$0xf]
        %v203 = vld [vmem:[%s1 + $0x14] sm:$0xf]
        %v204 = vld [vmem:[%s1 + $0x18] sm:$0xf]
        %v205 = vld [vmem:[%s1 + $0x1c] sm:$0xf]
        %v206 = vld [vmem:[%s1 + $0x20] sm:$0xf]
        %v207 = vld [vmem:[%s1 + $0x24] sm:$0xf]
        %v208 = vld [vmem:[%s1 + $0x28] sm:$0xf]
        %v209 = vld [vmem:[%s1 + $0x2c] sm:$0xf]
        %v210 = vld [vmem:[%s1 + $0x30] sm:$0xf]
        %v211 = vld [vmem:[%s1 + $0x34] sm:$0xf]
        %v212 = vld [vmem:[%s1 + $0x38] sm:$0xf]
        %v213 = vld [vmem:[%s1 + $0x3c] sm:$0xf]
        %v230 = vunpack.c.l.b16 %v198
        %v231 = vunpack.c.l.b16 %v199
        %v232 = vunpack.c.l.b16 %v200
        %v233 = vunpack.c.l.b16 %v201
        %v234 = vunpack.c.l.b16 %v202
        %v235 = vunpack.c.l.b16 %v203
        %v236 = vunpack.c.l.b16 %v204
        %v237 = vunpack.c.l.b16 %v205
        %v238 = vunpack.c.l.b16 %v206
        %v239 = vunpack.c.l.b16 %v207
        %v240 = vunpack.c.l.b16 %v208
        %v241 = vunpack.c.l.b16 %v209
        %v242 = vunpack.c.l.b16 %v210
        %v243 = vunpack.c.l.b16 %v211
        %v244 = vunpack.c.l.b16 %v212
        %v245 = vunpack.c.l.b16 %v213
        %v246 = vpack.c.b16 %v231, %v230
        %v247 = vpack.c.b16 %v233, %v232
        %v248 = vpack.c.b16 %v235, %v234
        %v249 = vpack.c.b16 %v237, %v236
        %v250 = vpack.c.b16 %v239, %v238
        %v251 = vpack.c.b16 %v241, %v240
        %v252 = vpack.c.b16 %v243, %v242
        %v253 = vpack.c.b16 %v245, %v244
        %262 = vmatprep.subr.bf16.mxu0 0
        %263 = vmatpush1.bf16.msra.mxu0 %v246
        %264 = vmatprep.subr.bf16.mxu0 0
        %265 = vmatpush1.bf16.msra.mxu0 %v247
        %266 = vmatprep.subr.bf16.mxu0 0
        %267 = vmatpush1.bf16.msra.mxu0 %v248
        %268 = vmatprep.subr.bf16.mxu0 0
        %269 = vmatpush1.bf16.msra.mxu0 %v249
        %270 = vmatprep.subr.bf16.mxu0 0
        %271 = vmatpush1.bf16.msra.mxu0 %v250
        %272 = vmatprep.subr.bf16.mxu0 0
        %273 = vmatpush1.bf16.msra.mxu0 %v251
        %274 = vmatprep.subr.bf16.mxu0 0
        %275 = vmatpush1.bf16.msra.mxu0 %v252
        %276 = vmatprep.subr.bf16.mxu0 0
        %277 = vmatpush1.bf16.msra.mxu0 %v253
        %278 = vmatprep.subr.bf16.mxu0 0
        %279 = vmatpush1.bf16.msra.mxu0 0
        %280 = vmatprep.subr.bf16.mxu0 0
        %281 = vmatpush1.bf16.msra.mxu0 0
        %282 = vmatprep.subr.bf16.mxu0 0
        %283 = vmatpush1.bf16.msra.mxu0 0
        %284 = vmatprep.subr.bf16.mxu0 0
        %285 = vmatpush1.bf16.msra.mxu0 0
        %286 = vmatprep.subr.bf16.mxu0 0
        %287 = vmatpush1.bf16.msra.mxu0 0
        %288 = vmatprep.subr.bf16.mxu0 0
        %289 = vmatpush1.bf16.msra.mxu0 0
        %290 = vmatprep.subr.bf16.mxu0 0
        %291 = vmatpush1.bf16.msra.mxu0 0
        %292 = vmatprep.subr.bf16.mxu0 0
        %293 = vmatpush1.bf16.msra.mxu0 0
        %294 = vmatprep.mubr.bf16.mxu0 0
        %295 = vmatmul.mubr.bf16.gmra.mrb[0].mxu0 %v190
        %v296 = vpop.f32.mrb[0].mxu0
        %v297 = vadd.f32 0.0, %v296
        %v298 = vpop.f32.mrb[0].mxu0
        %v299 = vpop.f32.mrb[0].mxu0
        %v300 = vadd.f32 0.0, %v299
        %v301 = vpop.f32.mrb[0].mxu0
        %302 = vmatprep.mubr.bf16.mxu0 0
        %303 = vmatmul.mubr.bf16.gmra.mrb[0].mxu0 %v191
        %v304 = vpop.f32.mrb[0].mxu0
        %v305 = vadd.f32 0.0, %v304
        %v306 = vpop.f32.mrb[0].mxu0
        %v307 = vpop.f32.mrb[0].mxu0
        %v308 = vadd.f32 0.0, %v307
        %v309 = vpop.f32.mrb[0].mxu0
        %310 = vmatprep.mubr.bf16.mxu0 0
        %311 = vmatmul.mubr.bf16.gmra.mrb[0].mxu0 %v192
        %v312 = vpop.f32.mrb[0].mxu0
        %v313 = vadd.f32 0.0, %v312
        %v314 = vpop.f32.mrb[0].mxu0
        %v315 = vpop.f32.mrb[0].mxu0
        %v316 = vadd.f32 0.0, %v315
        %v317 = vpop.f32.mrb[0].mxu0
        %318 = vmatprep.mubr.bf16.mxu0 0
        %319 = vmatmul.mubr.bf16.gmra.mrb[0].mxu0 %v193
        %v320 = vpop.f32.mrb[0].mxu0
        %v321 = vadd.f32 0.0, %v320
        %v322 = vpop.f32.mrb[0].mxu0
        %v323 = vpop.f32.mrb[0].mxu0
        %v324 = vadd.f32 0.0, %v323
        %v325 = vpop.f32.mrb[0].mxu0
        %326 = vmatprep.mubr.bf16.mxu0 0
        %327 = vmatmul.mubr.bf16.gmra.mrb[0].mxu0 %v194
        %v328 = vpop.f32.mrb[0].mxu0
        %v329 = vadd.f32 0.0, %v328
        %v330 = vpop.f32.mrb[0].mxu0
        %v331 = vpop.f32.mrb[0].mxu0
        %v332 = vadd.f32 0.0, %v331
        %v333 = vpop.f32.mrb[0].mxu0
        %334 = vmatprep.mubr.bf16.mxu0 0
        %335 = vmatmul.mubr.bf16.gmra.mrb[0].mxu0 %v195
        %v336 = vpop.f32.mrb[0].mxu0
        %v337 = vadd.f32 0.0, %v336
        %v338 = vpop.f32.mrb[0].mxu0
        %v339 = vpop.f32.mrb[0].mxu0
        %v340 = vadd.f32 0.0, %v339
        %v341 = vpop.f32.mrb[0].mxu0
        %342 = vmatprep.mubr.bf16.mxu0 0
        %343 = vmatmul.mubr.bf16.gmra.mrb[0].mxu0 %v196
        %v344 = vpop.f32.mrb[0].mxu0
        %v345 = vadd.f32 0.0, %v344
        %v346 = vpop.f32.mrb[0].mxu0
        %v347 = vpop.f32.mrb[0].mxu0
        %v348 = vadd.f32 0.0, %v347
        %v349 = vpop.f32.mrb[0].mxu0
        %350 = vmatprep.mubr.bf16.mxu0 0
        %351 = vmatmul.mubr.bf16.gmra.mrb[0].mxu0 %v197
        %v352 = vpop.f32.mrb[0].mxu0
        %v353 = vadd.f32 0.0, %v352
        %v354 = vpop.f32.mrb[0].mxu0
        %v355 = vpop.f32.mrb[0].mxu0
        %v356 = vadd.f32 0.0, %v355
        %v357 = vpop.f32.mrb[0].mxu0
        %358 = vdwg.mxu0
        %v359 = vpack.c.bf16 %v300, %v297
        %v360 = vpack.c.bf16 %v308, %v305
        %v361 = vpack.c.bf16 %v316, %v313
        %v362 = vpack.c.bf16 %v324, %v321
        %v363 = vpack.c.bf16 %v332, %v329
        %v364 = vpack.c.bf16 %v340, %v337
        %v365 = vpack.c.bf16 %v348, %v345
        %v366 = vpack.c.bf16 %v356, %v353
        %v375 = vunpack.c.l.b16 %v359
        %v376 = vunpack.c.h.b16 %v359
        %v377 = vunpack.c.l.b16 %v360
        %v378 = vunpack.c.h.b16 %v360
        %v379 = vunpack.c.l.b16 %v361
        %v380 = vunpack.c.h.b16 %v361
        %v381 = vunpack.c.l.b16 %v362
        %v382 = vunpack.c.h.b16 %v362
        %v383 = vunpack.c.l.b16 %v363
        %v384 = vunpack.c.h.b16 %v363
        %v385 = vunpack.c.l.b16 %v364
        %v386 = vunpack.c.h.b16 %v364
        %v387 = vunpack.c.l.b16 %v365
        %v388 = vunpack.c.h.b16 %v365
        %v389 = vunpack.c.l.b16 %v366
        %v390 = vunpack.c.h.b16 %v366
        %v391 = vpack.c.b16 %v375, %v375
        %v392 = vpack.c.b16 %v376, %v376
        %v393 = vpack.c.b16 %v377, %v377
        %v394 = vpack.c.b16 %v378, %v378
        %v395 = vpack.c.b16 %v379, %v379
        %v396 = vpack.c.b16 %v380, %v380
        %v397 = vpack.c.b16 %v381, %v381
        %v398 = vpack.c.b16 %v382, %v382
        %v399 = vpack.c.b16 %v383, %v383
        %v400 = vpack.c.b16 %v384, %v384
        %v401 = vpack.c.b16 %v385, %v385
        %v402 = vpack.c.b16 %v386, %v386
        %v403 = vpack.c.b16 %v387, %v387
        %v404 = vpack.c.b16 %v388, %v388
        %v405 = vpack.c.b16 %v389, %v389
        %v406 = vpack.c.b16 %v390, %v390
        %423 = vst [vmem:[%s161] sm:$0xf] %v391
        %424 = vst [vmem:[%s161 + $0x4] sm:$0xf] %v392
        %425 = vst [vmem:[%s161 + $0x8] sm:$0xf] %v393
        %426 = vst [vmem:[%s161 + $0xc] sm:$0xf] %v394
        %427 = vst [vmem:[%s161 + $0x10] sm:$0xf] %v395
        %428 = vst [vmem:[%s161 + $0x14] sm:$0xf] %v396
        %429 = vst [vmem:[%s161 + $0x18] sm:$0xf] %v397
        %430 = vst [vmem:[%s161 + $0x1c] sm:$0xf] %v398
        %431 = vst [vmem:[%s161 + $0x20] sm:$0xf] %v399
        %432 = vst [vmem:[%s161 + $0x24] sm:$0xf] %v400
        %433 = vst [vmem:[%s161 + $0x28] sm:$0xf] %v401
        %434 = vst [vmem:[%s161 + $0x2c] sm:$0xf] %v402
        %435 = vst [vmem:[%s161 + $0x30] sm:$0xf] %v403
        %436 = vst [vmem:[%s161 + $0x34] sm:$0xf] %v404
        %437 = vst [vmem:[%s161 + $0x38] sm:$0xf] %v405
        %438 = vst [vmem:[%s161 + $0x3c] sm:$0xf] %v406
        %s439 = sand.u32 %s87, 1
        %s440 = scalar_lea.sflag [#allocation3], %s439
        %s441 = sand.u32 %s87, 1
        %s442 = smul.addr %s441, 64
        %s443 = scalar_lea.vmem [#allocation2], %s442
        // Predicated region
        $region29: #{pgcn_forward.12} parent=27 // pred_check
          %p444 = pneg %p97
        $region30: #{pgcn_forward.12} parent=27 // pred_check_branch
          %446 = sbr.rel (%p444) target = $region32
        $region31: #{pgcn_forward.12} parent=27 // pred_region
          %s447 = smul.u32 16, %s21
          %s449 = ssub.s32 1024, 1024
          %450 = vsyncadd %s440, %s449
          %s451 = smul.addr %s20, 32
          %s452 = sadd.s32 %s447, %s451
          %s453 = smul.addr %s452, 64
          %s454 = scalar_lea.hbm %s2, %s453
          %s455 = sshll.u32 %s443, 4
          %s456 = int_to_ptr.vmem [resolvable:$true] %s455
          %461 = dma.vmem_to_hbm [thread:$0]  %s456, 1024, %s454, %s440, 64, 64, 4
        $region32: #{pgcn_forward.12} parent=27 // pred_fallthru
          _
      $region28: #{pgcn_forward.12} parent=5 // pred_fallthru
        _
      %p462 = scmp.le.s32.totalorder 2, %s11
      // Predicated region
      $region33: #{pgcn_forward.12} parent=5 // pred_check
        %p463 = pneg %p462
      $region34: #{pgcn_forward.12} parent=5 // pred_check_branch
        %465 = sbr.rel (%p463) target = $region36
      $region35: #{pgcn_forward.12} parent=5 // pred_region
        %s466 = ssub.s32 %s11, 2
        // Predicated region
        $region37: #{pgcn_forward.12} parent=35 // pred_check
          %p467 = pneg %p103
        $region38: #{pgcn_forward.12} parent=35 // pred_check_branch
          %469 = sbr.rel (%p467) target = $region40
        $region39: #{pgcn_forward.12} parent=35 // pred_region
          %s470 = sand.u32 %s88, 1
          %s471 = scalar_lea.sflag [#allocation3], %s470
          %s472 = sand.u32 %s88, 1
          %s473 = smul.addr %s472, 64
          %s474 = scalar_lea.vmem [#allocation2], %s473
          %475 = dma.done %s471, 1024
        $region40: #{pgcn_forward.12} parent=35 // pred_fallthru
          _
      $region36: #{pgcn_forward.12} parent=5 // pred_fallthru
        _
    $region6: #{pgcn_forward.12} parent=1 // loop_footer
      %s15 = sadd.s32 1, %s11
    $region7: #{pgcn_forward.12} parent=1 // loop_footer_branch
      %10 = sbr.rel target = $region3
    $region8: #{pgcn_forward.12} parent=1 // loop_exit
      _
    %476 = vsyncpa [#allocation3], 1
    %s477 = scalar_lea.sflag [#allocation3], 1
    %478 = vsyncpa %s477, 1

// kernel: pgcn_forward.11
$region0: #{pgcn_forward.11}
  #allocation0 [shape = 'u32[]', space=smem, size = 0x4, offset = 0x4, fixed_abs, tag = 'smem constant byte address 0x4 - core index']
  #allocation1 [shape = 'u32[144,128]{1,0:T(1,128)}', space=vmem, size = 0x12000, scoped, tag = 'internal scratch']
  %s0 = inlined_call_operand.hbm [shape: f32[2,256,256], index: 0, kind: input, shape index: {}]
  %s1 = inlined_call_operand.hbm [shape: f32[2,256,1], index: 1, kind: input, shape index: {}]
  %s2 = inlined_call_operand.hbm [shape: bf16[2,256,256], index: 2, kind: output, shape index: {}]
  %s3 = sld [smem:[#allocation0]]
  $region49: #{pgcn_forward.11} parent=0
    _
  %s5 = ssub.s32 1, %s3
  %s6 = scalar_select 0, %s5, %s3
  $region1: #{pgcn_forward.11} parent=0
    #allocation2 [shape = 'u8[131072]{0}', space=vmem, size = 0x20000, scoped, tag = 'input window, operand 0']
    #allocation3 [shape = 's32[2]{0}', space=sflag, size = 0x8, scoped, tag = 'scoped memory for pgcn_forward.11']
    #allocation4 [shape = 's32[2]{0}', space=sflag, size = 0x8, scoped, tag = 'scoped memory for pgcn_forward.11']
    #allocation5 [shape = 'u8[131072]{0}', space=vmem, size = 0x20000, scoped, tag = 'input window, operand 1']
    #allocation6 [shape = 's32[2]{0}', space=sflag, size = 0x8, scoped, tag = 'scoped memory for pgcn_forward.11']
    #allocation7 [shape = 'u8[65536]{0}', space=vmem, size = 0x10000, scoped, tag = 'output window, operand 0']
    %7 = vsyncpa [#allocation3], 0
    %s8 = scalar_lea.sflag [#allocation3], 1
    %9 = vsyncpa %s8, 0
    %10 = vsyncpa [#allocation6], 0
    %s11 = scalar_lea.sflag [#allocation6], 1
    %12 = vsyncpa %s11, 0
    %13 = vsyncpa [#allocation4], 0
    %s14 = scalar_lea.sflag [#allocation4], 1
    %15 = vsyncpa %s14, 0
    loop: start=0, step=1, limit=10
    $region2: #{pgcn_forward.11} parent=1 // loop_pre_header
      _
    $region3: #{pgcn_forward.11} parent=1 // loop_header
      %s17 = sphi 0, %s21
      %p18 = scmp.ge.s32.totalorder %s17, 10
      %s24 = sphi 0, %s43
      %s25 = sphi 0, %s39
      %s26 = sphi 0, %s35
      %s27 = sphi 0, %s24
      %s28 = sphi 0, %s25
      %s29 = sphi 0, %s26
      %s30 = sphi 0, %s27
      %s31 = sphi 0, %s28
      %s32 = sphi 0, %s29
      %s50 = sphi 0, %s52
      %s53 = sphi 0, %s50
      %s54 = sphi 0, %s53
      %s70 = sphi 0, %s54
      %s78 = sphi 0, %s80
      %s81 = sphi 0, %s78
      %s82 = sphi 0, %s81
      %s98 = sphi 0, %s82
      %s108 = sphi 0, %s110
      %s111 = sphi 0, %s108
      %s112 = sphi 0, %s111
      %s128 = sphi 0, %s112
    $region4: #{pgcn_forward.11} parent=1 // loop_header_branch
      %20 = sbr.rel (%p18) target = $region8
    $region5: #{pgcn_forward.11} parent=1 // loop_body
      %s22 = ssub.s32 %s17, 1
      %s23 = ssub.s32 %s17, 2
      %s33 = sadd.s32 1, %s26
      %p34 = scmp.ge.s32.totalorder %s33, 2
      %s35 = scalar_select %p34, 0, %s33
      %s36 = sadd.s32 1, %s25
      %s37 = scalar_select %p34, %s36, %s25
      %p38 = scmp.ge.s32.totalorder %s37, 2
      %s39 = scalar_select %p38, 0, %s37
      %s40 = sadd.s32 1, %s24
      %s41 = scalar_select %p38, %s40, %s24
      %p42 = scmp.ge.s32.totalorder %s41, 2
      %s43 = scalar_select %p42, 0, %s41
      %s44 = ssub.s32 %s24, %s43
      %s45 = ssub.s32 %s25, %s39
      %s46 = sor.u32 %s44, %s45
      %s47 = ssub.s32 %s26, %s35
      %s48 = sor.u32 %s46, %s47
      %p49 = scmp.eq.s32.totalorder %s48, 0
      %s51 = sadd.s32 %s50, 1
      %s52 = scalar_select %p49, %s50, %s51
      %p55 = pneg %p49
      %p56 = scmp.eq.s32.totalorder %s17, 7
      %p57 = por %p55, %p56
      %p58 = scmp.ne.s32.totalorder %s50, %s53
      %p59 = scmp.eq.s32.totalorder %s17, 0
      %p60 = por %p58, %p59
      %p61 = scmp.ne.s32.totalorder %s50, %s53
      %p62 = scmp.eq.s32.totalorder %s22, 7
      %p63 = por %p61, %p62
      %p64 = scmp.ne.s32.totalorder %s53, %s54
      %p65 = scmp.eq.s32.totalorder %s22, 0
      %p66 = por %p64, %p65
      %p67 = scmp.ne.s32.totalorder %s53, %s54
      %p68 = scmp.eq.s32.totalorder %s23, 7
      %p69 = por %p67, %p68
      %p71 = scmp.ne.s32.totalorder %s54, %s70
      %p72 = scmp.eq.s32.totalorder %s23, 0
      %p73 = por %p71, %p72
      %s74 = ssub.s32 %s24, %s43
      %s75 = ssub.s32 %s25, %s39
      %s76 = sor.u32 %s74, %s75
      %p77 = scmp.eq.s32.totalorder %s76, 0
      %s79 = sadd.s32 %s78, 1
      %s80 = scalar_select %p77, %s78, %s79
      %p83 = pneg %p77
      %p84 = scmp.eq.s32.totalorder %s17, 7
      %p85 = por %p83, %p84
      %p86 = scmp.ne.s32.totalorder %s78, %s81
      %p87 = scmp.eq.s32.totalorder %s17, 0
      %p88 = por %p86, %p87
      %p89 = scmp.ne.s32.totalorder %s78, %s81
      %p90 = scmp.eq.s32.totalorder %s22, 7
      %p91 = por %p89, %p90
      %p92 = scmp.ne.s32.totalorder %s81, %s82
      %p93 = scmp.eq.s32.totalorder %s22, 0
      %p94 = por %p92, %p93
      %p95 = scmp.ne.s32.totalorder %s81, %s82
      %p96 = scmp.eq.s32.totalorder %s23, 7
      %p97 = por %p95, %p96
      %p99 = scmp.ne.s32.totalorder %s82, %s98
      %p100 = scmp.eq.s32.totalorder %s23, 0
      %p101 = por %p99, %p100
      %s102 = ssub.s32 %s24, %s43
      %s103 = ssub.s32 %s25, %s39
      %s104 = sor.u32 %s102, %s103
      %s105 = ssub.s32 %s26, %s35
      %s106 = sor.u32 %s104, %s105
      %p107 = scmp.eq.s32.totalorder %s106, 0
      %s109 = sadd.s32 %s108, 1
      %s110 = scalar_select %p107, %s108, %s109
      %p113 = pneg %p107
      %p114 = scmp.eq.s32.totalorder %s17, 7
      %p115 = por %p113, %p114
      %p116 = scmp.ne.s32.totalorder %s108, %s111
      %p117 = scmp.eq.s32.totalorder %s17, 0
      %p118 = por %p116, %p117
      %p119 = scmp.ne.s32.totalorder %s108, %s111
      %p120 = scmp.eq.s32.totalorder %s22, 7
      %p121 = por %p119, %p120
      %p122 = scmp.ne.s32.totalorder %s111, %s112
      %p123 = scmp.eq.s32.totalorder %s22, 0
      %p124 = por %p122, %p123
      %p125 = scmp.ne.s32.totalorder %s111, %s112
      %p126 = scmp.eq.s32.totalorder %s23, 7
      %p127 = por %p125, %p126
      %p129 = scmp.ne.s32.totalorder %s112, %s128
      %p130 = scmp.eq.s32.totalorder %s23, 0
      %p131 = por %p129, %p130
      %p132 = scmp.le.s32.totalorder 1, %s17
      %p133 = scmp.lt.s32.totalorder %s17, 9
      %p134 = pnand %p132, %p133
      %p135 = pneg %p134
      // Predicated region
      $region9: #{pgcn_forward.11} parent=5 // pred_check
        _
      $region10: #{pgcn_forward.11} parent=5 // pred_check_branch
        %137 = sbr.rel (%p134) target = $region12
      $region11: #{pgcn_forward.11} parent=5 // pred_region
        %s138 = ssub.s32 %s17, 1
      $region12: #{pgcn_forward.11} parent=5 // pred_fallthru
        _
      %p139 = scmp.lt.s32.totalorder %s17, 8
      // Predicated region
      $region13: #{pgcn_forward.11} parent=5 // pred_check
        %p140 = pneg %p139
      $region14: #{pgcn_forward.11} parent=5 // pred_check_branch
        %142 = sbr.rel (%p140) target = $region16
      $region15: #{pgcn_forward.11} parent=5 // pred_region
        // Predicated region
        $region17: #{pgcn_forward.11} parent=15 // pred_check
          %p143 = pneg %p60
        $region18: #{pgcn_forward.11} parent=15 // pred_check_branch
          %145 = sbr.rel (%p143) target = $region20
        $region19: #{pgcn_forward.11} parent=15 // pred_region
          %s146 = sand.u32 %s50, 1
          %s147 = scalar_lea.sflag [#allocation3], %s146
          %s148 = sand.u32 %s50, 1
          %s149 = smul.addr %s148, 128
          %s150 = scalar_lea.vmem [#allocation2], %s149
          %s151 = smul.u32 16, %s25
          %s153 = ssub.s32 2048, 2048
          %154 = vsyncadd %s147, %s153
          %s155 = smul.addr %s151, 2
          %s156 = sadd.s32 %s26, %s155
          %s157 = smul.addr %s24, 64
          %s158 = sadd.s32 %s156, %s157
          %s159 = smul.addr %s158, 128
          %s160 = scalar_lea.hbm %s0, %s159
          %s161 = sshll.u32 %s150, 4
          %s162 = int_to_ptr.vmem [resolvable:$true] %s161
          %167 = dma.hbm_to_vmem [thread:$0]  %s160, 2048, %s162, %s147, 256, 128, 8
        $region20: #{pgcn_forward.11} parent=15 // pred_fallthru
          _
        // Predicated region
        $region21: #{pgcn_forward.11} parent=15 // pred_check
          %p168 = pneg %p88
        $region22: #{pgcn_forward.11} parent=15 // pred_check_branch
          %170 = sbr.rel (%p168) target = $region24
        $region23: #{pgcn_forward.11} parent=15 // pred_region
          %s171 = sand.u32 %s78, 1
          %s172 = scalar_lea.sflag [#allocation6], %s171
          %s173 = sand.u32 %s78, 1
          %s174 = smul.addr %s173, 128
          %s175 = scalar_lea.vmem [#allocation5], %s174
          %s176 = smul.u32 16, %s25
          %s178 = ssub.s32 2048, 2048
          %179 = vsyncadd %s172, %s178
          %s180 = smul.addr %s24, 32
          %s181 = sadd.s32 %s176, %s180
          %s182 = smul.addr %s181, 128
          %s183 = scalar_lea.hbm %s1, %s182
          %s184 = sshll.u32 %s175, 4
          %s185 = int_to_ptr.vmem [resolvable:$true] %s184
          %190 = dma.hbm_to_vmem [thread:$0]  %s183, 2048, %s185, %s172, 128, 128, 8
        $region24: #{pgcn_forward.11} parent=15 // pred_fallthru
          _
      $region16: #{pgcn_forward.11} parent=5 // pred_fallthru
        _
      %p191 = scmp.le.s32.totalorder 1, %s17
      %p192 = scmp.lt.s32.totalorder %s17, 9
      %p193 = pnand %p191, %p192
      %p194 = pneg %p193
      // Predicated region
      $region25: #{pgcn_forward.11} parent=5 // pred_check
        _
      $region26: #{pgcn_forward.11} parent=5 // pred_check_branch
        %196 = sbr.rel (%p193) target = $region28
      $region27: #{pgcn_forward.11} parent=5 // pred_region
        %s197 = ssub.s32 %s17, 1
        %s198 = sand.u32 %s53, 1
        %s199 = scalar_lea.sflag [#allocation3], %s198
        %s200 = sand.u32 %s53, 1
        %s201 = smul.addr %s200, 128
        %s202 = scalar_lea.vmem [#allocation2], %s201
        // Predicated region
        $region29: #{pgcn_forward.11} parent=27 // pred_check
          %p203 = pneg %p66
        $region30: #{pgcn_forward.11} parent=27 // pred_check_branch
          %205 = sbr.rel (%p203) target = $region32
        $region31: #{pgcn_forward.11} parent=27 // pred_region
          %206 = dma.done %s199, 2048
        $region32: #{pgcn_forward.11} parent=27 // pred_fallthru
          _
        %s207 = sand.u32 %s81, 1
        %s208 = scalar_lea.sflag [#allocation6], %s207
        %s209 = sand.u32 %s81, 1
        %s210 = smul.addr %s209, 128
        %s211 = scalar_lea.vmem [#allocation5], %s210
        // Predicated region
        $region33: #{pgcn_forward.11} parent=27 // pred_check
          %p212 = pneg %p94
        $region34: #{pgcn_forward.11} parent=27 // pred_check_branch
          %214 = sbr.rel (%p212) target = $region36
        $region35: #{pgcn_forward.11} parent=27 // pred_region
          %215 = dma.done %s208, 2048
        $region36: #{pgcn_forward.11} parent=27 // pred_fallthru
          _
        %s216 = sand.u32 %s53, 1
        %s217 = scalar_lea.sflag [#allocation3], %s216
        %s218 = sand.u32 %s53, 1
        %s219 = smul.addr %s218, 128
        %s220 = scalar_lea.vmem [#allocation2], %s219
        %p221 = pneg %p66
        %p222 = pneg %p63
        %s223 = sand.u32 %s81, 1
        %s224 = scalar_lea.sflag [#allocation6], %s223
        %s225 = sand.u32 %s81, 1
        %s226 = smul.addr %s225, 128
        %s227 = scalar_lea.vmem [#allocation5], %s226
        %p228 = pneg %p94
        %p229 = pneg %p91
        %p230 = pneg %p124
        %p231 = pneg %p121
        %s232 = sand.u32 %s111, 1
        %s233 = scalar_lea.sflag [#allocation4], %s232
        %s234 = sand.u32 %s111, 1
        %s235 = smul.addr %s234, 64
        %s236 = scalar_lea.vmem [#allocation7], %s235
        %s237 = smul.u32 16, %s28
        %s238 = smul.u32 16, %s28
        %s239 = smul.u32 16, %s28
        %v240 = vld [vmem:[%s202] sm:$0xff]
        %v241 = vld [vmem:[%s202 + $0x8] sm:$0xff]
        %v242 = vld [vmem:[%s202 + $0x10] sm:$0xff]
        %v243 = vld [vmem:[%s202 + $0x18] sm:$0xff]
        %v244 = vld [vmem:[%s202 + $0x20] sm:$0xff]
        %v245 = vld [vmem:[%s202 + $0x28] sm:$0xff]
        %v246 = vld [vmem:[%s202 + $0x30] sm:$0xff]
        %v247 = vld [vmem:[%s202 + $0x38] sm:$0xff]
        %v248 = vld [vmem:[%s202 + $0x40] sm:$0xff]
        %v249 = vld [vmem:[%s202 + $0x48] sm:$0xff]
        %v250 = vld [vmem:[%s202 + $0x50] sm:$0xff]
        %v251 = vld [vmem:[%s202 + $0x58] sm:$0xff]
        %v252 = vld [vmem:[%s202 + $0x60] sm:$0xff]
        %v253 = vld [vmem:[%s202 + $0x68] sm:$0xff]
        %v254 = vld [vmem:[%s202 + $0x70] sm:$0xff]
        %v255 = vld [vmem:[%s202 + $0x78] sm:$0xff]
        %v256 = vld [vmem:[%s211] sm:$0xff]
        %v257 = vld [vmem:[%s211 + $0x8] sm:$0xff]
        %v258 = vld [vmem:[%s211 + $0x10] sm:$0xff]
        %v259 = vld [vmem:[%s211 + $0x18] sm:$0xff]
        %v260 = vld [vmem:[%s211 + $0x20] sm:$0xff]
        %v261 = vld [vmem:[%s211 + $0x28] sm:$0xff]
        %v262 = vld [vmem:[%s211 + $0x30] sm:$0xff]
        %v263 = vld [vmem:[%s211 + $0x38] sm:$0xff]
        %v264 = vld [vmem:[%s211 + $0x40] sm:$0xff]
        %v265 = vld [vmem:[%s211 + $0x48] sm:$0xff]
        %v266 = vld [vmem:[%s211 + $0x50] sm:$0xff]
        %v267 = vld [vmem:[%s211 + $0x58] sm:$0xff]
        %v268 = vld [vmem:[%s211 + $0x60] sm:$0xff]
        %v269 = vld [vmem:[%s211 + $0x68] sm:$0xff]
        %v270 = vld [vmem:[%s211 + $0x70] sm:$0xff]
        %v271 = vld [vmem:[%s211 + $0x78] sm:$0xff]
        %273 = vset.pattern.permute.xlu0 0
        %274 = vperm.xlu0 %273, %v256
        %v275 = vpop.permute.xlu0 %274
        %278 = vset.pattern.permute.xlu0 0
        %279 = vperm.xlu0 %278, %v257
        %v280 = vpop.permute.xlu0 %279
        %283 = vset.pattern.permute.xlu0 0
        %284 = vperm.xlu0 %283, %v258
        %v285 = vpop.permute.xlu0 %284
        %288 = vset.pattern.permute.xlu0 0
        %289 = vperm.xlu0 %288, %v259
        %v290 = vpop.permute.xlu0 %289
        %293 = vset.pattern.permute.xlu0 0
        %294 = vperm.xlu0 %293, %v260
        %v295 = vpop.permute.xlu0 %294
        %298 = vset.pattern.permute.xlu0 0
        %299 = vperm.xlu0 %298, %v261
        %v300 = vpop.permute.xlu0 %299
        %303 = vset.pattern.permute.xlu0 0
        %304 = vperm.xlu0 %303, %v262
        %v305 = vpop.permute.xlu0 %304
        %308 = vset.pattern.permute.xlu0 0
        %309 = vperm.xlu0 %308, %v263
        %v310 = vpop.permute.xlu0 %309
        %313 = vset.pattern.permute.xlu0 0
        %314 = vperm.xlu0 %313, %v264
        %v315 = vpop.permute.xlu0 %314
        %318 = vset.pattern.permute.xlu0 0
        %319 = vperm.xlu0 %318, %v265
        %v320 = vpop.permute.xlu0 %319
        %323 = vset.pattern.permute.xlu0 0
        %324 = vperm.xlu0 %323, %v266
        %v325 = vpop.permute.xlu0 %324
        %328 = vset.pattern.permute.xlu0 0
        %329 = vperm.xlu0 %328, %v267
        %v330 = vpop.permute.xlu0 %329
        %333 = vset.pattern.permute.xlu0 0
        %334 = vperm.xlu0 %333, %v268
        %v335 = vpop.permute.xlu0 %334
        %338 = vset.pattern.permute.xlu0 0
        %339 = vperm.xlu0 %338, %v269
        %v340 = vpop.permute.xlu0 %339
        %343 = vset.pattern.permute.xlu0 0
        %344 = vperm.xlu0 %343, %v270
        %v345 = vpop.permute.xlu0 %344
        %348 = vset.pattern.permute.xlu0 0
        %349 = vperm.xlu0 %348, %v271
        %v350 = vpop.permute.xlu0 %349
        %vm352 = vcmp.ge.f32.partialorder %v240, %v275
        %vm353 = vcmp.ge.f32.partialorder %v241, %v280
        %vm354 = vcmp.ge.f32.partialorder %v242, %v285
        %vm355 = vcmp.ge.f32.partialorder %v243, %v290
        %vm356 = vcmp.ge.f32.partialorder %v244, %v295
        %vm357 = vcmp.ge.f32.partialorder %v245, %v300
        %vm358 = vcmp.ge.f32.partialorder %v246, %v305
        %vm359 = vcmp.ge.f32.partialorder %v247, %v310
        %vm360 = vcmp.ge.f32.partialorder %v248, %v315
        %vm361 = vcmp.ge.f32.partialorder %v249, %v320
        %vm362 = vcmp.ge.f32.partialorder %v250, %v325
        %vm363 = vcmp.ge.f32.partialorder %v251, %v330
        %vm364 = vcmp.ge.f32.partialorder %v252, %v335
        %vm365 = vcmp.ge.f32.partialorder %v253, %v340
        %vm366 = vcmp.ge.f32.partialorder %v254, %v345
        %vm367 = vcmp.ge.f32.partialorder %v255, %v350
        %v368 = vsel %vm352, %v240, 0.0
        %v369 = vsel %vm353, %v241, 0.0
        %v370 = vsel %vm354, %v242, 0.0
        %v371 = vsel %vm355, %v243, 0.0
        %v372 = vsel %vm356, %v244, 0.0
        %v373 = vsel %vm357, %v245, 0.0
        %v374 = vsel %vm358, %v246, 0.0
        %v375 = vsel %vm359, %v247, 0.0
        %v376 = vsel %vm360, %v248, 0.0
        %v377 = vsel %vm361, %v249, 0.0
        %v378 = vsel %vm362, %v250, 0.0
        %v379 = vsel %vm363, %v251, 0.0
        %v380 = vsel %vm364, %v252, 0.0
        %v381 = vsel %vm365, %v253, 0.0
        %v382 = vsel %vm366, %v254, 0.0
        %v383 = vsel %vm367, %v255, 0.0
        %v384 = vpack.c.bf16 %v369, %v368
        %v385 = vpack.c.bf16 %v371, %v370
        %v386 = vpack.c.bf16 %v373, %v372
        %v387 = vpack.c.bf16 %v375, %v374
        %v388 = vpack.c.bf16 %v377, %v376
        %v389 = vpack.c.bf16 %v379, %v378
        %v390 = vpack.c.bf16 %v381, %v380
        %v391 = vpack.c.bf16 %v383, %v382
        %v400 = vunpack.c.l.b16 %v384
        %v401 = vunpack.c.h.b16 %v384
        %v402 = vunpack.c.l.b16 %v385
        %v403 = vunpack.c.h.b16 %v385
        %v404 = vunpack.c.l.b16 %v386
        %v405 = vunpack.c.h.b16 %v386
        %v406 = vunpack.c.l.b16 %v387
        %v407 = vunpack.c.h.b16 %v387
        %v408 = vunpack.c.l.b16 %v388
        %v409 = vunpack.c.h.b16 %v388
        %v410 = vunpack.c.l.b16 %v389
        %v411 = vunpack.c.h.b16 %v389
        %v412 = vunpack.c.l.b16 %v390
        %v413 = vunpack.c.h.b16 %v390
        %v414 = vunpack.c.l.b16 %v391
        %v415 = vunpack.c.h.b16 %v391
        %v416 = vpack.c.b16 %v400, %v400
        %v417 = vpack.c.b16 %v401, %v401
        %v418 = vpack.c.b16 %v402, %v402
        %v419 = vpack.c.b16 %v403, %v403
        %v420 = vpack.c.b16 %v404, %v404
        %v421 = vpack.c.b16 %v405, %v405
        %v422 = vpack.c.b16 %v406, %v406
        %v423 = vpack.c.b16 %v407, %v407
        %v424 = vpack.c.b16 %v408, %v408
        %v425 = vpack.c.b16 %v409, %v409
        %v426 = vpack.c.b16 %v410, %v410
        %v427 = vpack.c.b16 %v411, %v411
        %v428 = vpack.c.b16 %v412, %v412
        %v429 = vpack.c.b16 %v413, %v413
        %v430 = vpack.c.b16 %v414, %v414
        %v431 = vpack.c.b16 %v415, %v415
        %448 = vst [vmem:[%s236] sm:$0xf] %v416
        %449 = vst [vmem:[%s236 + $0x4] sm:$0xf] %v417
        %450 = vst [vmem:[%s236 + $0x8] sm:$0xf] %v418
        %451 = vst [vmem:[%s236 + $0xc] sm:$0xf] %v419
        %452 = vst [vmem:[%s236 + $0x10] sm:$0xf] %v420
        %453 = vst [vmem:[%s236 + $0x14] sm:$0xf] %v421
        %454 = vst [vmem:[%s236 + $0x18] sm:$0xf] %v422
        %455 = vst [vmem:[%s236 + $0x1c] sm:$0xf] %v423
        %456 = vst [vmem:[%s236 + $0x20] sm:$0xf] %v424
        %457 = vst [vmem:[%s236 + $0x24] sm:$0xf] %v425
        %458 = vst [vmem:[%s236 + $0x28] sm:$0xf] %v426
        %459 = vst [vmem:[%s236 + $0x2c] sm:$0xf] %v427
        %460 = vst [vmem:[%s236 + $0x30] sm:$0xf] %v428
        %461 = vst [vmem:[%s236 + $0x34] sm:$0xf] %v429
        %462 = vst [vmem:[%s236 + $0x38] sm:$0xf] %v430
        %463 = vst [vmem:[%s236 + $0x3c] sm:$0xf] %v431
        %s464 = sand.u32 %s111, 1
        %s465 = scalar_lea.sflag [#allocation4], %s464
        %s466 = sand.u32 %s111, 1
        %s467 = smul.addr %s466, 64
        %s468 = scalar_lea.vmem [#allocation7], %s467
        // Predicated region
        $region37: #{pgcn_forward.11} parent=27 // pred_check
          %p469 = pneg %p121
        $region38: #{pgcn_forward.11} parent=27 // pred_check_branch
          %471 = sbr.rel (%p469) target = $region40
        $region39: #{pgcn_forward.11} parent=27 // pred_region
          %s472 = smul.u32 16, %s28
          %s474 = ssub.s32 1024, 1024
          %475 = vsyncadd %s465, %s474
          %s476 = smul.addr %s472, 2
          %s477 = sadd.s32 %s29, %s476
          %s478 = smul.addr %s27, 64
          %s479 = sadd.s32 %s477, %s478
          %s480 = smul.addr %s479, 64
          %s481 = scalar_lea.hbm %s2, %s480
          %s482 = sshll.u32 %s468, 4
          %s483 = int_to_ptr.vmem [resolvable:$true] %s482
          %488 = dma.vmem_to_hbm [thread:$0]  %s483, 1024, %s481, %s465, 64, 128, 4
        $region40: #{pgcn_forward.11} parent=27 // pred_fallthru
          _
      $region28: #{pgcn_forward.11} parent=5 // pred_fallthru
        _
      %p489 = scmp.le.s32.totalorder 2, %s17
      // Predicated region
      $region41: #{pgcn_forward.11} parent=5 // pred_check
        %p490 = pneg %p489
      $region42: #{pgcn_forward.11} parent=5 // pred_check_branch
        %492 = sbr.rel (%p490) target = $region44
      $region43: #{pgcn_forward.11} parent=5 // pred_region
        %s493 = ssub.s32 %s17, 2
        // Predicated region
        $region45: #{pgcn_forward.11} parent=43 // pred_check
          %p494 = pneg %p127
        $region46: #{pgcn_forward.11} parent=43 // pred_check_branch
          %496 = sbr.rel (%p494) target = $region48
        $region47: #{pgcn_forward.11} parent=43 // pred_region
          %s497 = sand.u32 %s112, 1
          %s498 = scalar_lea.sflag [#allocation4], %s497
          %s499 = sand.u32 %s112, 1
          %s500 = smul.addr %s499, 64
          %s501 = scalar_lea.vmem [#allocation7], %s500
          %502 = dma.done %s498, 1024
        $region48: #{pgcn_forward.11} parent=43 // pred_fallthru
          _
      $region44: #{pgcn_forward.11} parent=5 // pred_fallthru
        _
    $region6: #{pgcn_forward.11} parent=1 // loop_footer
      %s21 = sadd.s32 1, %s17
    $region7: #{pgcn_forward.11} parent=1 // loop_footer_branch
      %16 = sbr.rel target = $region3
    $region8: #{pgcn_forward.11} parent=1 // loop_exit
      _
    %503 = vsyncpa [#allocation3], 1
    %s504 = scalar_lea.sflag [#allocation3], 1
    %505 = vsyncpa %s504, 1
    %506 = vsyncpa [#allocation6], 1
    %s507 = scalar_lea.sflag [#allocation6], 1
    %508 = vsyncpa %s507, 1
    %509 = vsyncpa [#allocation4], 1
    %s510 = scalar_lea.sflag [#allocation4], 1
    %511 = vsyncpa %s510, 1

// kernel: pgcn_forward.13
$region0: #{pgcn_forward.13}
  #allocation0 [shape = 'u32[]', space=smem, size = 0x4, offset = 0x4, fixed_abs, tag = 'smem constant byte address 0x4 - core index']
  #allocation1 [shape = 'u32[144,128]{1,0:T(1,128)}', space=vmem, size = 0x12000, scoped, tag = 'internal scratch']
  #allocation2 [shape = 'f32[128,128]{1,0:T(8,128)}', space=vmem, size = 0x10000, scoped, tag = 'scratch operand']
  %s0 = inlined_call_operand.hbm [shape: bf16[2,256,256], index: 0, kind: input, shape index: {}]
  %s1 = inlined_call_operand.hbm [shape: bf16[2,256,128], index: 1, kind: input, shape index: {}]
  %s2 = inlined_call_operand.hbm [shape: f32[1,128], index: 2, kind: input, shape index: {}]
  %s3 = inlined_call_operand.hbm [shape: bf16[2,256,128], index: 3, kind: output, shape index: {}]
  %s4 = sld [smem:[#allocation0]]
  $region65: #{pgcn_forward.13} parent=0
    _
  %s6 = ssub.s32 1, %s4
  %s7 = scalar_select 0, %s6, %s4
  $region1: #{pgcn_forward.13} parent=0
    #allocation3 [shape = 'u8[65536]{0}', space=vmem, size = 0x10000, scoped, tag = 'input window, operand 0']
    #allocation4 [shape = 's32[2]{0}', space=sflag, size = 0x8, scoped, tag = 'scoped memory for pgcn_forward.13']
    #allocation5 [shape = 's32[2]{0}', space=sflag, size = 0x8, scoped, tag = 'scoped memory for pgcn_forward.13']
    #allocation6 [shape = 'u8[65536]{0}', space=vmem, size = 0x10000, scoped, tag = 'input window, operand 1']
    #allocation7 [shape = 's32[2]{0}', space=sflag, size = 0x8, scoped, tag = 'scoped memory for pgcn_forward.13']
    #allocation8 [shape = 'u8[512]{0}', space=vmem, size = 0x400, scoped, tag = 'input window, operand 2, single buffered']
    #allocation9 [shape = 'u8[65536]{0}', space=vmem, size = 0x10000, scoped, tag = 'output window, operand 0']
    %8 = vsyncpa [#allocation4], 0
    %s9 = scalar_lea.sflag [#allocation4], 1
    %10 = vsyncpa %s9, 0
    %11 = vsyncpa [#allocation7], 0
    %s12 = scalar_lea.sflag [#allocation7], 1
    %13 = vsyncpa %s12, 0
    %14 = vsyncpa [#allocation5], 0
    %s15 = scalar_lea.sflag [#allocation5], 1
    %16 = vsyncpa %s15, 0
    loop: start=0, step=1, limit=10
    $region2: #{pgcn_forward.13} parent=1 // loop_pre_header
      _
    $region3: #{pgcn_forward.13} parent=1 // loop_header
      %s18 = sphi 0, %s22
      %p19 = scmp.ge.s32.totalorder %s18, 10
      %s25 = sphi 0, %s44
      %s26 = sphi 0, %s40
      %s27 = sphi 0, %s36
      %s28 = sphi 0, %s25
      %s29 = sphi 0, %s26
      %s30 = sphi 0, %s27
      %s31 = sphi 0, %s28
      %s32 = sphi 0, %s29
      %s33 = sphi 0, %s30
      %s51 = sphi 0, %s53
      %s54 = sphi 0, %s51
      %s55 = sphi 0, %s54
      %s71 = sphi 0, %s55
      %s79 = sphi 0, %s81
      %s82 = sphi 0, %s79
      %s83 = sphi 0, %s82
      %s99 = sphi 0, %s83
      %s103 = sphi 0, %s103
      %s105 = sphi 0, %s103
      %s106 = sphi 0, %s105
      %s120 = sphi 0, %s106
      %s128 = sphi 0, %s130
      %s131 = sphi 0, %s128
      %s132 = sphi 0, %s131
      %s148 = sphi 0, %s132
    $region4: #{pgcn_forward.13} parent=1 // loop_header_branch
      %21 = sbr.rel (%p19) target = $region8
    $region5: #{pgcn_forward.13} parent=1 // loop_body
      %s23 = ssub.s32 %s18, 1
      %s24 = ssub.s32 %s18, 2
      %s34 = sadd.s32 1, %s27
      %p35 = scmp.ge.s32.totalorder %s34, 2
      %s36 = scalar_select %p35, 0, %s34
      %s37 = sadd.s32 1, %s26
      %s38 = scalar_select %p35, %s37, %s26
      %p39 = scmp.ge.s32.totalorder %s38, 2
      %s40 = scalar_select %p39, 0, %s38
      %s41 = sadd.s32 1, %s25
      %s42 = scalar_select %p39, %s41, %s25
      %p43 = scmp.ge.s32.totalorder %s42, 2
      %s44 = scalar_select %p43, 0, %s42
      %s45 = ssub.s32 %s25, %s44
      %s46 = ssub.s32 %s26, %s40
      %s47 = sor.u32 %s45, %s46
      %s48 = ssub.s32 %s27, %s36
      %s49 = sor.u32 %s47, %s48
      %p50 = scmp.eq.s32.totalorder %s49, 0
      %s52 = sadd.s32 %s51, 1
      %s53 = scalar_select %p50, %s51, %s52
      %p56 = pneg %p50
      %p57 = scmp.eq.s32.totalorder %s18, 7
      %p58 = por %p56, %p57
      %p59 = scmp.ne.s32.totalorder %s51, %s54
      %p60 = scmp.eq.s32.totalorder %s18, 0
      %p61 = por %p59, %p60
      %p62 = scmp.ne.s32.totalorder %s51, %s54
      %p63 = scmp.eq.s32.totalorder %s23, 7
      %p64 = por %p62, %p63
      %p65 = scmp.ne.s32.totalorder %s54, %s55
      %p66 = scmp.eq.s32.totalorder %s23, 0
      %p67 = por %p65, %p66
      %p68 = scmp.ne.s32.totalorder %s54, %s55
      %p69 = scmp.eq.s32.totalorder %s24, 7
      %p70 = por %p68, %p69
      %p72 = scmp.ne.s32.totalorder %s55, %s71
      %p73 = scmp.eq.s32.totalorder %s24, 0
      %p74 = por %p72, %p73
      %s75 = ssub.s32 %s25, %s44
      %s76 = ssub.s32 %s27, %s36
      %s77 = sor.u32 %s75, %s76
      %p78 = scmp.eq.s32.totalorder %s77, 0
      %s80 = sadd.s32 %s79, 1
      %s81 = scalar_select %p78, %s79, %s80
      %p84 = pneg %p78
      %p85 = scmp.eq.s32.totalorder %s18, 7
      %p86 = por %p84, %p85
      %p87 = scmp.ne.s32.totalorder %s79, %s82
      %p88 = scmp.eq.s32.totalorder %s18, 0
      %p89 = por %p87, %p88
      %p90 = scmp.ne.s32.totalorder %s79, %s82
      %p91 = scmp.eq.s32.totalorder %s23, 7
      %p92 = por %p90, %p91
      %p93 = scmp.ne.s32.totalorder %s82, %s83
      %p94 = scmp.eq.s32.totalorder %s23, 0
      %p95 = por %p93, %p94
      %p96 = scmp.ne.s32.totalorder %s82, %s83
      %p97 = scmp.eq.s32.totalorder %s24, 7
      %p98 = por %p96, %p97
      %p100 = scmp.ne.s32.totalorder %s83, %s99
      %p101 = scmp.eq.s32.totalorder %s24, 0
      %p102 = por %p100, %p101
      %s104 = sadd.s32 %s103, 1
      %p107 = scmp.eq.s32.totalorder %s18, 7
      %p108 = scmp.ne.s32.totalorder %s103, %s105
      %p109 = scmp.eq.s32.totalorder %s18, 0
      %p110 = por %p108, %p109
      %p111 = scmp.ne.s32.totalorder %s103, %s105
      %p112 = scmp.eq.s32.totalorder %s23, 7
      %p113 = por %p111, %p112
      %p114 = scmp.ne.s32.totalorder %s105, %s106
      %p115 = scmp.eq.s32.totalorder %s23, 0
      %p116 = por %p114, %p115
      %p117 = scmp.ne.s32.totalorder %s105, %s106
      %p118 = scmp.eq.s32.totalorder %s24, 7
      %p119 = por %p117, %p118
      %p121 = scmp.ne.s32.totalorder %s106, %s120
      %p122 = scmp.eq.s32.totalorder %s24, 0
      %p123 = por %p121, %p122
      %s124 = ssub.s32 %s25, %s44
      %s125 = ssub.s32 %s26, %s40
      %s126 = sor.u32 %s124, %s125
      %p127 = scmp.eq.s32.totalorder %s126, 0
      %s129 = sadd.s32 %s128, 1
      %s130 = scalar_select %p127, %s128, %s129
      %p133 = pneg %p127
      %p134 = scmp.eq.s32.totalorder %s18, 7
      %p135 = por %p133, %p134
      %p136 = scmp.ne.s32.totalorder %s128, %s131
      %p137 = scmp.eq.s32.totalorder %s18, 0
      %p138 = por %p136, %p137
      %p139 = scmp.ne.s32.totalorder %s128, %s131
      %p140 = scmp.eq.s32.totalorder %s23, 7
      %p141 = por %p139, %p140
      %p142 = scmp.ne.s32.totalorder %s131, %s132
      %p143 = scmp.eq.s32.totalorder %s23, 0
      %p144 = por %p142, %p143
      %p145 = scmp.ne.s32.totalorder %s131, %s132
      %p146 = scmp.eq.s32.totalorder %s24, 7
      %p147 = por %p145, %p146
      %p149 = scmp.ne.s32.totalorder %s132, %s148
      %p150 = scmp.eq.s32.totalorder %s24, 0
      %p151 = por %p149, %p150
      %p152 = scmp.le.s32.totalorder 1, %s18
      %p153 = scmp.lt.s32.totalorder %s18, 9
      %p154 = pnand %p152, %p153
      %p155 = pneg %p154
      // Predicated region
      $region9: #{pgcn_forward.13} parent=5 // pred_check
        _
      $region10: #{pgcn_forward.13} parent=5 // pred_check_branch
        %157 = sbr.rel (%p154) target = $region12
      $region11: #{pgcn_forward.13} parent=5 // pred_region
        %s158 = ssub.s32 %s18, 1
        // Predicated region
        $region13: #{pgcn_forward.13} parent=11 // pred_check
          %p159 = pneg %p116
        $region14: #{pgcn_forward.13} parent=11 // pred_check_branch
          %161 = sbr.rel (%p159) target = $region16
        $region15: #{pgcn_forward.13} parent=11 // pred_region
          %s163 = ssub.s32 16, 16
          %164 = vsyncadd [#allocation7], %s163
          %s166 = sshll.u32 [#allocation8], 4
          %s167 = int_to_ptr.vmem [resolvable:$true] %s166
          %169 = dma.hbm_to_vmem [thread:$0]  %s2, 16, %s167, [#allocation7]
        $region16: #{pgcn_forward.13} parent=11 // pred_fallthru
          _
      $region12: #{pgcn_forward.13} parent=5 // pred_fallthru
        _
      %p170 = scmp.lt.s32.totalorder %s18, 8
      // Predicated region
      $region17: #{pgcn_forward.13} parent=5 // pred_check
        %p171 = pneg %p170
      $region18: #{pgcn_forward.13} parent=5 // pred_check_branch
        %173 = sbr.rel (%p171) target = $region20
      $region19: #{pgcn_forward.13} parent=5 // pred_region
        // Predicated region
        $region21: #{pgcn_forward.13} parent=19 // pred_check
          %p174 = pneg %p61
        $region22: #{pgcn_forward.13} parent=19 // pred_check_branch
          %176 = sbr.rel (%p174) target = $region24
        $region23: #{pgcn_forward.13} parent=19 // pred_region
          %s177 = sand.u32 %s51, 1
          %s178 = scalar_lea.sflag [#allocation4], %s177
          %s179 = sand.u32 %s51, 1
          %s180 = smul.addr %s179, 64
          %s181 = scalar_lea.vmem [#allocation3], %s180
          %s182 = smul.u32 16, %s26
          %s184 = ssub.s32 1024, 1024
          %185 = vsyncadd %s178, %s184
          %s186 = smul.addr %s182, 2
          %s187 = sadd.s32 %s27, %s186
          %s188 = smul.addr %s25, 64
          %s189 = sadd.s32 %s187, %s188
          %s190 = smul.addr %s189, 64
          %s191 = scalar_lea.hbm %s0, %s190
          %s192 = sshll.u32 %s181, 4
          %s193 = int_to_ptr.vmem [resolvable:$true] %s192
          %198 = dma.hbm_to_vmem [thread:$0]  %s191, 1024, %s193, %s178, 128, 64, 4
        $region24: #{pgcn_forward.13} parent=19 // pred_fallthru
          _
        // Predicated region
        $region25: #{pgcn_forward.13} parent=19 // pred_check
          %p199 = pneg %p89
        $region26: #{pgcn_forward.13} parent=19 // pred_check_branch
          %201 = sbr.rel (%p199) target = $region28
        $region27: #{pgcn_forward.13} parent=19 // pred_region
          %s202 = sand.u32 %s18, 1
          %s203 = scalar_lea.sflag [#allocation7], %s202
          %s204 = sand.u32 %s79, 1
          %s205 = smul.addr %s204, 64
          %s206 = scalar_lea.vmem [#allocation6], %s205
          %s207 = smul.u32 16, %s27
          %s209 = ssub.s32 1024, 1024
          %210 = vsyncadd %s203, %s209
          %s211 = smul.addr %s25, 32
          %s212 = sadd.s32 %s207, %s211
          %s213 = smul.addr %s212, 64
          %s214 = scalar_lea.hbm %s1, %s213
          %s215 = sshll.u32 %s206, 4
          %s216 = int_to_ptr.vmem [resolvable:$true] %s215
          %221 = dma.hbm_to_vmem [thread:$0]  %s214, 1024, %s216, %s203, 64, 64, 4
        $region28: #{pgcn_forward.13} parent=19 // pred_fallthru
          _
      $region20: #{pgcn_forward.13} parent=5 // pred_fallthru
        _
      %p222 = scmp.le.s32.totalorder 1, %s18
      %p223 = scmp.lt.s32.totalorder %s18, 9
      %p224 = pnand %p222, %p223
      %p225 = pneg %p224
      // Predicated region
      $region29: #{pgcn_forward.13} parent=5 // pred_check
        _
      $region30: #{pgcn_forward.13} parent=5 // pred_check_branch
        %227 = sbr.rel (%p224) target = $region32
      $region31: #{pgcn_forward.13} parent=5 // pred_region
        %s228 = ssub.s32 %s18, 1
        %s229 = sand.u32 %s54, 1
        %s230 = scalar_lea.sflag [#allocation4], %s229
        %s231 = sand.u32 %s54, 1
        %s232 = smul.addr %s231, 64
        %s233 = scalar_lea.vmem [#allocation3], %s232
        // Predicated region
        $region33: #{pgcn_forward.13} parent=31 // pred_check
          %p234 = pneg %p67
        $region34: #{pgcn_forward.13} parent=31 // pred_check_branch
          %236 = sbr.rel (%p234) target = $region36
        $region35: #{pgcn_forward.13} parent=31 // pred_region
          %237 = dma.done %s230, 1024
        $region36: #{pgcn_forward.13} parent=31 // pred_fallthru
          _
        %s238 = sand.u32 %s23, 1
        %s239 = scalar_lea.sflag [#allocation7], %s238
        %s240 = sand.u32 %s82, 1
        %s241 = smul.addr %s240, 64
        %s242 = scalar_lea.vmem [#allocation6], %s241
        // Predicated region
        $region37: #{pgcn_forward.13} parent=31 // pred_check
          %p243 = pneg %p95
        $region38: #{pgcn_forward.13} parent=31 // pred_check_branch
          %245 = sbr.rel (%p243) target = $region40
        $region39: #{pgcn_forward.13} parent=31 // pred_region
          %246 = dma.done %s239, 1024
        $region40: #{pgcn_forward.13} parent=31 // pred_fallthru
          _
        // Predicated region
        $region41: #{pgcn_forward.13} parent=31 // pred_check
          %p247 = pneg %p116
        $region42: #{pgcn_forward.13} parent=31 // pred_check_branch
          %249 = sbr.rel (%p247) target = $region44
        $region43: #{pgcn_forward.13} parent=31 // pred_region
          %250 = dma.done [#allocation7], 16
        $region44: #{pgcn_forward.13} parent=31 // pred_fallthru
          _
        %s251 = sand.u32 %s54, 1
        %s252 = scalar_lea.sflag [#allocation4], %s251
        %s253 = sand.u32 %s54, 1
        %s254 = smul.addr %s253, 64
        %s255 = scalar_lea.vmem [#allocation3], %s254
        %p256 = pneg %p67
        %p257 = pneg %p64
        %s258 = sand.u32 %s23, 1
        %s259 = scalar_lea.sflag [#allocation7], %s258
        %s260 = sand.u32 %s82, 1
        %s261 = smul.addr %s260, 64
        %s262 = scalar_lea.vmem [#allocation6], %s261
        %p263 = pneg %p95
        %p264 = pneg %p92
        %p265 = pneg %p116
        %p266 = pneg %p113
        %p267 = pneg %p144
        %p268 = pneg %p141
        %s269 = sand.u32 %s131, 1
        %s270 = scalar_lea.sflag [#allocation5], %s269
        %s271 = sand.u32 %s131, 1
        %s272 = smul.addr %s271, 64
        %s273 = scalar_lea.vmem [#allocation9], %s272
        %s274 = smul.u32 16, %s29
        %s275 = smul.u32 16, %s30
        %s276 = smul.u32 16, %s29
        %p278 = scmp.eq.s32.totalorder %s30, 0
        // Predicated region
        $region45: #{pgcn_forward.13} parent=31 // pred_check
          %p279 = pneg %p278
        $region46: #{pgcn_forward.13} parent=31 // pred_check_branch
          %281 = sbr.rel (%p279) target = $region48
        $region47: #{pgcn_forward.13} parent=31 // pred_region
          %282 = vst [vmem:[#allocation2] sm:$0xff] 0.0
          %283 = vst [vmem:[#allocation2 + $0x8] sm:$0xff] 0.0
          %284 = vst [vmem:[#allocation2 + $0x10] sm:$0xff] 0.0
          %285 = vst [vmem:[#allocation2 + $0x18] sm:$0xff] 0.0
          %286 = vst [vmem:[#allocation2 + $0x20] sm:$0xff] 0.0
          %287 = vst [vmem:[#allocation2 + $0x28] sm:$0xff] 0.0
          %288 = vst [vmem:[#allocation2 + $0x30] sm:$0xff] 0.0
          %289 = vst [vmem:[#allocation2 + $0x38] sm:$0xff] 0.0
          %290 = vst [vmem:[#allocation2 + $0x40] sm:$0xff] 0.0
          %291 = vst [vmem:[#allocation2 + $0x48] sm:$0xff] 0.0
          %292 = vst [vmem:[#allocation2 + $0x50] sm:$0xff] 0.0
          %293 = vst [vmem:[#allocation2 + $0x58] sm:$0xff] 0.0
          %294 = vst [vmem:[#allocation2 + $0x60] sm:$0xff] 0.0
          %295 = vst [vmem:[#allocation2 + $0x68] sm:$0xff] 0.0
          %296 = vst [vmem:[#allocation2 + $0x70] sm:$0xff] 0.0
          %297 = vst [vmem:[#allocation2 + $0x78] sm:$0xff] 0.0
        $region48: #{pgcn_forward.13} parent=31 // pred_fallthru
          _
        %v298 = vld [vmem:[#allocation2] sm:$0xff]
        %v299 = vld [vmem:[#allocation2 + $0x8] sm:$0xff]
        %v300 = vld [vmem:[#allocation2 + $0x10] sm:$0xff]
        %v301 = vld [vmem:[#allocation2 + $0x18] sm:$0xff]
        %v302 = vld [vmem:[#allocation2 + $0x20] sm:$0xff]
        %v303 = vld [vmem:[#allocation2 + $0x28] sm:$0xff]
        %v304 = vld [vmem:[#allocation2 + $0x30] sm:$0xff]
        %v305 = vld [vmem:[#allocation2 + $0x38] sm:$0xff]
        %v306 = vld [vmem:[#allocation2 + $0x40] sm:$0xff]
        %v307 = vld [vmem:[#allocation2 + $0x48] sm:$0xff]
        %v308 = vld [vmem:[#allocation2 + $0x50] sm:$0xff]
        %v309 = vld [vmem:[#allocation2 + $0x58] sm:$0xff]
        %v310 = vld [vmem:[#allocation2 + $0x60] sm:$0xff]
        %v311 = vld [vmem:[#allocation2 + $0x68] sm:$0xff]
        %v312 = vld [vmem:[#allocation2 + $0x70] sm:$0xff]
        %v313 = vld [vmem:[#allocation2 + $0x78] sm:$0xff]
        %v314 = vld [vmem:[%s233] sm:$0xf]
        %v315 = vld [vmem:[%s233 + $0x4] sm:$0xf]
        %v316 = vld [vmem:[%s233 + $0x8] sm:$0xf]
        %v317 = vld [vmem:[%s233 + $0xc] sm:$0xf]
        %v318 = vld [vmem:[%s233 + $0x10] sm:$0xf]
        %v319 = vld [vmem:[%s233 + $0x14] sm:$0xf]
        %v320 = vld [vmem:[%s233 + $0x18] sm:$0xf]
        %v321 = vld [vmem:[%s233 + $0x1c] sm:$0xf]
        %v322 = vld [vmem:[%s233 + $0x20] sm:$0xf]
        %v323 = vld [vmem:[%s233 + $0x24] sm:$0xf]
        %v324 = vld [vmem:[%s233 + $0x28] sm:$0xf]
        %v325 = vld [vmem:[%s233 + $0x2c] sm:$0xf]
        %v326 = vld [vmem:[%s233 + $0x30] sm:$0xf]
        %v327 = vld [vmem:[%s233 + $0x34] sm:$0xf]
        %v328 = vld [vmem:[%s233 + $0x38] sm:$0xf]
        %v329 = vld [vmem:[%s233 + $0x3c] sm:$0xf]
        %v330 = vld [vmem:[%s242] sm:$0xf]
        %v331 = vld [vmem:[%s242 + $0x4] sm:$0xf]
        %v332 = vld [vmem:[%s242 + $0x8] sm:$0xf]
        %v333 = vld [vmem:[%s242 + $0xc] sm:$0xf]
        %v334 = vld [vmem:[%s242 + $0x10] sm:$0xf]
        %v335 = vld [vmem:[%s242 + $0x14] sm:$0xf]
        %v336 = vld [vmem:[%s242 + $0x18] sm:$0xf]
        %v337 = vld [vmem:[%s242 + $0x1c] sm:$0xf]
        %v338 = vld [vmem:[%s242 + $0x20] sm:$0xf]
        %v339 = vld [vmem:[%s242 + $0x24] sm:$0xf]
        %v340 = vld [vmem:[%s242 + $0x28] sm:$0xf]
        %v341 = vld [vmem:[%s242 + $0x2c] sm:$0xf]
        %v342 = vld [vmem:[%s242 + $0x30] sm:$0xf]
        %v343 = vld [vmem:[%s242 + $0x34] sm:$0xf]
        %v344 = vld [vmem:[%s242 + $0x38] sm:$0xf]
        %v345 = vld [vmem:[%s242 + $0x3c] sm:$0xf]
        %v362 = vunpack.c.l.b16 %v314
        %v363 = vunpack.c.l.b16 %v315
        %v364 = vunpack.c.l.b16 %v316
        %v365 = vunpack.c.l.b16 %v317
        %v366 = vunpack.c.l.b16 %v318
        %v367 = vunpack.c.l.b16 %v319
        %v368 = vunpack.c.l.b16 %v320
        %v369 = vunpack.c.l.b16 %v321
        %v370 = vunpack.c.l.b16 %v322
        %v371 = vunpack.c.l.b16 %v323
        %v372 = vunpack.c.l.b16 %v324
        %v373 = vunpack.c.l.b16 %v325
        %v374 = vunpack.c.l.b16 %v326
        %v375 = vunpack.c.l.b16 %v327
        %v376 = vunpack.c.l.b16 %v328
        %v377 = vunpack.c.l.b16 %v329
        %v378 = vpack.c.b16 %v363, %v362
        %v379 = vpack.c.b16 %v365, %v364
        %v380 = vpack.c.b16 %v367, %v366
        %v381 = vpack.c.b16 %v369, %v368
        %v382 = vpack.c.b16 %v371, %v370
        %v383 = vpack.c.b16 %v373, %v372
        %v384 = vpack.c.b16 %v375, %v374
        %v385 = vpack.c.b16 %v377, %v376
        %v410 = vunpack.c.l.b16 %v330
        %v411 = vunpack.c.l.b16 %v331
        %v412 = vunpack.c.l.b16 %v332
        %v413 = vunpack.c.l.b16 %v333
        %v414 = vunpack.c.l.b16 %v334
        %v415 = vunpack.c.l.b16 %v335
        %v416 = vunpack.c.l.b16 %v336
        %v417 = vunpack.c.l.b16 %v337
        %v418 = vunpack.c.l.b16 %v338
        %v419 = vunpack.c.l.b16 %v339
        %v420 = vunpack.c.l.b16 %v340
        %v421 = vunpack.c.l.b16 %v341
        %v422 = vunpack.c.l.b16 %v342
        %v423 = vunpack.c.l.b16 %v343
        %v424 = vunpack.c.l.b16 %v344
        %v425 = vunpack.c.l.b16 %v345
        %v426 = vpack.c.b16 %v411, %v410
        %v427 = vpack.c.b16 %v413, %v412
        %v428 = vpack.c.b16 %v415, %v414
        %v429 = vpack.c.b16 %v417, %v416
        %v430 = vpack.c.b16 %v419, %v418
        %v431 = vpack.c.b16 %v421, %v420
        %v432 = vpack.c.b16 %v423, %v422
        %v433 = vpack.c.b16 %v425, %v424
        %442 = vmatprep.subr.bf16.mxu0 0
        %443 = vmatpush1.bf16.msra.mxu0 %v426
        %444 = vmatprep.subr.bf16.mxu0 0
        %445 = vmatpush1.bf16.msra.mxu0 %v427
        %446 = vmatprep.subr.bf16.mxu0 0
        %447 = vmatpush1.bf16.msra.mxu0 %v428
        %448 = vmatprep.subr.bf16.mxu0 0
        %449 = vmatpush1.bf16.msra.mxu0 %v429
        %450 = vmatprep.subr.bf16.mxu0 0
        %451 = vmatpush1.bf16.msra.mxu0 %v430
        %452 = vmatprep.subr.bf16.mxu0 0
        %453 = vmatpush1.bf16.msra.mxu0 %v431
        %454 = vmatprep.subr.bf16.mxu0 0
        %455 = vmatpush1.bf16.msra.mxu0 %v432
        %456 = vmatprep.subr.bf16.mxu0 0
        %457 = vmatpush1.bf16.msra.mxu0 %v433
        %458 = vmatprep.subr.bf16.mxu0 0
        %459 = vmatpush1.bf16.msra.mxu0 0
        %460 = vmatprep.subr.bf16.mxu0 0
        %461 = vmatpush1.bf16.msra.mxu0 0
        %462 = vmatprep.subr.bf16.mxu0 0
        %463 = vmatpush1.bf16.msra.mxu0 0
        %464 = vmatprep.subr.bf16.mxu0 0
        %465 = vmatpush1.bf16.msra.mxu0 0
        %466 = vmatprep.subr.bf16.mxu0 0
        %467 = vmatpush1.bf16.msra.mxu0 0
        %468 = vmatprep.subr.bf16.mxu0 0
        %469 = vmatpush1.bf16.msra.mxu0 0
        %470 = vmatprep.subr.bf16.mxu0 0
        %471 = vmatpush1.bf16.msra.mxu0 0
        %472 = vmatprep.subr.bf16.mxu0 0
        %473 = vmatpush1.bf16.msra.mxu0 0
        %474 = vmatprep.mubr.bf16.mxu0 0
        %475 = vmatmul.mubr.bf16.gmra.mrb[0].mxu0 %v378
        %v476 = vpop.f32.mrb[0].mxu0
        %v477 = vadd.f32 0.0, %v476
        %v478 = vpop.f32.mrb[0].mxu0
        %v479 = vpop.f32.mrb[0].mxu0
        %v480 = vadd.f32 0.0, %v479
        %v481 = vpop.f32.mrb[0].mxu0
        %482 = vmatprep.mubr.bf16.mxu0 0
        %483 = vmatmul.mubr.bf16.gmra.mrb[0].mxu0 %v379
        %v484 = vpop.f32.mrb[0].mxu0
        %v485 = vadd.f32 0.0, %v484
        %v486 = vpop.f32.mrb[0].mxu0
        %v487 = vpop.f32.mrb[0].mxu0
        %v488 = vadd.f32 0.0, %v487
        %v489 = vpop.f32.mrb[0].mxu0
        %490 = vmatprep.mubr.bf16.mxu0 0
        %491 = vmatmul.mubr.bf16.gmra.mrb[0].mxu0 %v380
        %v492 = vpop.f32.mrb[0].mxu0
        %v493 = vadd.f32 0.0, %v492
        %v494 = vpop.f32.mrb[0].mxu0
        %v495 = vpop.f32.mrb[0].mxu0
        %v496 = vadd.f32 0.0, %v495
        %v497 = vpop.f32.mrb[0].mxu0
        %498 = vmatprep.mubr.bf16.mxu0 0
        %499 = vmatmul.mubr.bf16.gmra.mrb[0].mxu0 %v381
        %v500 = vpop.f32.mrb[0].mxu0
        %v501 = vadd.f32 0.0, %v500
        %v502 = vpop.f32.mrb[0].mxu0
        %v503 = vpop.f32.mrb[0].mxu0
        %v504 = vadd.f32 0.0, %v503
        %v505 = vpop.f32.mrb[0].mxu0
        %506 = vmatprep.mubr.bf16.mxu0 0
        %507 = vmatmul.mubr.bf16.gmra.mrb[0].mxu0 %v382
        %v508 = vpop.f32.mrb[0].mxu0
        %v509 = vadd.f32 0.0, %v508
        %v510 = vpop.f32.mrb[0].mxu0
        %v511 = vpop.f32.mrb[0].mxu0
        %v512 = vadd.f32 0.0, %v511
        %v513 = vpop.f32.mrb[0].mxu0
        %514 = vmatprep.mubr.bf16.mxu0 0
        %515 = vmatmul.mubr.bf16.gmra.mrb[0].mxu0 %v383
        %v516 = vpop.f32.mrb[0].mxu0
        %v517 = vadd.f32 0.0, %v516
        %v518 = vpop.f32.mrb[0].mxu0
        %v519 = vpop.f32.mrb[0].mxu0
        %v520 = vadd.f32 0.0, %v519
        %v521 = vpop.f32.mrb[0].mxu0
        %522 = vmatprep.mubr.bf16.mxu0 0
        %523 = vmatmul.mubr.bf16.gmra.mrb[0].mxu0 %v384
        %v524 = vpop.f32.mrb[0].mxu0
        %v525 = vadd.f32 0.0, %v524
        %v526 = vpop.f32.mrb[0].mxu0
        %v527 = vpop.f32.mrb[0].mxu0
        %v528 = vadd.f32 0.0, %v527
        %v529 = vpop.f32.mrb[0].mxu0
        %530 = vmatprep.mubr.bf16.mxu0 0
        %531 = vmatmul.mubr.bf16.gmra.mrb[0].mxu0 %v385
        %v532 = vpop.f32.mrb[0].mxu0
        %v533 = vadd.f32 0.0, %v532
        %v534 = vpop.f32.mrb[0].mxu0
        %v535 = vpop.f32.mrb[0].mxu0
        %v536 = vadd.f32 0.0, %v535
        %v537 = vpop.f32.mrb[0].mxu0
        %538 = vdwg.mxu0
        %v539 = vadd.f32 %v298, %v477
        %v540 = vadd.f32 %v299, %v480
        %v541 = vadd.f32 %v300, %v485
        %v542 = vadd.f32 %v301, %v488
        %v543 = vadd.f32 %v302, %v493
        %v544 = vadd.f32 %v303, %v496
        %v545 = vadd.f32 %v304, %v501
        %v546 = vadd.f32 %v305, %v504
        %v547 = vadd.f32 %v306, %v509
        %v548 = vadd.f32 %v307, %v512
        %v549 = vadd.f32 %v308, %v517
        %v550 = vadd.f32 %v309, %v520
        %v551 = vadd.f32 %v310, %v525
        %v552 = vadd.f32 %v311, %v528
        %v553 = vadd.f32 %v312, %v533
        %v554 = vadd.f32 %v313, %v536
        %555 = vst [vmem:[#allocation2] sm:$0xff] %v539
        %556 = vst [vmem:[#allocation2 + $0x8] sm:$0xff] %v540
        %557 = vst [vmem:[#allocation2 + $0x10] sm:$0xff] %v541
        %558 = vst [vmem:[#allocation2 + $0x18] sm:$0xff] %v542
        %559 = vst [vmem:[#allocation2 + $0x20] sm:$0xff] %v543
        %560 = vst [vmem:[#allocation2 + $0x28] sm:$0xff] %v544
        %561 = vst [vmem:[#allocation2 + $0x30] sm:$0xff] %v545
        %562 = vst [vmem:[#allocation2 + $0x38] sm:$0xff] %v546
        %563 = vst [vmem:[#allocation2 + $0x40] sm:$0xff] %v547
        %564 = vst [vmem:[#allocation2 + $0x48] sm:$0xff] %v548
        %565 = vst [vmem:[#allocation2 + $0x50] sm:$0xff] %v549
        %566 = vst [vmem:[#allocation2 + $0x58] sm:$0xff] %v550
        %567 = vst [vmem:[#allocation2 + $0x60] sm:$0xff] %v551
        %568 = vst [vmem:[#allocation2 + $0x68] sm:$0xff] %v552
        %569 = vst [vmem:[#allocation2 + $0x70] sm:$0xff] %v553
        %570 = vst [vmem:[#allocation2 + $0x78] sm:$0xff] %v554
        %p571 = scmp.eq.s32.totalorder %s30, 1
        // Predicated region
        $region49: #{pgcn_forward.13} parent=31 // pred_check
          %p572 = pneg %p571
        $region50: #{pgcn_forward.13} parent=31 // pred_check_branch
          %574 = sbr.rel (%p572) target = $region52
        $region51: #{pgcn_forward.13} parent=31 // pred_region
          %v575 = vld [vmem:[#allocation2] sm:$0xff]
          %v576 = vld [vmem:[#allocation2 + $0x8] sm:$0xff]
          %v577 = vld [vmem:[#allocation2 + $0x10] sm:$0xff]
          %v578 = vld [vmem:[#allocation2 + $0x18] sm:$0xff]
          %v579 = vld [vmem:[#allocation2 + $0x20] sm:$0xff]
          %v580 = vld [vmem:[#allocation2 + $0x28] sm:$0xff]
          %v581 = vld [vmem:[#allocation2 + $0x30] sm:$0xff]
          %v582 = vld [vmem:[#allocation2 + $0x38] sm:$0xff]
          %v583 = vld [vmem:[#allocation2 + $0x40] sm:$0xff]
          %v584 = vld [vmem:[#allocation2 + $0x48] sm:$0xff]
          %v585 = vld [vmem:[#allocation2 + $0x50] sm:$0xff]
          %v586 = vld [vmem:[#allocation2 + $0x58] sm:$0xff]
          %v587 = vld [vmem:[#allocation2 + $0x60] sm:$0xff]
          %v588 = vld [vmem:[#allocation2 + $0x68] sm:$0xff]
          %v589 = vld [vmem:[#allocation2 + $0x70] sm:$0xff]
          %v590 = vld [vmem:[#allocation2 + $0x78] sm:$0xff]
          %v591 = vld [vmem:[#allocation8] sm:$0x1]
          %v593 = vlaneseq
          %v594 = vshrl.u32 %v593, 7
          %v595 = vsub.s32 0, %v594
          %v596 = vrot.slane %v591, %v595
          %v598 = vadd.f32 %v575, %v596
          %v599 = vadd.f32 %v576, %v596
          %v600 = vadd.f32 %v577, %v596
          %v601 = vadd.f32 %v578, %v596
          %v602 = vadd.f32 %v579, %v596
          %v603 = vadd.f32 %v580, %v596
          %v604 = vadd.f32 %v581, %v596
          %v605 = vadd.f32 %v582, %v596
          %v606 = vadd.f32 %v583, %v596
          %v607 = vadd.f32 %v584, %v596
          %v608 = vadd.f32 %v585, %v596
          %v609 = vadd.f32 %v586, %v596
          %v610 = vadd.f32 %v587, %v596
          %v611 = vadd.f32 %v588, %v596
          %v612 = vadd.f32 %v589, %v596
          %v613 = vadd.f32 %v590, %v596
          %v614 = vmax.f32 %v598, 0.0
          %v615 = vmax.f32 %v599, 0.0
          %v616 = vmax.f32 %v600, 0.0
          %v617 = vmax.f32 %v601, 0.0
          %v618 = vmax.f32 %v602, 0.0
          %v619 = vmax.f32 %v603, 0.0
          %v620 = vmax.f32 %v604, 0.0
          %v621 = vmax.f32 %v605, 0.0
          %v622 = vmax.f32 %v606, 0.0
          %v623 = vmax.f32 %v607, 0.0
          %v624 = vmax.f32 %v608, 0.0
          %v625 = vmax.f32 %v609, 0.0
          %v626 = vmax.f32 %v610, 0.0
          %v627 = vmax.f32 %v611, 0.0
          %v628 = vmax.f32 %v612, 0.0
          %v629 = vmax.f32 %v613, 0.0
          %v630 = vpack.c.bf16 %v615, %v614
          %v631 = vpack.c.bf16 %v617, %v616
          %v632 = vpack.c.bf16 %v619, %v618
          %v633 = vpack.c.bf16 %v621, %v620
          %v634 = vpack.c.bf16 %v623, %v622
          %v635 = vpack.c.bf16 %v625, %v624
          %v636 = vpack.c.bf16 %v627, %v626
          %v637 = vpack.c.bf16 %v629, %v628
          %v646 = vunpack.c.l.b16 %v630
          %v647 = vunpack.c.h.b16 %v630
          %v648 = vunpack.c.l.b16 %v631
          %v649 = vunpack.c.h.b16 %v631
          %v650 = vunpack.c.l.b16 %v632
          %v651 = vunpack.c.h.b16 %v632
          %v652 = vunpack.c.l.b16 %v633
          %v653 = vunpack.c.h.b16 %v633
          %v654 = vunpack.c.l.b16 %v634
          %v655 = vunpack.c.h.b16 %v634
          %v656 = vunpack.c.l.b16 %v635
          %v657 = vunpack.c.h.b16 %v635
          %v658 = vunpack.c.l.b16 %v636
          %v659 = vunpack.c.h.b16 %v636
          %v660 = vunpack.c.l.b16 %v637
          %v661 = vunpack.c.h.b16 %v637
          %v662 = vpack.c.b16 %v646, %v646
          %v663 = vpack.c.b16 %v647, %v647
          %v664 = vpack.c.b16 %v648, %v648
          %v665 = vpack.c.b16 %v649, %v649
          %v666 = vpack.c.b16 %v650, %v650
          %v667 = vpack.c.b16 %v651, %v651
          %v668 = vpack.c.b16 %v652, %v652
          %v669 = vpack.c.b16 %v653, %v653
          %v670 = vpack.c.b16 %v654, %v654
          %v671 = vpack.c.b16 %v655, %v655
          %v672 = vpack.c.b16 %v656, %v656
          %v673 = vpack.c.b16 %v657, %v657
          %v674 = vpack.c.b16 %v658, %v658
          %v675 = vpack.c.b16 %v659, %v659
          %v676 = vpack.c.b16 %v660, %v660
          %v677 = vpack.c.b16 %v661, %v661
          %694 = vst [vmem:[%s273] sm:$0xf] %v662
          %695 = vst [vmem:[%s273 + $0x4] sm:$0xf] %v663
          %696 = vst [vmem:[%s273 + $0x8] sm:$0xf] %v664
          %697 = vst [vmem:[%s273 + $0xc] sm:$0xf] %v665
          %698 = vst [vmem:[%s273 + $0x10] sm:$0xf] %v666
          %699 = vst [vmem:[%s273 + $0x14] sm:$0xf] %v667
          %700 = vst [vmem:[%s273 + $0x18] sm:$0xf] %v668
          %701 = vst [vmem:[%s273 + $0x1c] sm:$0xf] %v669
          %702 = vst [vmem:[%s273 + $0x20] sm:$0xf] %v670
          %703 = vst [vmem:[%s273 + $0x24] sm:$0xf] %v671
          %704 = vst [vmem:[%s273 + $0x28] sm:$0xf] %v672
          %705 = vst [vmem:[%s273 + $0x2c] sm:$0xf] %v673
          %706 = vst [vmem:[%s273 + $0x30] sm:$0xf] %v674
          %707 = vst [vmem:[%s273 + $0x34] sm:$0xf] %v675
          %708 = vst [vmem:[%s273 + $0x38] sm:$0xf] %v676
          %709 = vst [vmem:[%s273 + $0x3c] sm:$0xf] %v677
        $region52: #{pgcn_forward.13} parent=31 // pred_fallthru
          _
        %s710 = sand.u32 %s131, 1
        %s711 = scalar_lea.sflag [#allocation5], %s710
        %s712 = sand.u32 %s131, 1
        %s713 = smul.addr %s712, 64
        %s714 = scalar_lea.vmem [#allocation9], %s713
        // Predicated region
        $region53: #{pgcn_forward.13} parent=31 // pred_check
          %p715 = pneg %p141
        $region54: #{pgcn_forward.13} parent=31 // pred_check_branch
          %717 = sbr.rel (%p715) target = $region56
        $region55: #{pgcn_forward.13} parent=31 // pred_region
          %s718 = smul.u32 16, %s29
          %s720 = ssub.s32 1024, 1024
          %721 = vsyncadd %s711, %s720
          %s722 = smul.addr %s28, 32
          %s723 = sadd.s32 %s718, %s722
          %s724 = smul.addr %s723, 64
          %s725 = scalar_lea.hbm %s3, %s724
          %s726 = sshll.u32 %s714, 4
          %s727 = int_to_ptr.vmem [resolvable:$true] %s726
          %732 = dma.vmem_to_hbm [thread:$0]  %s727, 1024, %s725, %s711, 64, 64, 4
        $region56: #{pgcn_forward.13} parent=31 // pred_fallthru
          _
      $region32: #{pgcn_forward.13} parent=5 // pred_fallthru
        _
      %p733 = scmp.le.s32.totalorder 2, %s18
      // Predicated region
      $region57: #{pgcn_forward.13} parent=5 // pred_check
        %p734 = pneg %p733
      $region58: #{pgcn_forward.13} parent=5 // pred_check_branch
        %736 = sbr.rel (%p734) target = $region60
      $region59: #{pgcn_forward.13} parent=5 // pred_region
        %s737 = ssub.s32 %s18, 2
        // Predicated region
        $region61: #{pgcn_forward.13} parent=59 // pred_check
          %p738 = pneg %p147
        $region62: #{pgcn_forward.13} parent=59 // pred_check_branch
          %740 = sbr.rel (%p738) target = $region64
        $region63: #{pgcn_forward.13} parent=59 // pred_region
          %s741 = sand.u32 %s132, 1
          %s742 = scalar_lea.sflag [#allocation5], %s741
          %s743 = sand.u32 %s132, 1
          %s744 = smul.addr %s743, 64
          %s745 = scalar_lea.vmem [#allocation9], %s744
          %746 = dma.done %s742, 1024
        $region64: #{pgcn_forward.13} parent=59 // pred_fallthru
          _
      $region60: #{pgcn_forward.13} parent=5 // pred_fallthru
        _
    $region6: #{pgcn_forward.13} parent=1 // loop_footer
      %s22 = sadd.s32 1, %s18
    $region7: #{pgcn_forward.13} parent=1 // loop_footer_branch
      %17 = sbr.rel target = $region3
    $region8: #{pgcn_forward.13} parent=1 // loop_exit
      _
    %747 = vsyncpa [#allocation4], 1
    %s748 = scalar_lea.sflag [#allocation4], 1
    %749 = vsyncpa %s748, 1
    %750 = vsyncpa [#allocation7], 1
    %s751 = scalar_lea.sflag [#allocation7], 1
    %752 = vsyncpa %s751, 1
    %753 = vsyncpa [#allocation5], 1
    %s754 = scalar_lea.sflag [#allocation5], 1
    %755 = vsyncpa %s754, 1

// kernel: pgcn_forward.14
$region0: #{pgcn_forward.14}
  #allocation0 [shape = 'u32[]', space=smem, size = 0x4, offset = 0x4, fixed_abs, tag = 'smem constant byte address 0x4 - core index']
  #allocation1 [shape = 'u32[144,128]{1,0:T(1,128)}', space=vmem, size = 0x12000, scoped, tag = 'internal scratch']
  %s0 = inlined_call_operand.hbm [shape: bf16[2,256,128], index: 0, kind: input, shape index: {}]
  %s1 = inlined_call_operand.hbm [shape: bf16[128,128], index: 1, kind: input, shape index: {}]
  %s2 = inlined_call_operand.hbm [shape: bf16[2,256,128], index: 2, kind: output, shape index: {}]
  %s3 = sld [smem:[#allocation0]]
  $region49: #{pgcn_forward.14} parent=0
    _
  %s5 = ssub.s32 1, %s3
  %s6 = scalar_select 0, %s5, %s3
  $region1: #{pgcn_forward.14} parent=0
    #allocation2 [shape = 'u8[65536]{0}', space=vmem, size = 0x10000, scoped, tag = 'input window, operand 0']
    #allocation3 [shape = 's32[2]{0}', space=sflag, size = 0x8, scoped, tag = 'scoped memory for pgcn_forward.14']
    #allocation4 [shape = 's32[2]{0}', space=sflag, size = 0x8, scoped, tag = 'scoped memory for pgcn_forward.14']
    #allocation5 [shape = 'u8[32768]{0}', space=vmem, size = 0x8000, scoped, tag = 'input window, operand 1, single buffered']
    #allocation6 [shape = 's32[1]{0}', space=sflag, size = 0x4, scoped, tag = 'scoped memory for pgcn_forward.14']
    #allocation7 [shape = 'u8[65536]{0}', space=vmem, size = 0x10000, scoped, tag = 'output window, operand 0']
    %7 = vsyncpa [#allocation3], 0
    %s8 = scalar_lea.sflag [#allocation3], 1
    %9 = vsyncpa %s8, 0
    %10 = vsyncpa [#allocation6], 0
    %11 = vsyncpa [#allocation4], 0
    %s12 = scalar_lea.sflag [#allocation4], 1
    %13 = vsyncpa %s12, 0
    loop: start=0, step=1, limit=6
    $region2: #{pgcn_forward.14} parent=1 // loop_pre_header
      _
    $region3: #{pgcn_forward.14} parent=1 // loop_header
      %s15 = sphi 0, %s19
      %p16 = scmp.ge.s32.totalorder %s15, 6
      %s22 = sphi 0, %s34
      %s23 = sphi 0, %s30
      %s24 = sphi 0, %s22
      %s25 = sphi 0, %s23
      %s26 = sphi 0, %s24
      %s27 = sphi 0, %s25
      %s39 = sphi 0, %s41
      %s42 = sphi 0, %s39
      %s43 = sphi 0, %s42
      %s59 = sphi 0, %s43
      %s63 = sphi 0, %s63
      %s65 = sphi 0, %s63
      %s66 = sphi 0, %s65
      %s80 = sphi 0, %s66
      %s88 = sphi 0, %s90
      %s91 = sphi 0, %s88
      %s92 = sphi 0, %s91
      %s108 = sphi 0, %s92
    $region4: #{pgcn_forward.14} parent=1 // loop_header_branch
      %18 = sbr.rel (%p16) target = $region8
    $region5: #{pgcn_forward.14} parent=1 // loop_body
      %s20 = ssub.s32 %s15, 1
      %s21 = ssub.s32 %s15, 2
      %s28 = sadd.s32 1, %s23
      %p29 = scmp.ge.s32.totalorder %s28, 2
      %s30 = scalar_select %p29, 0, %s28
      %s31 = sadd.s32 1, %s22
      %s32 = scalar_select %p29, %s31, %s22
      %p33 = scmp.ge.s32.totalorder %s32, 2
      %s34 = scalar_select %p33, 0, %s32
      %s35 = ssub.s32 %s22, %s34
      %s36 = ssub.s32 %s23, %s30
      %s37 = sor.u32 %s35, %s36
      %p38 = scmp.eq.s32.totalorder %s37, 0
      %s40 = sadd.s32 %s39, 1
      %s41 = scalar_select %p38, %s39, %s40
      %p44 = pneg %p38
      %p45 = scmp.eq.s32.totalorder %s15, 3
      %p46 = por %p44, %p45
      %p47 = scmp.ne.s32.totalorder %s39, %s42
      %p48 = scmp.eq.s32.totalorder %s15, 0
      %p49 = por %p47, %p48
      %p50 = scmp.ne.s32.totalorder %s39, %s42
      %p51 = scmp.eq.s32.totalorder %s20, 3
      %p52 = por %p50, %p51
      %p53 = scmp.ne.s32.totalorder %s42, %s43
      %p54 = scmp.eq.s32.totalorder %s20, 0
      %p55 = por %p53, %p54
      %p56 = scmp.ne.s32.totalorder %s42, %s43
      %p57 = scmp.eq.s32.totalorder %s21, 3
      %p58 = por %p56, %p57
      %p60 = scmp.ne.s32.totalorder %s43, %s59
      %p61 = scmp.eq.s32.totalorder %s21, 0
      %p62 = por %p60, %p61
      %s64 = sadd.s32 %s63, 1
      %p67 = scmp.eq.s32.totalorder %s15, 3
      %p68 = scmp.ne.s32.totalorder %s63, %s65
      %p69 = scmp.eq.s32.totalorder %s15, 0
      %p70 = por %p68, %p69
      %p71 = scmp.ne.s32.totalorder %s63, %s65
      %p72 = scmp.eq.s32.totalorder %s20, 3
      %p73 = por %p71, %p72
      %p74 = scmp.ne.s32.totalorder %s65, %s66
      %p75 = scmp.eq.s32.totalorder %s20, 0
      %p76 = por %p74, %p75
      %p77 = scmp.ne.s32.totalorder %s65, %s66
      %p78 = scmp.eq.s32.totalorder %s21, 3
      %p79 = por %p77, %p78
      %p81 = scmp.ne.s32.totalorder %s66, %s80
      %p82 = scmp.eq.s32.totalorder %s21, 0
      %p83 = por %p81, %p82
      %s84 = ssub.s32 %s22, %s34
      %s85 = ssub.s32 %s23, %s30
      %s86 = sor.u32 %s84, %s85
      %p87 = scmp.eq.s32.totalorder %s86, 0
      %s89 = sadd.s32 %s88, 1
      %s90 = scalar_select %p87, %s88, %s89
      %p93 = pneg %p87
      %p94 = scmp.eq.s32.totalorder %s15, 3
      %p95 = por %p93, %p94
      %p96 = scmp.ne.s32.totalorder %s88, %s91
      %p97 = scmp.eq.s32.totalorder %s15, 0
      %p98 = por %p96, %p97
      %p99 = scmp.ne.s32.totalorder %s88, %s91
      %p100 = scmp.eq.s32.totalorder %s20, 3
      %p101 = por %p99, %p100
      %p102 = scmp.ne.s32.totalorder %s91, %s92
      %p103 = scmp.eq.s32.totalorder %s20, 0
      %p104 = por %p102, %p103
      %p105 = scmp.ne.s32.totalorder %s91, %s92
      %p106 = scmp.eq.s32.totalorder %s21, 3
      %p107 = por %p105, %p106
      %p109 = scmp.ne.s32.totalorder %s92, %s108
      %p110 = scmp.eq.s32.totalorder %s21, 0
      %p111 = por %p109, %p110
      %p112 = scmp.le.s32.totalorder 1, %s15
      %p113 = scmp.lt.s32.totalorder %s15, 5
      %p114 = pnand %p112, %p113
      %p115 = pneg %p114
      // Predicated region
      $region9: #{pgcn_forward.14} parent=5 // pred_check
        _
      $region10: #{pgcn_forward.14} parent=5 // pred_check_branch
        %117 = sbr.rel (%p114) target = $region12
      $region11: #{pgcn_forward.14} parent=5 // pred_region
        %s118 = ssub.s32 %s15, 1
        // Predicated region
        $region13: #{pgcn_forward.14} parent=11 // pred_check
          %p119 = pneg %p76
        $region14: #{pgcn_forward.14} parent=11 // pred_check_branch
          %121 = sbr.rel (%p119) target = $region16
        $region15: #{pgcn_forward.14} parent=11 // pred_region
          %s123 = ssub.s32 1024, 1024
          %124 = vsyncadd [#allocation6], %s123
          %s125 = sshll.u32 [#allocation5], 4
          %s126 = int_to_ptr.vmem [resolvable:$true] %s125
          %131 = dma.hbm_to_vmem [thread:$0]  %s1, 1024, %s126, [#allocation6], 64, 64, 4
        $region16: #{pgcn_forward.14} parent=11 // pred_fallthru
          _
      $region12: #{pgcn_forward.14} parent=5 // pred_fallthru
        _
      %p132 = scmp.lt.s32.totalorder %s15, 4
      // Predicated region
      $region17: #{pgcn_forward.14} parent=5 // pred_check
        %p133 = pneg %p132
      $region18: #{pgcn_forward.14} parent=5 // pred_check_branch
        %135 = sbr.rel (%p133) target = $region20
      $region19: #{pgcn_forward.14} parent=5 // pred_region
        // Predicated region
        $region21: #{pgcn_forward.14} parent=19 // pred_check
          %p136 = pneg %p49
        $region22: #{pgcn_forward.14} parent=19 // pred_check_branch
          %138 = sbr.rel (%p136) target = $region24
        $region23: #{pgcn_forward.14} parent=19 // pred_region
          %s139 = sand.u32 %s39, 1
          %s140 = scalar_lea.sflag [#allocation3], %s139
          %s141 = sand.u32 %s39, 1
          %s142 = smul.addr %s141, 64
          %s143 = scalar_lea.vmem [#allocation2], %s142
          %s144 = smul.u32 16, %s23
          %s146 = ssub.s32 1024, 1024
          %147 = vsyncadd %s140, %s146
          %s148 = smul.addr %s22, 32
          %s149 = sadd.s32 %s144, %s148
          %s150 = smul.addr %s149, 64
          %s151 = scalar_lea.hbm %s0, %s150
          %s152 = sshll.u32 %s143, 4
          %s153 = int_to_ptr.vmem [resolvable:$true] %s152
          %158 = dma.hbm_to_vmem [thread:$0]  %s151, 1024, %s153, %s140, 64, 64, 4
        $region24: #{pgcn_forward.14} parent=19 // pred_fallthru
          _
      $region20: #{pgcn_forward.14} parent=5 // pred_fallthru
        _
      %p159 = scmp.le.s32.totalorder 1, %s15
      %p160 = scmp.lt.s32.totalorder %s15, 5
      %p161 = pnand %p159, %p160
      %p162 = pneg %p161
      // Predicated region
      $region25: #{pgcn_forward.14} parent=5 // pred_check
        _
      $region26: #{pgcn_forward.14} parent=5 // pred_check_branch
        %164 = sbr.rel (%p161) target = $region28
      $region27: #{pgcn_forward.14} parent=5 // pred_region
        %s165 = ssub.s32 %s15, 1
        %s166 = sand.u32 %s42, 1
        %s167 = scalar_lea.sflag [#allocation3], %s166
        %s168 = sand.u32 %s42, 1
        %s169 = smul.addr %s168, 64
        %s170 = scalar_lea.vmem [#allocation2], %s169
        // Predicated region
        $region29: #{pgcn_forward.14} parent=27 // pred_check
          %p171 = pneg %p55
        $region30: #{pgcn_forward.14} parent=27 // pred_check_branch
          %173 = sbr.rel (%p171) target = $region32
        $region31: #{pgcn_forward.14} parent=27 // pred_region
          %174 = dma.done %s167, 1024
        $region32: #{pgcn_forward.14} parent=27 // pred_fallthru
          _
        // Predicated region
        $region33: #{pgcn_forward.14} parent=27 // pred_check
          %p175 = pneg %p76
        $region34: #{pgcn_forward.14} parent=27 // pred_check_branch
          %177 = sbr.rel (%p175) target = $region36
        $region35: #{pgcn_forward.14} parent=27 // pred_region
          %178 = dma.done [#allocation6], 1024
        $region36: #{pgcn_forward.14} parent=27 // pred_fallthru
          _
        %s179 = sand.u32 %s42, 1
        %s180 = scalar_lea.sflag [#allocation3], %s179
        %s181 = sand.u32 %s42, 1
        %s182 = smul.addr %s181, 64
        %s183 = scalar_lea.vmem [#allocation2], %s182
        %p184 = pneg %p55
        %p185 = pneg %p52
        %p186 = pneg %p76
        %p187 = pneg %p73
        %p188 = pneg %p104
        %p189 = pneg %p101
        %s190 = sand.u32 %s91, 1
        %s191 = scalar_lea.sflag [#allocation4], %s190
        %s192 = sand.u32 %s91, 1
        %s193 = smul.addr %s192, 64
        %s194 = scalar_lea.vmem [#allocation7], %s193
        %s195 = smul.u32 16, %s25
        %s196 = smul.u32 16, %s25
        %v198 = vld [vmem:[%s170] sm:$0xf]
        %v199 = vld [vmem:[%s170 + $0x4] sm:$0xf]
        %v200 = vld [vmem:[%s170 + $0x8] sm:$0xf]
        %v201 = vld [vmem:[%s170 + $0xc] sm:$0xf]
        %v202 = vld [vmem:[%s170 + $0x10] sm:$0xf]
        %v203 = vld [vmem:[%s170 + $0x14] sm:$0xf]
        %v204 = vld [vmem:[%s170 + $0x18] sm:$0xf]
        %v205 = vld [vmem:[%s170 + $0x1c] sm:$0xf]
        %v206 = vld [vmem:[%s170 + $0x20] sm:$0xf]
        %v207 = vld [vmem:[%s170 + $0x24] sm:$0xf]
        %v208 = vld [vmem:[%s170 + $0x28] sm:$0xf]
        %v209 = vld [vmem:[%s170 + $0x2c] sm:$0xf]
        %v210 = vld [vmem:[%s170 + $0x30] sm:$0xf]
        %v211 = vld [vmem:[%s170 + $0x34] sm:$0xf]
        %v212 = vld [vmem:[%s170 + $0x38] sm:$0xf]
        %v213 = vld [vmem:[%s170 + $0x3c] sm:$0xf]
        %v214 = vld [vmem:[#allocation5] sm:$0xf]
        %v215 = vld [vmem:[#allocation5 + $0x4] sm:$0xf]
        %v216 = vld [vmem:[#allocation5 + $0x8] sm:$0xf]
        %v217 = vld [vmem:[#allocation5 + $0xc] sm:$0xf]
        %v218 = vld [vmem:[#allocation5 + $0x10] sm:$0xf]
        %v219 = vld [vmem:[#allocation5 + $0x14] sm:$0xf]
        %v220 = vld [vmem:[#allocation5 + $0x18] sm:$0xf]
        %v221 = vld [vmem:[#allocation5 + $0x1c] sm:$0xf]
        %v222 = vld [vmem:[#allocation5 + $0x20] sm:$0xf]
        %v223 = vld [vmem:[#allocation5 + $0x24] sm:$0xf]
        %v224 = vld [vmem:[#allocation5 + $0x28] sm:$0xf]
        %v225 = vld [vmem:[#allocation5 + $0x2c] sm:$0xf]
        %v226 = vld [vmem:[#allocation5 + $0x30] sm:$0xf]
        %v227 = vld [vmem:[#allocation5 + $0x34] sm:$0xf]
        %v228 = vld [vmem:[#allocation5 + $0x38] sm:$0xf]
        %v229 = vld [vmem:[#allocation5 + $0x3c] sm:$0xf]
        %v246 = vunpack.c.l.b16 %v198
        %v247 = vunpack.c.l.b16 %v199
        %v248 = vunpack.c.l.b16 %v200
        %v249 = vunpack.c.l.b16 %v201
        %v250 = vunpack.c.l.b16 %v202
        %v251 = vunpack.c.l.b16 %v203
        %v252 = vunpack.c.l.b16 %v204
        %v253 = vunpack.c.l.b16 %v205
        %v254 = vunpack.c.l.b16 %v206
        %v255 = vunpack.c.l.b16 %v207
        %v256 = vunpack.c.l.b16 %v208
        %v257 = vunpack.c.l.b16 %v209
        %v258 = vunpack.c.l.b16 %v210
        %v259 = vunpack.c.l.b16 %v211
        %v260 = vunpack.c.l.b16 %v212
        %v261 = vunpack.c.l.b16 %v213
        %v262 = vpack.c.b16 %v247, %v246
        %v263 = vpack.c.b16 %v249, %v248
        %v264 = vpack.c.b16 %v251, %v250
        %v265 = vpack.c.b16 %v253, %v252
        %v266 = vpack.c.b16 %v255, %v254
        %v267 = vpack.c.b16 %v257, %v256
        %v268 = vpack.c.b16 %v259, %v258
        %v269 = vpack.c.b16 %v261, %v260
        %v294 = vunpack.c.l.b16 %v214
        %v295 = vunpack.c.l.b16 %v215
        %v296 = vunpack.c.l.b16 %v216
        %v297 = vunpack.c.l.b16 %v217
        %v298 = vunpack.c.l.b16 %v218
        %v299 = vunpack.c.l.b16 %v219
        %v300 = vunpack.c.l.b16 %v220
        %v301 = vunpack.c.l.b16 %v221
        %v302 = vunpack.c.l.b16 %v222
        %v303 = vunpack.c.l.b16 %v223
        %v304 = vunpack.c.l.b16 %v224
        %v305 = vunpack.c.l.b16 %v225
        %v306 = vunpack.c.l.b16 %v226
        %v307 = vunpack.c.l.b16 %v227
        %v308 = vunpack.c.l.b16 %v228
        %v309 = vunpack.c.l.b16 %v229
        %v310 = vpack.c.b16 %v295, %v294
        %v311 = vpack.c.b16 %v297, %v296
        %v312 = vpack.c.b16 %v299, %v298
        %v313 = vpack.c.b16 %v301, %v300
        %v314 = vpack.c.b16 %v303, %v302
        %v315 = vpack.c.b16 %v305, %v304
        %v316 = vpack.c.b16 %v307, %v306
        %v317 = vpack.c.b16 %v309, %v308
        %326 = vmatprep.subr.bf16.mxu0 0
        %327 = vmatpush1.bf16.msra.mxu0 %v310
        %328 = vmatprep.subr.bf16.mxu0 0
        %329 = vmatpush1.bf16.msra.mxu0 %v311
        %330 = vmatprep.subr.bf16.mxu0 0
        %331 = vmatpush1.bf16.msra.mxu0 %v312
        %332 = vmatprep.subr.bf16.mxu0 0
        %333 = vmatpush1.bf16.msra.mxu0 %v313
        %334 = vmatprep.subr.bf16.mxu0 0
        %335 = vmatpush1.bf16.msra.mxu0 %v314
        %336 = vmatprep.subr.bf16.mxu0 0
        %337 = vmatpush1.bf16.msra.mxu0 %v315
        %338 = vmatprep.subr.bf16.mxu0 0
        %339 = vmatpush1.bf16.msra.mxu0 %v316
        %340 = vmatprep.subr.bf16.mxu0 0
        %341 = vmatpush1.bf16.msra.mxu0 %v317
        %342 = vmatprep.subr.bf16.mxu0 0
        %343 = vmatpush1.bf16.msra.mxu0 0
        %344 = vmatprep.subr.bf16.mxu0 0
        %345 = vmatpush1.bf16.msra.mxu0 0
        %346 = vmatprep.subr.bf16.mxu0 0
        %347 = vmatpush1.bf16.msra.mxu0 0
        %348 = vmatprep.subr.bf16.mxu0 0
        %349 = vmatpush1.bf16.msra.mxu0 0
        %350 = vmatprep.subr.bf16.mxu0 0
        %351 = vmatpush1.bf16.msra.mxu0 0
        %352 = vmatprep.subr.bf16.mxu0 0
        %353 = vmatpush1.bf16.msra.mxu0 0
        %354 = vmatprep.subr.bf16.mxu0 0
        %355 = vmatpush1.bf16.msra.mxu0 0
        %356 = vmatprep.subr.bf16.mxu0 0
        %357 = vmatpush1.bf16.msra.mxu0 0
        %358 = vmatprep.mubr.bf16.mxu0 0
        %359 = vmatmul.mubr.bf16.gmra.mrb[0].mxu0 %v262
        %v360 = vpop.f32.mrb[0].mxu0
        %v361 = vadd.f32 0.0, %v360
        %v362 = vpop.f32.mrb[0].mxu0
        %v363 = vpop.f32.mrb[0].mxu0
        %v364 = vadd.f32 0.0, %v363
        %v365 = vpop.f32.mrb[0].mxu0
        %366 = vmatprep.mubr.bf16.mxu0 0
        %367 = vmatmul.mubr.bf16.gmra.mrb[0].mxu0 %v263
        %v368 = vpop.f32.mrb[0].mxu0
        %v369 = vadd.f32 0.0, %v368
        %v370 = vpop.f32.mrb[0].mxu0
        %v371 = vpop.f32.mrb[0].mxu0
        %v372 = vadd.f32 0.0, %v371
        %v373 = vpop.f32.mrb[0].mxu0
        %374 = vmatprep.mubr.bf16.mxu0 0
        %375 = vmatmul.mubr.bf16.gmra.mrb[0].mxu0 %v264
        %v376 = vpop.f32.mrb[0].mxu0
        %v377 = vadd.f32 0.0, %v376
        %v378 = vpop.f32.mrb[0].mxu0
        %v379 = vpop.f32.mrb[0].mxu0
        %v380 = vadd.f32 0.0, %v379
        %v381 = vpop.f32.mrb[0].mxu0
        %382 = vmatprep.mubr.bf16.mxu0 0
        %383 = vmatmul.mubr.bf16.gmra.mrb[0].mxu0 %v265
        %v384 = vpop.f32.mrb[0].mxu0
        %v385 = vadd.f32 0.0, %v384
        %v386 = vpop.f32.mrb[0].mxu0
        %v387 = vpop.f32.mrb[0].mxu0
        %v388 = vadd.f32 0.0, %v387
        %v389 = vpop.f32.mrb[0].mxu0
        %390 = vmatprep.mubr.bf16.mxu0 0
        %391 = vmatmul.mubr.bf16.gmra.mrb[0].mxu0 %v266
        %v392 = vpop.f32.mrb[0].mxu0
        %v393 = vadd.f32 0.0, %v392
        %v394 = vpop.f32.mrb[0].mxu0
        %v395 = vpop.f32.mrb[0].mxu0
        %v396 = vadd.f32 0.0, %v395
        %v397 = vpop.f32.mrb[0].mxu0
        %398 = vmatprep.mubr.bf16.mxu0 0
        %399 = vmatmul.mubr.bf16.gmra.mrb[0].mxu0 %v267
        %v400 = vpop.f32.mrb[0].mxu0
        %v401 = vadd.f32 0.0, %v400
        %v402 = vpop.f32.mrb[0].mxu0
        %v403 = vpop.f32.mrb[0].mxu0
        %v404 = vadd.f32 0.0, %v403
        %v405 = vpop.f32.mrb[0].mxu0
        %406 = vmatprep.mubr.bf16.mxu0 0
        %407 = vmatmul.mubr.bf16.gmra.mrb[0].mxu0 %v268
        %v408 = vpop.f32.mrb[0].mxu0
        %v409 = vadd.f32 0.0, %v408
        %v410 = vpop.f32.mrb[0].mxu0
        %v411 = vpop.f32.mrb[0].mxu0
        %v412 = vadd.f32 0.0, %v411
        %v413 = vpop.f32.mrb[0].mxu0
        %414 = vmatprep.mubr.bf16.mxu0 0
        %415 = vmatmul.mubr.bf16.gmra.mrb[0].mxu0 %v269
        %v416 = vpop.f32.mrb[0].mxu0
        %v417 = vadd.f32 0.0, %v416
        %v418 = vpop.f32.mrb[0].mxu0
        %v419 = vpop.f32.mrb[0].mxu0
        %v420 = vadd.f32 0.0, %v419
        %v421 = vpop.f32.mrb[0].mxu0
        %422 = vdwg.mxu0
        %v423 = vpack.c.bf16 %v364, %v361
        %v424 = vpack.c.bf16 %v372, %v369
        %v425 = vpack.c.bf16 %v380, %v377
        %v426 = vpack.c.bf16 %v388, %v385
        %v427 = vpack.c.bf16 %v396, %v393
        %v428 = vpack.c.bf16 %v404, %v401
        %v429 = vpack.c.bf16 %v412, %v409
        %v430 = vpack.c.bf16 %v420, %v417
        %v439 = vunpack.c.l.b16 %v423
        %v440 = vunpack.c.h.b16 %v423
        %v441 = vunpack.c.l.b16 %v424
        %v442 = vunpack.c.h.b16 %v424
        %v443 = vunpack.c.l.b16 %v425
        %v444 = vunpack.c.h.b16 %v425
        %v445 = vunpack.c.l.b16 %v426
        %v446 = vunpack.c.h.b16 %v426
        %v447 = vunpack.c.l.b16 %v427
        %v448 = vunpack.c.h.b16 %v427
        %v449 = vunpack.c.l.b16 %v428
        %v450 = vunpack.c.h.b16 %v428
        %v451 = vunpack.c.l.b16 %v429
        %v452 = vunpack.c.h.b16 %v429
        %v453 = vunpack.c.l.b16 %v430
        %v454 = vunpack.c.h.b16 %v430
        %v455 = vpack.c.b16 %v439, %v439
        %v456 = vpack.c.b16 %v440, %v440
        %v457 = vpack.c.b16 %v441, %v441
        %v458 = vpack.c.b16 %v442, %v442
        %v459 = vpack.c.b16 %v443, %v443
        %v460 = vpack.c.b16 %v444, %v444
        %v461 = vpack.c.b16 %v445, %v445
        %v462 = vpack.c.b16 %v446, %v446
        %v463 = vpack.c.b16 %v447, %v447
        %v464 = vpack.c.b16 %v448, %v448
        %v465 = vpack.c.b16 %v449, %v449
        %v466 = vpack.c.b16 %v450, %v450
        %v467 = vpack.c.b16 %v451, %v451
        %v468 = vpack.c.b16 %v452, %v452
        %v469 = vpack.c.b16 %v453, %v453
        %v470 = vpack.c.b16 %v454, %v454
        %487 = vst [vmem:[%s194] sm:$0xf] %v455
        %488 = vst [vmem:[%s194 + $0x4] sm:$0xf] %v456
        %489 = vst [vmem:[%s194 + $0x8] sm:$0xf] %v457
        %490 = vst [vmem:[%s194 + $0xc] sm:$0xf] %v458
        %491 = vst [vmem:[%s194 + $0x10] sm:$0xf] %v459
        %492 = vst [vmem:[%s194 + $0x14] sm:$0xf] %v460
        %493 = vst [vmem:[%s194 + $0x18] sm:$0xf] %v461
        %494 = vst [vmem:[%s194 + $0x1c] sm:$0xf] %v462
        %495 = vst [vmem:[%s194 + $0x20] sm:$0xf] %v463
        %496 = vst [vmem:[%s194 + $0x24] sm:$0xf] %v464
        %497 = vst [vmem:[%s194 + $0x28] sm:$0xf] %v465
        %498 = vst [vmem:[%s194 + $0x2c] sm:$0xf] %v466
        %499 = vst [vmem:[%s194 + $0x30] sm:$0xf] %v467
        %500 = vst [vmem:[%s194 + $0x34] sm:$0xf] %v468
        %501 = vst [vmem:[%s194 + $0x38] sm:$0xf] %v469
        %502 = vst [vmem:[%s194 + $0x3c] sm:$0xf] %v470
        %s503 = sand.u32 %s91, 1
        %s504 = scalar_lea.sflag [#allocation4], %s503
        %s505 = sand.u32 %s91, 1
        %s506 = smul.addr %s505, 64
        %s507 = scalar_lea.vmem [#allocation7], %s506
        // Predicated region
        $region37: #{pgcn_forward.14} parent=27 // pred_check
          %p508 = pneg %p101
        $region38: #{pgcn_forward.14} parent=27 // pred_check_branch
          %510 = sbr.rel (%p508) target = $region40
        $region39: #{pgcn_forward.14} parent=27 // pred_region
          %s511 = smul.u32 16, %s25
          %s513 = ssub.s32 1024, 1024
          %514 = vsyncadd %s504, %s513
          %s515 = smul.addr %s24, 32
          %s516 = sadd.s32 %s511, %s515
          %s517 = smul.addr %s516, 64
          %s518 = scalar_lea.hbm %s2, %s517
          %s519 = sshll.u32 %s507, 4
          %s520 = int_to_ptr.vmem [resolvable:$true] %s519
          %525 = dma.vmem_to_hbm [thread:$0]  %s520, 1024, %s518, %s504, 64, 64, 4
        $region40: #{pgcn_forward.14} parent=27 // pred_fallthru
          _
      $region28: #{pgcn_forward.14} parent=5 // pred_fallthru
        _
      %p526 = scmp.le.s32.totalorder 2, %s15
      // Predicated region
      $region41: #{pgcn_forward.14} parent=5 // pred_check
        %p527 = pneg %p526
      $region42: #{pgcn_forward.14} parent=5 // pred_check_branch
        %529 = sbr.rel (%p527) target = $region44
      $region43: #{pgcn_forward.14} parent=5 // pred_region
        %s530 = ssub.s32 %s15, 2
        // Predicated region
        $region45: #{pgcn_forward.14} parent=43 // pred_check
          %p531 = pneg %p107
        $region46: #{pgcn_forward.14} parent=43 // pred_check_branch
          %533 = sbr.rel (%p531) target = $region48
        $region47: #{pgcn_forward.14} parent=43 // pred_region
          %s534 = sand.u32 %s92, 1
          %s535 = scalar_lea.sflag [#allocation4], %s534
          %s536 = sand.u32 %s92, 1
          %s537 = smul.addr %s536, 64
          %s538 = scalar_lea.vmem [#allocation7], %s537
          %539 = dma.done %s535, 1024
        $region48: #{pgcn_forward.14} parent=43 // pred_fallthru
          _
      $region44: #{pgcn_forward.14} parent=5 // pred_fallthru
        _
    $region6: #{pgcn_forward.14} parent=1 // loop_footer
      %s19 = sadd.s32 1, %s15
    $region7: #{pgcn_forward.14} parent=1 // loop_footer_branch
      %14 = sbr.rel target = $region3
    $region8: #{pgcn_forward.14} parent=1 // loop_exit
      _
    %540 = vsyncpa [#allocation3], 1
    %s541 = scalar_lea.sflag [#allocation3], 1
    %542 = vsyncpa %s541, 1
    %543 = vsyncpa [#allocation6], 1
    %544 = vsyncpa [#allocation4], 1
    %s545 = scalar_lea.sflag [#allocation4], 1
    %546 = vsyncpa %s545, 1

// kernel: pgcn_forward.17
$region0: #{pgcn_forward.17}
  #allocation0 [shape = 'u32[]', space=smem, size = 0x4, offset = 0x4, fixed_abs, tag = 'smem constant byte address 0x4 - core index']
  #allocation1 [shape = 'u32[144,128]{1,0:T(1,128)}', space=vmem, size = 0x12000, scoped, tag = 'internal scratch']
  #allocation2 [shape = 'f32[128,128]{1,0:T(8,128)}', space=vmem, size = 0x10000, scoped, tag = 'scratch operand']
  %s0 = inlined_call_operand.hbm [shape: bf16[2,256,256], index: 0, kind: input, shape index: {}]
  %s1 = inlined_call_operand.hbm [shape: bf16[2,256,128], index: 1, kind: input, shape index: {}]
  %s2 = inlined_call_operand.hbm [shape: f32[1,128], index: 2, kind: input, shape index: {}]
  %s3 = inlined_call_operand.hbm [shape: f32[2,256,128], index: 3, kind: output, shape index: {}]
  %s4 = sld [smem:[#allocation0]]
  $region65: #{pgcn_forward.17} parent=0
    _
  %s6 = ssub.s32 1, %s4
  %s7 = scalar_select 0, %s6, %s4
  $region1: #{pgcn_forward.17} parent=0
    #allocation3 [shape = 'u8[65536]{0}', space=vmem, size = 0x10000, scoped, tag = 'input window, operand 0']
    #allocation4 [shape = 's32[2]{0}', space=sflag, size = 0x8, scoped, tag = 'scoped memory for pgcn_forward.17']
    #allocation5 [shape = 's32[2]{0}', space=sflag, size = 0x8, scoped, tag = 'scoped memory for pgcn_forward.17']
    #allocation6 [shape = 'u8[65536]{0}', space=vmem, size = 0x10000, scoped, tag = 'input window, operand 1']
    #allocation7 [shape = 's32[2]{0}', space=sflag, size = 0x8, scoped, tag = 'scoped memory for pgcn_forward.17']
    #allocation8 [shape = 'u8[512]{0}', space=vmem, size = 0x400, scoped, tag = 'input window, operand 2, single buffered']
    #allocation9 [shape = 'u8[131072]{0}', space=vmem, size = 0x20000, scoped, tag = 'output window, operand 0']
    %8 = vsyncpa [#allocation4], 0
    %s9 = scalar_lea.sflag [#allocation4], 1
    %10 = vsyncpa %s9, 0
    %11 = vsyncpa [#allocation7], 0
    %s12 = scalar_lea.sflag [#allocation7], 1
    %13 = vsyncpa %s12, 0
    %14 = vsyncpa [#allocation5], 0
    %s15 = scalar_lea.sflag [#allocation5], 1
    %16 = vsyncpa %s15, 0
    loop: start=0, step=1, limit=10
    $region2: #{pgcn_forward.17} parent=1 // loop_pre_header
      _
    $region3: #{pgcn_forward.17} parent=1 // loop_header
      %s18 = sphi 0, %s22
      %p19 = scmp.ge.s32.totalorder %s18, 10
      %s25 = sphi 0, %s44
      %s26 = sphi 0, %s40
      %s27 = sphi 0, %s36
      %s28 = sphi 0, %s25
      %s29 = sphi 0, %s26
      %s30 = sphi 0, %s27
      %s31 = sphi 0, %s28
      %s32 = sphi 0, %s29
      %s33 = sphi 0, %s30
      %s51 = sphi 0, %s53
      %s54 = sphi 0, %s51
      %s55 = sphi 0, %s54
      %s71 = sphi 0, %s55
      %s79 = sphi 0, %s81
      %s82 = sphi 0, %s79
      %s83 = sphi 0, %s82
      %s99 = sphi 0, %s83
      %s103 = sphi 0, %s103
      %s105 = sphi 0, %s103
      %s106 = sphi 0, %s105
      %s120 = sphi 0, %s106
      %s128 = sphi 0, %s130
      %s131 = sphi 0, %s128
      %s132 = sphi 0, %s131
      %s148 = sphi 0, %s132
    $region4: #{pgcn_forward.17} parent=1 // loop_header_branch
      %21 = sbr.rel (%p19) target = $region8
    $region5: #{pgcn_forward.17} parent=1 // loop_body
      %s23 = ssub.s32 %s18, 1
      %s24 = ssub.s32 %s18, 2
      %s34 = sadd.s32 1, %s27
      %p35 = scmp.ge.s32.totalorder %s34, 2
      %s36 = scalar_select %p35, 0, %s34
      %s37 = sadd.s32 1, %s26
      %s38 = scalar_select %p35, %s37, %s26
      %p39 = scmp.ge.s32.totalorder %s38, 2
      %s40 = scalar_select %p39, 0, %s38
      %s41 = sadd.s32 1, %s25
      %s42 = scalar_select %p39, %s41, %s25
      %p43 = scmp.ge.s32.totalorder %s42, 2
      %s44 = scalar_select %p43, 0, %s42
      %s45 = ssub.s32 %s25, %s44
      %s46 = ssub.s32 %s26, %s40
      %s47 = sor.u32 %s45, %s46
      %s48 = ssub.s32 %s27, %s36
      %s49 = sor.u32 %s47, %s48
      %p50 = scmp.eq.s32.totalorder %s49, 0
      %s52 = sadd.s32 %s51, 1
      %s53 = scalar_select %p50, %s51, %s52
      %p56 = pneg %p50
      %p57 = scmp.eq.s32.totalorder %s18, 7
      %p58 = por %p56, %p57
      %p59 = scmp.ne.s32.totalorder %s51, %s54
      %p60 = scmp.eq.s32.totalorder %s18, 0
      %p61 = por %p59, %p60
      %p62 = scmp.ne.s32.totalorder %s51, %s54
      %p63 = scmp.eq.s32.totalorder %s23, 7
      %p64 = por %p62, %p63
      %p65 = scmp.ne.s32.totalorder %s54, %s55
      %p66 = scmp.eq.s32.totalorder %s23, 0
      %p67 = por %p65, %p66
      %p68 = scmp.ne.s32.totalorder %s54, %s55
      %p69 = scmp.eq.s32.totalorder %s24, 7
      %p70 = por %p68, %p69
      %p72 = scmp.ne.s32.totalorder %s55, %s71
      %p73 = scmp.eq.s32.totalorder %s24, 0
      %p74 = por %p72, %p73
      %s75 = ssub.s32 %s25, %s44
      %s76 = ssub.s32 %s27, %s36
      %s77 = sor.u32 %s75, %s76
      %p78 = scmp.eq.s32.totalorder %s77, 0
      %s80 = sadd.s32 %s79, 1
      %s81 = scalar_select %p78, %s79, %s80
      %p84 = pneg %p78
      %p85 = scmp.eq.s32.totalorder %s18, 7
      %p86 = por %p84, %p85
      %p87 = scmp.ne.s32.totalorder %s79, %s82
      %p88 = scmp.eq.s32.totalorder %s18, 0
      %p89 = por %p87, %p88
      %p90 = scmp.ne.s32.totalorder %s79, %s82
      %p91 = scmp.eq.s32.totalorder %s23, 7
      %p92 = por %p90, %p91
      %p93 = scmp.ne.s32.totalorder %s82, %s83
      %p94 = scmp.eq.s32.totalorder %s23, 0
      %p95 = por %p93, %p94
      %p96 = scmp.ne.s32.totalorder %s82, %s83
      %p97 = scmp.eq.s32.totalorder %s24, 7
      %p98 = por %p96, %p97
      %p100 = scmp.ne.s32.totalorder %s83, %s99
      %p101 = scmp.eq.s32.totalorder %s24, 0
      %p102 = por %p100, %p101
      %s104 = sadd.s32 %s103, 1
      %p107 = scmp.eq.s32.totalorder %s18, 7
      %p108 = scmp.ne.s32.totalorder %s103, %s105
      %p109 = scmp.eq.s32.totalorder %s18, 0
      %p110 = por %p108, %p109
      %p111 = scmp.ne.s32.totalorder %s103, %s105
      %p112 = scmp.eq.s32.totalorder %s23, 7
      %p113 = por %p111, %p112
      %p114 = scmp.ne.s32.totalorder %s105, %s106
      %p115 = scmp.eq.s32.totalorder %s23, 0
      %p116 = por %p114, %p115
      %p117 = scmp.ne.s32.totalorder %s105, %s106
      %p118 = scmp.eq.s32.totalorder %s24, 7
      %p119 = por %p117, %p118
      %p121 = scmp.ne.s32.totalorder %s106, %s120
      %p122 = scmp.eq.s32.totalorder %s24, 0
      %p123 = por %p121, %p122
      %s124 = ssub.s32 %s25, %s44
      %s125 = ssub.s32 %s26, %s40
      %s126 = sor.u32 %s124, %s125
      %p127 = scmp.eq.s32.totalorder %s126, 0
      %s129 = sadd.s32 %s128, 1
      %s130 = scalar_select %p127, %s128, %s129
      %p133 = pneg %p127
      %p134 = scmp.eq.s32.totalorder %s18, 7
      %p135 = por %p133, %p134
      %p136 = scmp.ne.s32.totalorder %s128, %s131
      %p137 = scmp.eq.s32.totalorder %s18, 0
      %p138 = por %p136, %p137
      %p139 = scmp.ne.s32.totalorder %s128, %s131
      %p140 = scmp.eq.s32.totalorder %s23, 7
      %p141 = por %p139, %p140
      %p142 = scmp.ne.s32.totalorder %s131, %s132
      %p143 = scmp.eq.s32.totalorder %s23, 0
      %p144 = por %p142, %p143
      %p145 = scmp.ne.s32.totalorder %s131, %s132
      %p146 = scmp.eq.s32.totalorder %s24, 7
      %p147 = por %p145, %p146
      %p149 = scmp.ne.s32.totalorder %s132, %s148
      %p150 = scmp.eq.s32.totalorder %s24, 0
      %p151 = por %p149, %p150
      %p152 = scmp.le.s32.totalorder 1, %s18
      %p153 = scmp.lt.s32.totalorder %s18, 9
      %p154 = pnand %p152, %p153
      %p155 = pneg %p154
      // Predicated region
      $region9: #{pgcn_forward.17} parent=5 // pred_check
        _
      $region10: #{pgcn_forward.17} parent=5 // pred_check_branch
        %157 = sbr.rel (%p154) target = $region12
      $region11: #{pgcn_forward.17} parent=5 // pred_region
        %s158 = ssub.s32 %s18, 1
        // Predicated region
        $region13: #{pgcn_forward.17} parent=11 // pred_check
          %p159 = pneg %p116
        $region14: #{pgcn_forward.17} parent=11 // pred_check_branch
          %161 = sbr.rel (%p159) target = $region16
        $region15: #{pgcn_forward.17} parent=11 // pred_region
          %s163 = ssub.s32 16, 16
          %164 = vsyncadd [#allocation7], %s163
          %s166 = sshll.u32 [#allocation8], 4
          %s167 = int_to_ptr.vmem [resolvable:$true] %s166
          %169 = dma.hbm_to_vmem [thread:$0]  %s2, 16, %s167, [#allocation7]
        $region16: #{pgcn_forward.17} parent=11 // pred_fallthru
          _
      $region12: #{pgcn_forward.17} parent=5 // pred_fallthru
        _
      %p170 = scmp.lt.s32.totalorder %s18, 8
      // Predicated region
      $region17: #{pgcn_forward.17} parent=5 // pred_check
        %p171 = pneg %p170
      $region18: #{pgcn_forward.17} parent=5 // pred_check_branch
        %173 = sbr.rel (%p171) target = $region20
      $region19: #{pgcn_forward.17} parent=5 // pred_region
        // Predicated region
        $region21: #{pgcn_forward.17} parent=19 // pred_check
          %p174 = pneg %p61
        $region22: #{pgcn_forward.17} parent=19 // pred_check_branch
          %176 = sbr.rel (%p174) target = $region24
        $region23: #{pgcn_forward.17} parent=19 // pred_region
          %s177 = sand.u32 %s51, 1
          %s178 = scalar_lea.sflag [#allocation4], %s177
          %s179 = sand.u32 %s51, 1
          %s180 = smul.addr %s179, 64
          %s181 = scalar_lea.vmem [#allocation3], %s180
          %s182 = smul.u32 16, %s26
          %s184 = ssub.s32 1024, 1024
          %185 = vsyncadd %s178, %s184
          %s186 = smul.addr %s182, 2
          %s187 = sadd.s32 %s27, %s186
          %s188 = smul.addr %s25, 64
          %s189 = sadd.s32 %s187, %s188
          %s190 = smul.addr %s189, 64
          %s191 = scalar_lea.hbm %s0, %s190
          %s192 = sshll.u32 %s181, 4
          %s193 = int_to_ptr.vmem [resolvable:$true] %s192
          %198 = dma.hbm_to_vmem [thread:$0]  %s191, 1024, %s193, %s178, 128, 64, 4
        $region24: #{pgcn_forward.17} parent=19 // pred_fallthru
          _
        // Predicated region
        $region25: #{pgcn_forward.17} parent=19 // pred_check
          %p199 = pneg %p89
        $region26: #{pgcn_forward.17} parent=19 // pred_check_branch
          %201 = sbr.rel (%p199) target = $region28
        $region27: #{pgcn_forward.17} parent=19 // pred_region
          %s202 = sand.u32 %s18, 1
          %s203 = scalar_lea.sflag [#allocation7], %s202
          %s204 = sand.u32 %s79, 1
          %s205 = smul.addr %s204, 64
          %s206 = scalar_lea.vmem [#allocation6], %s205
          %s207 = smul.u32 16, %s27
          %s209 = ssub.s32 1024, 1024
          %210 = vsyncadd %s203, %s209
          %s211 = smul.addr %s25, 32
          %s212 = sadd.s32 %s207, %s211
          %s213 = smul.addr %s212, 64
          %s214 = scalar_lea.hbm %s1, %s213
          %s215 = sshll.u32 %s206, 4
          %s216 = int_to_ptr.vmem [resolvable:$true] %s215
          %221 = dma.hbm_to_vmem [thread:$0]  %s214, 1024, %s216, %s203, 64, 64, 4
        $region28: #{pgcn_forward.17} parent=19 // pred_fallthru
          _
      $region20: #{pgcn_forward.17} parent=5 // pred_fallthru
        _
      %p222 = scmp.le.s32.totalorder 1, %s18
      %p223 = scmp.lt.s32.totalorder %s18, 9
      %p224 = pnand %p222, %p223
      %p225 = pneg %p224
      // Predicated region
      $region29: #{pgcn_forward.17} parent=5 // pred_check
        _
      $region30: #{pgcn_forward.17} parent=5 // pred_check_branch
        %227 = sbr.rel (%p224) target = $region32
      $region31: #{pgcn_forward.17} parent=5 // pred_region
        %s228 = ssub.s32 %s18, 1
        %s229 = sand.u32 %s54, 1
        %s230 = scalar_lea.sflag [#allocation4], %s229
        %s231 = sand.u32 %s54, 1
        %s232 = smul.addr %s231, 64
        %s233 = scalar_lea.vmem [#allocation3], %s232
        // Predicated region
        $region33: #{pgcn_forward.17} parent=31 // pred_check
          %p234 = pneg %p67
        $region34: #{pgcn_forward.17} parent=31 // pred_check_branch
          %236 = sbr.rel (%p234) target = $region36
        $region35: #{pgcn_forward.17} parent=31 // pred_region
          %237 = dma.done %s230, 1024
        $region36: #{pgcn_forward.17} parent=31 // pred_fallthru
          _
        %s238 = sand.u32 %s23, 1
        %s239 = scalar_lea.sflag [#allocation7], %s238
        %s240 = sand.u32 %s82, 1
        %s241 = smul.addr %s240, 64
        %s242 = scalar_lea.vmem [#allocation6], %s241
        // Predicated region
        $region37: #{pgcn_forward.17} parent=31 // pred_check
          %p243 = pneg %p95
        $region38: #{pgcn_forward.17} parent=31 // pred_check_branch
          %245 = sbr.rel (%p243) target = $region40
        $region39: #{pgcn_forward.17} parent=31 // pred_region
          %246 = dma.done %s239, 1024
        $region40: #{pgcn_forward.17} parent=31 // pred_fallthru
          _
        // Predicated region
        $region41: #{pgcn_forward.17} parent=31 // pred_check
          %p247 = pneg %p116
        $region42: #{pgcn_forward.17} parent=31 // pred_check_branch
          %249 = sbr.rel (%p247) target = $region44
        $region43: #{pgcn_forward.17} parent=31 // pred_region
          %250 = dma.done [#allocation7], 16
        $region44: #{pgcn_forward.17} parent=31 // pred_fallthru
          _
        %s251 = sand.u32 %s54, 1
        %s252 = scalar_lea.sflag [#allocation4], %s251
        %s253 = sand.u32 %s54, 1
        %s254 = smul.addr %s253, 64
        %s255 = scalar_lea.vmem [#allocation3], %s254
        %p256 = pneg %p67
        %p257 = pneg %p64
        %s258 = sand.u32 %s23, 1
        %s259 = scalar_lea.sflag [#allocation7], %s258
        %s260 = sand.u32 %s82, 1
        %s261 = smul.addr %s260, 64
        %s262 = scalar_lea.vmem [#allocation6], %s261
        %p263 = pneg %p95
        %p264 = pneg %p92
        %p265 = pneg %p116
        %p266 = pneg %p113
        %p267 = pneg %p144
        %p268 = pneg %p141
        %s269 = sand.u32 %s131, 1
        %s270 = scalar_lea.sflag [#allocation5], %s269
        %s271 = sand.u32 %s131, 1
        %s272 = smul.addr %s271, 128
        %s273 = scalar_lea.vmem [#allocation9], %s272
        %s274 = smul.u32 16, %s29
        %s275 = smul.u32 16, %s30
        %s276 = smul.u32 16, %s29
        %p278 = scmp.eq.s32.totalorder %s30, 0
        // Predicated region
        $region45: #{pgcn_forward.17} parent=31 // pred_check
          %p279 = pneg %p278
        $region46: #{pgcn_forward.17} parent=31 // pred_check_branch
          %281 = sbr.rel (%p279) target = $region48
        $region47: #{pgcn_forward.17} parent=31 // pred_region
          %282 = vst [vmem:[#allocation2] sm:$0xff] 0.0
          %283 = vst [vmem:[#allocation2 + $0x8] sm:$0xff] 0.0
          %284 = vst [vmem:[#allocation2 + $0x10] sm:$0xff] 0.0
          %285 = vst [vmem:[#allocation2 + $0x18] sm:$0xff] 0.0
          %286 = vst [vmem:[#allocation2 + $0x20] sm:$0xff] 0.0
          %287 = vst [vmem:[#allocation2 + $0x28] sm:$0xff] 0.0
          %288 = vst [vmem:[#allocation2 + $0x30] sm:$0xff] 0.0
          %289 = vst [vmem:[#allocation2 + $0x38] sm:$0xff] 0.0
          %290 = vst [vmem:[#allocation2 + $0x40] sm:$0xff] 0.0
          %291 = vst [vmem:[#allocation2 + $0x48] sm:$0xff] 0.0
          %292 = vst [vmem:[#allocation2 + $0x50] sm:$0xff] 0.0
          %293 = vst [vmem:[#allocation2 + $0x58] sm:$0xff] 0.0
          %294 = vst [vmem:[#allocation2 + $0x60] sm:$0xff] 0.0
          %295 = vst [vmem:[#allocation2 + $0x68] sm:$0xff] 0.0
          %296 = vst [vmem:[#allocation2 + $0x70] sm:$0xff] 0.0
          %297 = vst [vmem:[#allocation2 + $0x78] sm:$0xff] 0.0
        $region48: #{pgcn_forward.17} parent=31 // pred_fallthru
          _
        %v298 = vld [vmem:[#allocation2] sm:$0xff]
        %v299 = vld [vmem:[#allocation2 + $0x8] sm:$0xff]
        %v300 = vld [vmem:[#allocation2 + $0x10] sm:$0xff]
        %v301 = vld [vmem:[#allocation2 + $0x18] sm:$0xff]
        %v302 = vld [vmem:[#allocation2 + $0x20] sm:$0xff]
        %v303 = vld [vmem:[#allocation2 + $0x28] sm:$0xff]
        %v304 = vld [vmem:[#allocation2 + $0x30] sm:$0xff]
        %v305 = vld [vmem:[#allocation2 + $0x38] sm:$0xff]
        %v306 = vld [vmem:[#allocation2 + $0x40] sm:$0xff]
        %v307 = vld [vmem:[#allocation2 + $0x48] sm:$0xff]
        %v308 = vld [vmem:[#allocation2 + $0x50] sm:$0xff]
        %v309 = vld [vmem:[#allocation2 + $0x58] sm:$0xff]
        %v310 = vld [vmem:[#allocation2 + $0x60] sm:$0xff]
        %v311 = vld [vmem:[#allocation2 + $0x68] sm:$0xff]
        %v312 = vld [vmem:[#allocation2 + $0x70] sm:$0xff]
        %v313 = vld [vmem:[#allocation2 + $0x78] sm:$0xff]
        %v314 = vld [vmem:[%s233] sm:$0xf]
        %v315 = vld [vmem:[%s233 + $0x4] sm:$0xf]
        %v316 = vld [vmem:[%s233 + $0x8] sm:$0xf]
        %v317 = vld [vmem:[%s233 + $0xc] sm:$0xf]
        %v318 = vld [vmem:[%s233 + $0x10] sm:$0xf]
        %v319 = vld [vmem:[%s233 + $0x14] sm:$0xf]
        %v320 = vld [vmem:[%s233 + $0x18] sm:$0xf]
        %v321 = vld [vmem:[%s233 + $0x1c] sm:$0xf]
        %v322 = vld [vmem:[%s233 + $0x20] sm:$0xf]
        %v323 = vld [vmem:[%s233 + $0x24] sm:$0xf]
        %v324 = vld [vmem:[%s233 + $0x28] sm:$0xf]
        %v325 = vld [vmem:[%s233 + $0x2c] sm:$0xf]
        %v326 = vld [vmem:[%s233 + $0x30] sm:$0xf]
        %v327 = vld [vmem:[%s233 + $0x34] sm:$0xf]
        %v328 = vld [vmem:[%s233 + $0x38] sm:$0xf]
        %v329 = vld [vmem:[%s233 + $0x3c] sm:$0xf]
        %v330 = vld [vmem:[%s242] sm:$0xf]
        %v331 = vld [vmem:[%s242 + $0x4] sm:$0xf]
        %v332 = vld [vmem:[%s242 + $0x8] sm:$0xf]
        %v333 = vld [vmem:[%s242 + $0xc] sm:$0xf]
        %v334 = vld [vmem:[%s242 + $0x10] sm:$0xf]
        %v335 = vld [vmem:[%s242 + $0x14] sm:$0xf]
        %v336 = vld [vmem:[%s242 + $0x18] sm:$0xf]
        %v337 = vld [vmem:[%s242 + $0x1c] sm:$0xf]
        %v338 = vld [vmem:[%s242 + $0x20] sm:$0xf]
        %v339 = vld [vmem:[%s242 + $0x24] sm:$0xf]
        %v340 = vld [vmem:[%s242 + $0x28] sm:$0xf]
        %v341 = vld [vmem:[%s242 + $0x2c] sm:$0xf]
        %v342 = vld [vmem:[%s242 + $0x30] sm:$0xf]
        %v343 = vld [vmem:[%s242 + $0x34] sm:$0xf]
        %v344 = vld [vmem:[%s242 + $0x38] sm:$0xf]
        %v345 = vld [vmem:[%s242 + $0x3c] sm:$0xf]
        %v362 = vunpack.c.l.b16 %v314
        %v363 = vunpack.c.l.b16 %v315
        %v364 = vunpack.c.l.b16 %v316
        %v365 = vunpack.c.l.b16 %v317
        %v366 = vunpack.c.l.b16 %v318
        %v367 = vunpack.c.l.b16 %v319
        %v368 = vunpack.c.l.b16 %v320
        %v369 = vunpack.c.l.b16 %v321
        %v370 = vunpack.c.l.b16 %v322
        %v371 = vunpack.c.l.b16 %v323
        %v372 = vunpack.c.l.b16 %v324
        %v373 = vunpack.c.l.b16 %v325
        %v374 = vunpack.c.l.b16 %v326
        %v375 = vunpack.c.l.b16 %v327
        %v376 = vunpack.c.l.b16 %v328
        %v377 = vunpack.c.l.b16 %v329
        %v378 = vpack.c.b16 %v363, %v362
        %v379 = vpack.c.b16 %v365, %v364
        %v380 = vpack.c.b16 %v367, %v366
        %v381 = vpack.c.b16 %v369, %v368
        %v382 = vpack.c.b16 %v371, %v370
        %v383 = vpack.c.b16 %v373, %v372
        %v384 = vpack.c.b16 %v375, %v374
        %v385 = vpack.c.b16 %v377, %v376
        %v410 = vunpack.c.l.b16 %v330
        %v411 = vunpack.c.l.b16 %v331
        %v412 = vunpack.c.l.b16 %v332
        %v413 = vunpack.c.l.b16 %v333
        %v414 = vunpack.c.l.b16 %v334
        %v415 = vunpack.c.l.b16 %v335
        %v416 = vunpack.c.l.b16 %v336
        %v417 = vunpack.c.l.b16 %v337
        %v418 = vunpack.c.l.b16 %v338
        %v419 = vunpack.c.l.b16 %v339
        %v420 = vunpack.c.l.b16 %v340
        %v421 = vunpack.c.l.b16 %v341
        %v422 = vunpack.c.l.b16 %v342
        %v423 = vunpack.c.l.b16 %v343
        %v424 = vunpack.c.l.b16 %v344
        %v425 = vunpack.c.l.b16 %v345
        %v426 = vpack.c.b16 %v411, %v410
        %v427 = vpack.c.b16 %v413, %v412
        %v428 = vpack.c.b16 %v415, %v414
        %v429 = vpack.c.b16 %v417, %v416
        %v430 = vpack.c.b16 %v419, %v418
        %v431 = vpack.c.b16 %v421, %v420
        %v432 = vpack.c.b16 %v423, %v422
        %v433 = vpack.c.b16 %v425, %v424
        %442 = vmatprep.subr.bf16.mxu0 0
        %443 = vmatpush1.bf16.msra.mxu0 %v426
        %444 = vmatprep.subr.bf16.mxu0 0
        %445 = vmatpush1.bf16.msra.mxu0 %v427
        %446 = vmatprep.subr.bf16.mxu0 0
        %447 = vmatpush1.bf16.msra.mxu0 %v428
        %448 = vmatprep.subr.bf16.mxu0 0
        %449 = vmatpush1.bf16.msra.mxu0 %v429
        %450 = vmatprep.subr.bf16.mxu0 0
        %451 = vmatpush1.bf16.msra.mxu0 %v430
        %452 = vmatprep.subr.bf16.mxu0 0
        %453 = vmatpush1.bf16.msra.mxu0 %v431
        %454 = vmatprep.subr.bf16.mxu0 0
        %455 = vmatpush1.bf16.msra.mxu0 %v432
        %456 = vmatprep.subr.bf16.mxu0 0
        %457 = vmatpush1.bf16.msra.mxu0 %v433
        %458 = vmatprep.subr.bf16.mxu0 0
        %459 = vmatpush1.bf16.msra.mxu0 0
        %460 = vmatprep.subr.bf16.mxu0 0
        %461 = vmatpush1.bf16.msra.mxu0 0
        %462 = vmatprep.subr.bf16.mxu0 0
        %463 = vmatpush1.bf16.msra.mxu0 0
        %464 = vmatprep.subr.bf16.mxu0 0
        %465 = vmatpush1.bf16.msra.mxu0 0
        %466 = vmatprep.subr.bf16.mxu0 0
        %467 = vmatpush1.bf16.msra.mxu0 0
        %468 = vmatprep.subr.bf16.mxu0 0
        %469 = vmatpush1.bf16.msra.mxu0 0
        %470 = vmatprep.subr.bf16.mxu0 0
        %471 = vmatpush1.bf16.msra.mxu0 0
        %472 = vmatprep.subr.bf16.mxu0 0
        %473 = vmatpush1.bf16.msra.mxu0 0
        %474 = vmatprep.mubr.bf16.mxu0 0
        %475 = vmatmul.mubr.bf16.gmra.mrb[0].mxu0 %v378
        %v476 = vpop.f32.mrb[0].mxu0
        %v477 = vadd.f32 0.0, %v476
        %v478 = vpop.f32.mrb[0].mxu0
        %v479 = vpop.f32.mrb[0].mxu0
        %v480 = vadd.f32 0.0, %v479
        %v481 = vpop.f32.mrb[0].mxu0
        %482 = vmatprep.mubr.bf16.mxu0 0
        %483 = vmatmul.mubr.bf16.gmra.mrb[0].mxu0 %v379
        %v484 = vpop.f32.mrb[0].mxu0
        %v485 = vadd.f32 0.0, %v484
        %v486 = vpop.f32.mrb[0].mxu0
        %v487 = vpop.f32.mrb[0].mxu0
        %v488 = vadd.f32 0.0, %v487
        %v489 = vpop.f32.mrb[0].mxu0
        %490 = vmatprep.mubr.bf16.mxu0 0
        %491 = vmatmul.mubr.bf16.gmra.mrb[0].mxu0 %v380
        %v492 = vpop.f32.mrb[0].mxu0
        %v493 = vadd.f32 0.0, %v492
        %v494 = vpop.f32.mrb[0].mxu0
        %v495 = vpop.f32.mrb[0].mxu0
        %v496 = vadd.f32 0.0, %v495
        %v497 = vpop.f32.mrb[0].mxu0
        %498 = vmatprep.mubr.bf16.mxu0 0
        %499 = vmatmul.mubr.bf16.gmra.mrb[0].mxu0 %v381
        %v500 = vpop.f32.mrb[0].mxu0
        %v501 = vadd.f32 0.0, %v500
        %v502 = vpop.f32.mrb[0].mxu0
        %v503 = vpop.f32.mrb[0].mxu0
        %v504 = vadd.f32 0.0, %v503
        %v505 = vpop.f32.mrb[0].mxu0
        %506 = vmatprep.mubr.bf16.mxu0 0
        %507 = vmatmul.mubr.bf16.gmra.mrb[0].mxu0 %v382
        %v508 = vpop.f32.mrb[0].mxu0
        %v509 = vadd.f32 0.0, %v508
        %v510 = vpop.f32.mrb[0].mxu0
        %v511 = vpop.f32.mrb[0].mxu0
        %v512 = vadd.f32 0.0, %v511
        %v513 = vpop.f32.mrb[0].mxu0
        %514 = vmatprep.mubr.bf16.mxu0 0
        %515 = vmatmul.mubr.bf16.gmra.mrb[0].mxu0 %v383
        %v516 = vpop.f32.mrb[0].mxu0
        %v517 = vadd.f32 0.0, %v516
        %v518 = vpop.f32.mrb[0].mxu0
        %v519 = vpop.f32.mrb[0].mxu0
        %v520 = vadd.f32 0.0, %v519
        %v521 = vpop.f32.mrb[0].mxu0
        %522 = vmatprep.mubr.bf16.mxu0 0
        %523 = vmatmul.mubr.bf16.gmra.mrb[0].mxu0 %v384
        %v524 = vpop.f32.mrb[0].mxu0
        %v525 = vadd.f32 0.0, %v524
        %v526 = vpop.f32.mrb[0].mxu0
        %v527 = vpop.f32.mrb[0].mxu0
        %v528 = vadd.f32 0.0, %v527
        %v529 = vpop.f32.mrb[0].mxu0
        %530 = vmatprep.mubr.bf16.mxu0 0
        %531 = vmatmul.mubr.bf16.gmra.mrb[0].mxu0 %v385
        %v532 = vpop.f32.mrb[0].mxu0
        %v533 = vadd.f32 0.0, %v532
        %v534 = vpop.f32.mrb[0].mxu0
        %v535 = vpop.f32.mrb[0].mxu0
        %v536 = vadd.f32 0.0, %v535
        %v537 = vpop.f32.mrb[0].mxu0
        %538 = vdwg.mxu0
        %v539 = vadd.f32 %v298, %v477
        %v540 = vadd.f32 %v299, %v480
        %v541 = vadd.f32 %v300, %v485
        %v542 = vadd.f32 %v301, %v488
        %v543 = vadd.f32 %v302, %v493
        %v544 = vadd.f32 %v303, %v496
        %v545 = vadd.f32 %v304, %v501
        %v546 = vadd.f32 %v305, %v504
        %v547 = vadd.f32 %v306, %v509
        %v548 = vadd.f32 %v307, %v512
        %v549 = vadd.f32 %v308, %v517
        %v550 = vadd.f32 %v309, %v520
        %v551 = vadd.f32 %v310, %v525
        %v552 = vadd.f32 %v311, %v528
        %v553 = vadd.f32 %v312, %v533
        %v554 = vadd.f32 %v313, %v536
        %555 = vst [vmem:[#allocation2] sm:$0xff] %v539
        %556 = vst [vmem:[#allocation2 + $0x8] sm:$0xff] %v540
        %557 = vst [vmem:[#allocation2 + $0x10] sm:$0xff] %v541
        %558 = vst [vmem:[#allocation2 + $0x18] sm:$0xff] %v542
        %559 = vst [vmem:[#allocation2 + $0x20] sm:$0xff] %v543
        %560 = vst [vmem:[#allocation2 + $0x28] sm:$0xff] %v544
        %561 = vst [vmem:[#allocation2 + $0x30] sm:$0xff] %v545
        %562 = vst [vmem:[#allocation2 + $0x38] sm:$0xff] %v546
        %563 = vst [vmem:[#allocation2 + $0x40] sm:$0xff] %v547
        %564 = vst [vmem:[#allocation2 + $0x48] sm:$0xff] %v548
        %565 = vst [vmem:[#allocation2 + $0x50] sm:$0xff] %v549
        %566 = vst [vmem:[#allocation2 + $0x58] sm:$0xff] %v550
        %567 = vst [vmem:[#allocation2 + $0x60] sm:$0xff] %v551
        %568 = vst [vmem:[#allocation2 + $0x68] sm:$0xff] %v552
        %569 = vst [vmem:[#allocation2 + $0x70] sm:$0xff] %v553
        %570 = vst [vmem:[#allocation2 + $0x78] sm:$0xff] %v554
        %p571 = scmp.eq.s32.totalorder %s30, 1
        // Predicated region
        $region49: #{pgcn_forward.17} parent=31 // pred_check
          %p572 = pneg %p571
        $region50: #{pgcn_forward.17} parent=31 // pred_check_branch
          %574 = sbr.rel (%p572) target = $region52
        $region51: #{pgcn_forward.17} parent=31 // pred_region
          %v575 = vld [vmem:[#allocation2] sm:$0xff]
          %v576 = vld [vmem:[#allocation2 + $0x8] sm:$0xff]
          %v577 = vld [vmem:[#allocation2 + $0x10] sm:$0xff]
          %v578 = vld [vmem:[#allocation2 + $0x18] sm:$0xff]
          %v579 = vld [vmem:[#allocation2 + $0x20] sm:$0xff]
          %v580 = vld [vmem:[#allocation2 + $0x28] sm:$0xff]
          %v581 = vld [vmem:[#allocation2 + $0x30] sm:$0xff]
          %v582 = vld [vmem:[#allocation2 + $0x38] sm:$0xff]
          %v583 = vld [vmem:[#allocation2 + $0x40] sm:$0xff]
          %v584 = vld [vmem:[#allocation2 + $0x48] sm:$0xff]
          %v585 = vld [vmem:[#allocation2 + $0x50] sm:$0xff]
          %v586 = vld [vmem:[#allocation2 + $0x58] sm:$0xff]
          %v587 = vld [vmem:[#allocation2 + $0x60] sm:$0xff]
          %v588 = vld [vmem:[#allocation2 + $0x68] sm:$0xff]
          %v589 = vld [vmem:[#allocation2 + $0x70] sm:$0xff]
          %v590 = vld [vmem:[#allocation2 + $0x78] sm:$0xff]
          %v591 = vld [vmem:[#allocation8] sm:$0x1]
          %v593 = vlaneseq
          %v594 = vshrl.u32 %v593, 7
          %v595 = vsub.s32 0, %v594
          %v596 = vrot.slane %v591, %v595
          %v598 = vadd.f32 %v575, %v596
          %v599 = vadd.f32 %v576, %v596
          %v600 = vadd.f32 %v577, %v596
          %v601 = vadd.f32 %v578, %v596
          %v602 = vadd.f32 %v579, %v596
          %v603 = vadd.f32 %v580, %v596
          %v604 = vadd.f32 %v581, %v596
          %v605 = vadd.f32 %v582, %v596
          %v606 = vadd.f32 %v583, %v596
          %v607 = vadd.f32 %v584, %v596
          %v608 = vadd.f32 %v585, %v596
          %v609 = vadd.f32 %v586, %v596
          %v610 = vadd.f32 %v587, %v596
          %v611 = vadd.f32 %v588, %v596
          %v612 = vadd.f32 %v589, %v596
          %v613 = vadd.f32 %v590, %v596
          %v614 = vmax.f32 %v598, 0.0
          %v615 = vmax.f32 %v599, 0.0
          %v616 = vmax.f32 %v600, 0.0
          %v617 = vmax.f32 %v601, 0.0
          %v618 = vmax.f32 %v602, 0.0
          %v619 = vmax.f32 %v603, 0.0
          %v620 = vmax.f32 %v604, 0.0
          %v621 = vmax.f32 %v605, 0.0
          %v622 = vmax.f32 %v606, 0.0
          %v623 = vmax.f32 %v607, 0.0
          %v624 = vmax.f32 %v608, 0.0
          %v625 = vmax.f32 %v609, 0.0
          %v626 = vmax.f32 %v610, 0.0
          %v627 = vmax.f32 %v611, 0.0
          %v628 = vmax.f32 %v612, 0.0
          %v629 = vmax.f32 %v613, 0.0
          %630 = vst [vmem:[%s273] sm:$0xff] %v614
          %631 = vst [vmem:[%s273 + $0x8] sm:$0xff] %v615
          %632 = vst [vmem:[%s273 + $0x10] sm:$0xff] %v616
          %633 = vst [vmem:[%s273 + $0x18] sm:$0xff] %v617
          %634 = vst [vmem:[%s273 + $0x20] sm:$0xff] %v618
          %635 = vst [vmem:[%s273 + $0x28] sm:$0xff] %v619
          %636 = vst [vmem:[%s273 + $0x30] sm:$0xff] %v620
          %637 = vst [vmem:[%s273 + $0x38] sm:$0xff] %v621
          %638 = vst [vmem:[%s273 + $0x40] sm:$0xff] %v622
          %639 = vst [vmem:[%s273 + $0x48] sm:$0xff] %v623
          %640 = vst [vmem:[%s273 + $0x50] sm:$0xff] %v624
          %641 = vst [vmem:[%s273 + $0x58] sm:$0xff] %v625
          %642 = vst [vmem:[%s273 + $0x60] sm:$0xff] %v626
          %643 = vst [vmem:[%s273 + $0x68] sm:$0xff] %v627
          %644 = vst [vmem:[%s273 + $0x70] sm:$0xff] %v628
          %645 = vst [vmem:[%s273 + $0x78] sm:$0xff] %v629
        $region52: #{pgcn_forward.17} parent=31 // pred_fallthru
          _
        %s646 = sand.u32 %s131, 1
        %s647 = scalar_lea.sflag [#allocation5], %s646
        %s648 = sand.u32 %s131, 1
        %s649 = smul.addr %s648, 128
        %s650 = scalar_lea.vmem [#allocation9], %s649
        // Predicated region
        $region53: #{pgcn_forward.17} parent=31 // pred_check
          %p651 = pneg %p141
        $region54: #{pgcn_forward.17} parent=31 // pred_check_branch
          %653 = sbr.rel (%p651) target = $region56
        $region55: #{pgcn_forward.17} parent=31 // pred_region
          %s654 = smul.u32 16, %s29
          %s656 = ssub.s32 2048, 2048
          %657 = vsyncadd %s647, %s656
          %s658 = smul.addr %s28, 32
          %s659 = sadd.s32 %s654, %s658
          %s660 = smul.addr %s659, 128
          %s661 = scalar_lea.hbm %s3, %s660
          %s662 = sshll.u32 %s650, 4
          %s663 = int_to_ptr.vmem [resolvable:$true] %s662
          %668 = dma.vmem_to_hbm [thread:$0]  %s663, 2048, %s661, %s647, 128, 128, 8
        $region56: #{pgcn_forward.17} parent=31 // pred_fallthru
          _
      $region32: #{pgcn_forward.17} parent=5 // pred_fallthru
        _
      %p669 = scmp.le.s32.totalorder 2, %s18
      // Predicated region
      $region57: #{pgcn_forward.17} parent=5 // pred_check
        %p670 = pneg %p669
      $region58: #{pgcn_forward.17} parent=5 // pred_check_branch
        %672 = sbr.rel (%p670) target = $region60
      $region59: #{pgcn_forward.17} parent=5 // pred_region
        %s673 = ssub.s32 %s18, 2
        // Predicated region
        $region61: #{pgcn_forward.17} parent=59 // pred_check
          %p674 = pneg %p147
        $region62: #{pgcn_forward.17} parent=59 // pred_check_branch
          %676 = sbr.rel (%p674) target = $region64
        $region63: #{pgcn_forward.17} parent=59 // pred_region
          %s677 = sand.u32 %s132, 1
          %s678 = scalar_lea.sflag [#allocation5], %s677
          %s679 = sand.u32 %s132, 1
          %s680 = smul.addr %s679, 128
          %s681 = scalar_lea.vmem [#allocation9], %s680
          %682 = dma.done %s678, 2048
        $region64: #{pgcn_forward.17} parent=59 // pred_fallthru
          _
      $region60: #{pgcn_forward.17} parent=5 // pred_fallthru
        _
    $region6: #{pgcn_forward.17} parent=1 // loop_footer
      %s22 = sadd.s32 1, %s18
    $region7: #{pgcn_forward.17} parent=1 // loop_footer_branch
      %17 = sbr.rel target = $region3
    $region8: #{pgcn_forward.17} parent=1 // loop_exit
      _
    %683 = vsyncpa [#allocation4], 1
    %s684 = scalar_lea.sflag [#allocation4], 1
    %685 = vsyncpa %s684, 1
    %686 = vsyncpa [#allocation7], 1
    %s687 = scalar_lea.sflag [#allocation7], 1
    %688 = vsyncpa %s687, 1
    %689 = vsyncpa [#allocation5], 1
    %s690 = scalar_lea.sflag [#allocation5], 1
    %691 = vsyncpa %s690, 1

</llo_original>
